<compile_context>
chip_gen: v6e
topology: v6e:2x2x1
jax: 0.10.0
libtpu: 0.0.40
codegen_flags: <defaults>
</compile_context>

<pallas_src>
import numpy as np
import jax
import jax.numpy as jnp
from jax import lax
from jax.experimental import pallas as pl
from jax.experimental.pallas import tpu as pltpu

C = 3                                    # in/out channels of both convs
K = 3                                    # kernel size
H_IN, W_IN = 20, 50                      # input spatial size (from the module)
PAD = K - 1                              # conv_transpose == conv over 2-padded input
HP = H_IN + 2 * PAD                      # H-padded rows for layer 1:        24
H1, W1 = H_IN + K - 1, W_IN + K - 1      # conv_transpose output:            22 x 52
H2, W2 = H1 - K + 1, W1 - K + 1          # conv output:                      20 x 50
POOL = 3                                 # adaptive pool output size


def _pool_bins(in_size, out_size):
    """Adaptive average pooling bin boundaries (PyTorch rule), python ints."""
    bins = []
    for i in range(out_size):
        s = (i * in_size) // out_size
        e = -(-((i + 1) * in_size) // out_size)   # ceil
        bins.append((s, e))
    return bins


_BINS_H = _pool_bins(H2, POOL)
_BINS_W = _pool_bins(W2, POOL)


def model_kernel(x_ref, w1_ref, b1_ref, w2_ref, b2_ref, out_ref,
                 shift1_ref, v1_ref, shift2_ref, v2_ref):
    f32 = jnp.float32

    # ---- Layer-1 shifted copies (one lane shift per (ci, kw), not per tap).
    #      shift1[ci, kw, r, j] == xpad[ci, r, j + kw], where xpad is x
    #      zero-padded by 2 on every side (padding folded in here).
    zplane1 = jnp.zeros((HP, W1), dtype=f32)
    for ci in range(C):
        xplane = x_ref[0, ci]                                        # (20, 50)
        for kw in range(K):
            shift1_ref[ci, kw] = zplane1                             # borders <- 0
            shift1_ref[ci, kw, PAD:PAD + H_IN,
                        PAD - kw:PAD - kw + W_IN] = xplane

    # ---- ConvTranspose2d (stride=1) as a correlation with channel-swapped +
    #      spatially flipped weights.  Every window load below is lane-aligned;
    #      only the sublane offset (kh) varies.
    acc1 = [jnp.full((H1, W1), b1_ref[co], dtype=f32) for co in range(C)]
    for ci in range(C):
        for kw in range(K):
            for kh in range(K):
                win = shift1_ref[ci, kw, kh:kh + H1, :]              # (22, 52)
                for co in range(C):
                    w = w1_ref[((ci * C + co) * K + (K - 1 - kh)) * K + (K - 1 - kw)]
                    acc1[co] = acc1[co] + win * w
    for co in range(C):
        v1_ref[co] = acc1[co]

    # ---- Layer-2 shifted copies of v1 (again one lane shift per (ci, kw)).
    for ci in range(C):
        for kw in range(K):
            shift2_ref[ci, kw] = v1_ref[ci, :, kw:kw + W2]           # (22, 50)

    # ---- Conv2d, valid padding, stride 1 (same hoisted structure).
    acc2 = [jnp.full((H2, W2), b2_ref[co], dtype=f32) for co in range(C)]
    for ci in range(C):
        for kw in range(K):
            for kh in range(K):
                win = shift2_ref[ci, kw, kh:kh + H2, :]              # (20, 50)
                for co in range(C):
                    w = w2_ref[((co * C + ci) * K + kh) * K + kw]
                    acc2[co] = acc2[co] + win * w
    for co in range(C):
        v2_ref[co * H2:(co + 1) * H2, :] = acc2[co]

    # ---- adaptive_avg_pool2d([3,3]) for all channels via two MXU matmuls.
    #      Pooling operators are built in-kernel from 2-D iotas (no constant
    #      operands / DMAs).  pwt: (W2,3) column pool; phb: (C*3, C*H2)
    #      block-diagonal row pool.
    rw = lax.broadcasted_iota(jnp.int32, (W2, POOL), 0)
    cw = lax.broadcasted_iota(jnp.int32, (W2, POOL), 1)
    pwt = jnp.zeros((W2, POOL), dtype=f32)
    for p, (s, e) in enumerate(_BINS_W):
        pwt = pwt + jnp.where((cw == p) & (rw >= s) & (rw < e),
                              jnp.float32(1.0 / (e - s)), jnp.float32(0.0))

    rh = lax.broadcasted_iota(jnp.int32, (C * POOL, C * H2), 0)
    ch = lax.broadcasted_iota(jnp.int32, (C * POOL, C * H2), 1)
    phb = jnp.zeros((C * POOL, C * H2), dtype=f32)
    for co in range(C):
        for q, (s, e) in enumerate(_BINS_H):
            phb = phb + jnp.where(
                (rh == co * POOL + q)
                & (ch >= co * H2 + s) & (ch < co * H2 + e),
                jnp.float32(1.0 / (e - s)), jnp.float32(0.0))

    hp = jax.lax.Precision.HIGHEST
    t = jnp.dot(v2_ref[...], pwt, preferred_element_type=f32, precision=hp)   # (C*H2, 3)
    pooled = jnp.dot(phb, t, preferred_element_type=f32, precision=hp)        # (C*3, 3)

    # Exact sigmoid (no approx reciprocal: tolerance is 1e-5 absolute).
    out_ref[...] = 1.0 / (1.0 + jnp.exp(-pooled))


def model_forward(x, wt, bt, wc, bc):
    """x: (1,C,H_IN,W_IN); wt: (Cin,Cout,K,K) ConvTranspose2d weight;
    wc: (Cout,Cin,K,K) Conv2d weight; bt, bc: (C,) biases."""
    out = pl.pallas_call(
        model_kernel,
        out_shape=jax.ShapeDtypeStruct((C * POOL, POOL), jnp.float32),
        in_specs=[
            pl.BlockSpec(memory_space=pltpu.MemorySpace.VMEM),   # x (1,C,20,50)
            pl.BlockSpec(memory_space=pltpu.MemorySpace.SMEM),   # wt flat (81,)
            pl.BlockSpec(memory_space=pltpu.MemorySpace.SMEM),   # bt (3,)
            pl.BlockSpec(memory_space=pltpu.MemorySpace.SMEM),   # wc flat (81,)
            pl.BlockSpec(memory_space=pltpu.MemorySpace.SMEM),   # bc (3,)
        ],
        out_specs=pl.BlockSpec(memory_space=pltpu.MemorySpace.VMEM),
        scratch_shapes=[
            pltpu.VMEM((C, K, HP, W1), jnp.float32),    # layer-1 shifted copies
            pltpu.VMEM((C, H1, W1), jnp.float32),       # conv_transpose output
            pltpu.VMEM((C, K, H1, W2), jnp.float32),    # layer-2 shifted copies
            pltpu.VMEM((C * H2, W2), jnp.float32),      # conv output, channel-stacked
        ],
    )(x, wt.reshape(-1), bt, wc.reshape(-1), bc)
    return out.reshape(1, C * POOL * POOL)   # torch.flatten(v3, 1)


def _ref_forward(x, wt, bt, wc, bc):
    """Pure-numpy reference with direct PyTorch semantics."""
    x = np.asarray(x, np.float32)[0]
    # ConvTranspose2d (scatter form)
    v1 = np.zeros((C, H1, W1), np.float32)
    for ci in range(C):
        for co in range(C):
            for kh in range(K):
                for kw in range(K):
                    v1[co, kh:kh + H_IN, kw:kw + W_IN] += x[ci] * wt[ci, co, kh, kw]
    v1 += bt[:, None, None]
    # Conv2d
    v2 = np.zeros((C, H2, W2), np.float32)
    for co in range(C):
        for ci in range(C):
            for kh in range(K):
                for kw in range(K):
                    v2[co] += v1[ci, kh:kh + H2, kw:kw + W2] * wc[co, ci, kh, kw]
    v2 += bc[:, None, None]
    # adaptive_avg_pool2d([3, 3])
    v3 = np.zeros((C, POOL, POOL), np.float32)
    for i in range(POOL):
        hs, he = _BINS_H[i]
        for j in range(POOL):
            ws, we = _BINS_W[j]
            v3[:, i, j] = v2[:, hs:he, ws:we].mean(axis=(1, 2))
    v4 = v3.reshape(1, -1)
    return 1.0 / (1.0 + np.exp(-v4))


if __name__ == "__main__":
    key = jax.random.PRNGKey(0)
    kx, k1, k2, k3, k4 = jax.random.split(key, 5)
    fan = C * K * K
    x1 = jax.random.normal(kx, (1, C, H_IN, W_IN), jnp.float32)
    wt = jax.random.uniform(k1, (C, C, K, K), jnp.float32, -1.0, 1.0) / np.sqrt(fan)
    bt = jax.random.uniform(k2, (C,), jnp.float32, -1.0, 1.0) / np.sqrt(fan)
    wc = jax.random.uniform(k3, (C, C, K, K), jnp.float32, -1.0, 1.0) / np.sqrt(fan)
    bc = jax.random.uniform(k4, (C,), jnp.float32, -1.0, 1.0) / np.sqrt(fan)

    out = jax.jit(model_forward)(x1, wt, bt, wc, bc)
    out = jax.block_until_ready(out)

    ref = _ref_forward(np.asarray(x1), np.asarray(wt), np.asarray(bt),
                       np.asarray(wc), np.asarray(bc))
    np.testing.assert_allclose(np.asarray(out), ref, rtol=1e-4, atol=1e-5)
    print("KERNEL_OK")
</pallas_src>

<mosaic_0001>
module attributes {stable_mosaic.version = 11 : i64} {
  func.func @model_kernel(%arg0: memref<1x3x20x50xf32, #tpu.memory_space<vmem>>, %arg1: memref<81xf32, #tpu.memory_space<smem>>, %arg2: memref<3xf32, #tpu.memory_space<smem>>, %arg3: memref<81xf32, #tpu.memory_space<smem>>, %arg4: memref<3xf32, #tpu.memory_space<smem>>, %arg5: memref<9x3xf32, #tpu.memory_space<vmem>>, %arg6: memref<3x3x24x52xf32, #tpu.memory_space<vmem>>, %arg7: memref<3x22x52xf32, #tpu.memory_space<vmem>>, %arg8: memref<3x3x22x50xf32, #tpu.memory_space<vmem>>, %arg9: memref<60x50xf32, #tpu.memory_space<vmem>>) attributes {dimension_semantics = [], scalar_prefetch = 0 : i64, scratch_operands = 4 : i64, tpu.core_type = #tpu.core_type<tc>} {
    %cst = arith.constant 0.000000e+00 : f32
    %0 = vector.broadcast %cst : f32 to vector<24x52xf32>
    %c0 = arith.constant 0 : index
    %c0_0 = arith.constant 0 : index
    %c0_1 = arith.constant 0 : index
    %c0_2 = arith.constant 0 : index
    %1 = vector.load %arg0[%c0, %c0_0, %c0_1, %c0_2] : memref<1x3x20x50xf32, #tpu.memory_space<vmem>>, vector<1x1x20x50xf32>
    %2 = vector.shape_cast %1 : vector<1x1x20x50xf32> to vector<20x50xf32>
    %c0_3 = arith.constant 0 : index
    %c0_4 = arith.constant 0 : index
    %c0_5 = arith.constant 0 : index
    %c0_6 = arith.constant 0 : index
    %3 = vector.load %arg6[%c0_3, %c0_4, %c0_5, %c0_6] : memref<3x3x24x52xf32, #tpu.memory_space<vmem>>, vector<1x1x24x52xf32>
    %4 = vector.shape_cast %3 : vector<1x1x24x52xf32> to vector<24x52xf32>
    %5 = vector.shape_cast %0 : vector<24x52xf32> to vector<1x1x24x52xf32>
    tpu.vector_store %arg6[%c0_3, %c0_4, %c0_5, %c0_6], %5 {strides = array<i32>} : memref<3x3x24x52xf32, #tpu.memory_space<vmem>>, vector<1x1x24x52xf32>,
    %c0_7 = arith.constant 0 : index
    %c0_8 = arith.constant 0 : index
    %c2 = arith.constant 2 : index
    %c2_9 = arith.constant 2 : index
    %6 = vector.load %arg6[%c0_7, %c0_8, %c2, %c2_9] : memref<3x3x24x52xf32, #tpu.memory_space<vmem>>, vector<1x1x20x50xf32>
    %7 = vector.shape_cast %6 : vector<1x1x20x50xf32> to vector<20x50xf32>
    %8 = vector.shape_cast %2 : vector<20x50xf32> to vector<1x1x20x50xf32>
    tpu.vector_store %arg6[%c0_7, %c0_8, %c2, %c2_9], %8 {strides = array<i32>} : memref<3x3x24x52xf32, #tpu.memory_space<vmem>>, vector<1x1x20x50xf32>,
    %c0_10 = arith.constant 0 : index
    %c1 = arith.constant 1 : index
    %c0_11 = arith.constant 0 : index
    %c0_12 = arith.constant 0 : index
    %9 = vector.load %arg6[%c0_10, %c1, %c0_11, %c0_12] : memref<3x3x24x52xf32, #tpu.memory_space<vmem>>, vector<1x1x24x52xf32>
    %10 = vector.shape_cast %9 : vector<1x1x24x52xf32> to vector<24x52xf32>
    %11 = vector.shape_cast %0 : vector<24x52xf32> to vector<1x1x24x52xf32>
    tpu.vector_store %arg6[%c0_10, %c1, %c0_11, %c0_12], %11 {strides = array<i32>} : memref<3x3x24x52xf32, #tpu.memory_space<vmem>>, vector<1x1x24x52xf32>,
    %c0_13 = arith.constant 0 : index
    %c1_14 = arith.constant 1 : index
    %c2_15 = arith.constant 2 : index
    %c1_16 = arith.constant 1 : index
    %12 = vector.load %arg6[%c0_13, %c1_14, %c2_15, %c1_16] : memref<3x3x24x52xf32, #tpu.memory_space<vmem>>, vector<1x1x20x50xf32>
    %13 = vector.shape_cast %12 : vector<1x1x20x50xf32> to vector<20x50xf32>
    %14 = vector.shape_cast %2 : vector<20x50xf32> to vector<1x1x20x50xf32>
    tpu.vector_store %arg6[%c0_13, %c1_14, %c2_15, %c1_16], %14 {strides = array<i32>} : memref<3x3x24x52xf32, #tpu.memory_space<vmem>>, vector<1x1x20x50xf32>,
    %c0_17 = arith.constant 0 : index
    %c2_18 = arith.constant 2 : index
    %c0_19 = arith.constant 0 : index
    %c0_20 = arith.constant 0 : index
    %15 = vector.load %arg6[%c0_17, %c2_18, %c0_19, %c0_20] : memref<3x3x24x52xf32, #tpu.memory_space<vmem>>, vector<1x1x24x52xf32>
    %16 = vector.shape_cast %15 : vector<1x1x24x52xf32> to vector<24x52xf32>
    %17 = vector.shape_cast %0 : vector<24x52xf32> to vector<1x1x24x52xf32>
    tpu.vector_store %arg6[%c0_17, %c2_18, %c0_19, %c0_20], %17 {strides = array<i32>} : memref<3x3x24x52xf32, #tpu.memory_space<vmem>>, vector<1x1x24x52xf32>,
    %c0_21 = arith.constant 0 : index
    %c2_22 = arith.constant 2 : index
    %c2_23 = arith.constant 2 : index
    %c0_24 = arith.constant 0 : index
    %18 = vector.load %arg6[%c0_21, %c2_22, %c2_23, %c0_24] : memref<3x3x24x52xf32, #tpu.memory_space<vmem>>, vector<1x1x20x50xf32>
    %19 = vector.shape_cast %18 : vector<1x1x20x50xf32> to vector<20x50xf32>
    %20 = vector.shape_cast %2 : vector<20x50xf32> to vector<1x1x20x50xf32>
    tpu.vector_store %arg6[%c0_21, %c2_22, %c2_23, %c0_24], %20 {strides = array<i32>} : memref<3x3x24x52xf32, #tpu.memory_space<vmem>>, vector<1x1x20x50xf32>,
    %c0_25 = arith.constant 0 : index
    %c1_26 = arith.constant 1 : index
    %c0_27 = arith.constant 0 : index
    %c0_28 = arith.constant 0 : index
    %21 = vector.load %arg0[%c0_25, %c1_26, %c0_27, %c0_28] : memref<1x3x20x50xf32, #tpu.memory_space<vmem>>, vector<1x1x20x50xf32>
    %22 = vector.shape_cast %21 : vector<1x1x20x50xf32> to vector<20x50xf32>
    %c1_29 = arith.constant 1 : index
    %c0_30 = arith.constant 0 : index
    %c0_31 = arith.constant 0 : index
    %c0_32 = arith.constant 0 : index
    %23 = vector.load %arg6[%c1_29, %c0_30, %c0_31, %c0_32] : memref<3x3x24x52xf32, #tpu.memory_space<vmem>>, vector<1x1x24x52xf32>
    %24 = vector.shape_cast %23 : vector<1x1x24x52xf32> to vector<24x52xf32>
    %25 = vector.shape_cast %0 : vector<24x52xf32> to vector<1x1x24x52xf32>
    tpu.vector_store %arg6[%c1_29, %c0_30, %c0_31, %c0_32], %25 {strides = array<i32>} : memref<3x3x24x52xf32, #tpu.memory_space<vmem>>, vector<1x1x24x52xf32>,
    %c1_33 = arith.constant 1 : index
    %c0_34 = arith.constant 0 : index
    %c2_35 = arith.constant 2 : index
    %c2_36 = arith.constant 2 : index
    %26 = vector.load %arg6[%c1_33, %c0_34, %c2_35, %c2_36] : memref<3x3x24x52xf32, #tpu.memory_space<vmem>>, vector<1x1x20x50xf32>
    %27 = vector.shape_cast %26 : vector<1x1x20x50xf32> to vector<20x50xf32>
    %28 = vector.shape_cast %22 : vector<20x50xf32> to vector<1x1x20x50xf32>
    tpu.vector_store %arg6[%c1_33, %c0_34, %c2_35, %c2_36], %28 {strides = array<i32>} : memref<3x3x24x52xf32, #tpu.memory_space<vmem>>, vector<1x1x20x50xf32>,
    %c1_37 = arith.constant 1 : index
    %c1_38 = arith.constant 1 : index
    %c0_39 = arith.constant 0 : index
    %c0_40 = arith.constant 0 : index
    %29 = vector.load %arg6[%c1_37, %c1_38, %c0_39, %c0_40] : memref<3x3x24x52xf32, #tpu.memory_space<vmem>>, vector<1x1x24x52xf32>
    %30 = vector.shape_cast %29 : vector<1x1x24x52xf32> to vector<24x52xf32>
    %31 = vector.shape_cast %0 : vector<24x52xf32> to vector<1x1x24x52xf32>
    tpu.vector_store %arg6[%c1_37, %c1_38, %c0_39, %c0_40], %31 {strides = array<i32>} : memref<3x3x24x52xf32, #tpu.memory_space<vmem>>, vector<1x1x24x52xf32>,
    %c1_41 = arith.constant 1 : index
    %c1_42 = arith.constant 1 : index
    %c2_43 = arith.constant 2 : index
    %c1_44 = arith.constant 1 : index
    %32 = vector.load %arg6[%c1_41, %c1_42, %c2_43, %c1_44] : memref<3x3x24x52xf32, #tpu.memory_space<vmem>>, vector<1x1x20x50xf32>
    %33 = vector.shape_cast %32 : vector<1x1x20x50xf32> to vector<20x50xf32>
    %34 = vector.shape_cast %22 : vector<20x50xf32> to vector<1x1x20x50xf32>
    tpu.vector_store %arg6[%c1_41, %c1_42, %c2_43, %c1_44], %34 {strides = array<i32>} : memref<3x3x24x52xf32, #tpu.memory_space<vmem>>, vector<1x1x20x50xf32>,
    %c1_45 = arith.constant 1 : index
    %c2_46 = arith.constant 2 : index
    %c0_47 = arith.constant 0 : index
    %c0_48 = arith.constant 0 : index
    %35 = vector.load %arg6[%c1_45, %c2_46, %c0_47, %c0_48] : memref<3x3x24x52xf32, #tpu.memory_space<vmem>>, vector<1x1x24x52xf32>
    %36 = vector.shape_cast %35 : vector<1x1x24x52xf32> to vector<24x52xf32>
    %37 = vector.shape_cast %0 : vector<24x52xf32> to vector<1x1x24x52xf32>
    tpu.vector_store %arg6[%c1_45, %c2_46, %c0_47, %c0_48], %37 {strides = array<i32>} : memref<3x3x24x52xf32, #tpu.memory_space<vmem>>, vector<1x1x24x52xf32>,
    %c1_49 = arith.constant 1 : index
    %c2_50 = arith.constant 2 : index
    %c2_51 = arith.constant 2 : index
    %c0_52 = arith.constant 0 : index
    %38 = vector.load %arg6[%c1_49, %c2_50, %c2_51, %c0_52] : memref<3x3x24x52xf32, #tpu.memory_space<vmem>>, vector<1x1x20x50xf32>
    %39 = vector.shape_cast %38 : vector<1x1x20x50xf32> to vector<20x50xf32>
    %40 = vector.shape_cast %22 : vector<20x50xf32> to vector<1x1x20x50xf32>
    tpu.vector_store %arg6[%c1_49, %c2_50, %c2_51, %c0_52], %40 {strides = array<i32>} : memref<3x3x24x52xf32, #tpu.memory_space<vmem>>, vector<1x1x20x50xf32>,
    %c0_53 = arith.constant 0 : index
    %c2_54 = arith.constant 2 : index
    %c0_55 = arith.constant 0 : index
    %c0_56 = arith.constant 0 : index
    %41 = vector.load %arg0[%c0_53, %c2_54, %c0_55, %c0_56] : memref<1x3x20x50xf32, #tpu.memory_space<vmem>>, vector<1x1x20x50xf32>
    %42 = vector.shape_cast %41 : vector<1x1x20x50xf32> to vector<20x50xf32>
    %c2_57 = arith.constant 2 : index
    %c0_58 = arith.constant 0 : index
    %c0_59 = arith.constant 0 : index
    %c0_60 = arith.constant 0 : index
    %43 = vector.load %arg6[%c2_57, %c0_58, %c0_59, %c0_60] : memref<3x3x24x52xf32, #tpu.memory_space<vmem>>, vector<1x1x24x52xf32>
    %44 = vector.shape_cast %43 : vector<1x1x24x52xf32> to vector<24x52xf32>
    %45 = vector.shape_cast %0 : vector<24x52xf32> to vector<1x1x24x52xf32>
    tpu.vector_store %arg6[%c2_57, %c0_58, %c0_59, %c0_60], %45 {strides = array<i32>} : memref<3x3x24x52xf32, #tpu.memory_space<vmem>>, vector<1x1x24x52xf32>,
    %c2_61 = arith.constant 2 : index
    %c0_62 = arith.constant 0 : index
    %c2_63 = arith.constant 2 : index
    %c2_64 = arith.constant 2 : index
    %46 = vector.load %arg6[%c2_61, %c0_62, %c2_63, %c2_64] : memref<3x3x24x52xf32, #tpu.memory_space<vmem>>, vector<1x1x20x50xf32>
    %47 = vector.shape_cast %46 : vector<1x1x20x50xf32> to vector<20x50xf32>
    %48 = vector.shape_cast %42 : vector<20x50xf32> to vector<1x1x20x50xf32>
    tpu.vector_store %arg6[%c2_61, %c0_62, %c2_63, %c2_64], %48 {strides = array<i32>} : memref<3x3x24x52xf32, #tpu.memory_space<vmem>>, vector<1x1x20x50xf32>,
    %c2_65 = arith.constant 2 : index
    %c1_66 = arith.constant 1 : index
    %c0_67 = arith.constant 0 : index
    %c0_68 = arith.constant 0 : index
    %49 = vector.load %arg6[%c2_65, %c1_66, %c0_67, %c0_68] : memref<3x3x24x52xf32, #tpu.memory_space<vmem>>, vector<1x1x24x52xf32>
    %50 = vector.shape_cast %49 : vector<1x1x24x52xf32> to vector<24x52xf32>
    %51 = vector.shape_cast %0 : vector<24x52xf32> to vector<1x1x24x52xf32>
    tpu.vector_store %arg6[%c2_65, %c1_66, %c0_67, %c0_68], %51 {strides = array<i32>} : memref<3x3x24x52xf32, #tpu.memory_space<vmem>>, vector<1x1x24x52xf32>,
    %c2_69 = arith.constant 2 : index
    %c1_70 = arith.constant 1 : index
    %c2_71 = arith.constant 2 : index
    %c1_72 = arith.constant 1 : index
    %52 = vector.load %arg6[%c2_69, %c1_70, %c2_71, %c1_72] : memref<3x3x24x52xf32, #tpu.memory_space<vmem>>, vector<1x1x20x50xf32>
    %53 = vector.shape_cast %52 : vector<1x1x20x50xf32> to vector<20x50xf32>
    %54 = vector.shape_cast %42 : vector<20x50xf32> to vector<1x1x20x50xf32>
    tpu.vector_store %arg6[%c2_69, %c1_70, %c2_71, %c1_72], %54 {strides = array<i32>} : memref<3x3x24x52xf32, #tpu.memory_space<vmem>>, vector<1x1x20x50xf32>,
    %c2_73 = arith.constant 2 : index
    %c2_74 = arith.constant 2 : index
    %c0_75 = arith.constant 0 : index
    %c0_76 = arith.constant 0 : index
    %55 = vector.load %arg6[%c2_73, %c2_74, %c0_75, %c0_76] : memref<3x3x24x52xf32, #tpu.memory_space<vmem>>, vector<1x1x24x52xf32>
    %56 = vector.shape_cast %55 : vector<1x1x24x52xf32> to vector<24x52xf32>
    %57 = vector.shape_cast %0 : vector<24x52xf32> to vector<1x1x24x52xf32>
    tpu.vector_store %arg6[%c2_73, %c2_74, %c0_75, %c0_76], %57 {strides = array<i32>} : memref<3x3x24x52xf32, #tpu.memory_space<vmem>>, vector<1x1x24x52xf32>,
    %c2_77 = arith.constant 2 : index
    %c2_78 = arith.constant 2 : index
    %c2_79 = arith.constant 2 : index
    %c0_80 = arith.constant 0 : index
    %58 = vector.load %arg6[%c2_77, %c2_78, %c2_79, %c0_80] : memref<3x3x24x52xf32, #tpu.memory_space<vmem>>, vector<1x1x20x50xf32>
    %59 = vector.shape_cast %58 : vector<1x1x20x50xf32> to vector<20x50xf32>
    %60 = vector.shape_cast %42 : vector<20x50xf32> to vector<1x1x20x50xf32>
    tpu.vector_store %arg6[%c2_77, %c2_78, %c2_79, %c0_80], %60 {strides = array<i32>} : memref<3x3x24x52xf32, #tpu.memory_space<vmem>>, vector<1x1x20x50xf32>,
    %c0_81 = arith.constant 0 : index
    %61 = memref.load %arg2[%c0_81] : memref<3xf32, #tpu.memory_space<smem>>
    %62 = vector.broadcast %61 : f32 to vector<22x52xf32>
    %c1_82 = arith.constant 1 : index
    %63 = memref.load %arg2[%c1_82] : memref<3xf32, #tpu.memory_space<smem>>
    %64 = vector.broadcast %63 : f32 to vector<22x52xf32>
    %c2_83 = arith.constant 2 : index
    %65 = memref.load %arg2[%c2_83] : memref<3xf32, #tpu.memory_space<smem>>
    %66 = vector.broadcast %65 : f32 to vector<22x52xf32>
    %c0_84 = arith.constant 0 : index
    %c0_85 = arith.constant 0 : index
    %c0_86 = arith.constant 0 : index
    %c0_87 = arith.constant 0 : index
    %67 = vector.load %arg6[%c0_84, %c0_85, %c0_86, %c0_87] : memref<3x3x24x52xf32, #tpu.memory_space<vmem>>, vector<1x1x22x52xf32>
    %68 = vector.shape_cast %67 : vector<1x1x22x52xf32> to vector<22x52xf32>
    %c8 = arith.constant 8 : index
    %69 = memref.load %arg1[%c8] : memref<81xf32, #tpu.memory_space<smem>>
    %70 = vector.broadcast %69 : f32 to vector<22x52xf32>
    %71 = arith.mulf %68, %70 : vector<22x52xf32>
    %72 = arith.addf %62, %71 : vector<22x52xf32>
    %c17 = arith.constant 17 : index
    %73 = memref.load %arg1[%c17] : memref<81xf32, #tpu.memory_space<smem>>
    %74 = vector.broadcast %73 : f32 to vector<22x52xf32>
    %75 = arith.mulf %68, %74 : vector<22x52xf32>
    %76 = arith.addf %64, %75 : vector<22x52xf32>
    %c26 = arith.constant 26 : index
    %77 = memref.load %arg1[%c26] : memref<81xf32, #tpu.memory_space<smem>>
    %78 = vector.broadcast %77 : f32 to vector<22x52xf32>
    %79 = arith.mulf %68, %78 : vector<22x52xf32>
    %80 = arith.addf %66, %79 : vector<22x52xf32>
    %c0_88 = arith.constant 0 : index
    %c0_89 = arith.constant 0 : index
    %c1_90 = arith.constant 1 : index
    %c0_91 = arith.constant 0 : index
    %81 = vector.load %arg6[%c0_88, %c0_89, %c1_90, %c0_91] : memref<3x3x24x52xf32, #tpu.memory_space<vmem>>, vector<1x1x22x52xf32>
    %82 = vector.shape_cast %81 : vector<1x1x22x52xf32> to vector<22x52xf32>
    %c5 = arith.constant 5 : index
    %83 = memref.load %arg1[%c5] : memref<81xf32, #tpu.memory_space<smem>>
    %84 = vector.broadcast %83 : f32 to vector<22x52xf32>
    %85 = arith.mulf %82, %84 : vector<22x52xf32>
    %86 = arith.addf %72, %85 : vector<22x52xf32>
    %c14 = arith.constant 14 : index
    %87 = memref.load %arg1[%c14] : memref<81xf32, #tpu.memory_space<smem>>
    %88 = vector.broadcast %87 : f32 to vector<22x52xf32>
    %89 = arith.mulf %82, %88 : vector<22x52xf32>
    %90 = arith.addf %76, %89 : vector<22x52xf32>
    %c23 = arith.constant 23 : index
    %91 = memref.load %arg1[%c23] : memref<81xf32, #tpu.memory_space<smem>>
    %92 = vector.broadcast %91 : f32 to vector<22x52xf32>
    %93 = arith.mulf %82, %92 : vector<22x52xf32>
    %94 = arith.addf %80, %93 : vector<22x52xf32>
    %c0_92 = arith.constant 0 : index
    %c0_93 = arith.constant 0 : index
    %c2_94 = arith.constant 2 : index
    %c0_95 = arith.constant 0 : index
    %95 = vector.load %arg6[%c0_92, %c0_93, %c2_94, %c0_95] : memref<3x3x24x52xf32, #tpu.memory_space<vmem>>, vector<1x1x22x52xf32>
    %96 = vector.shape_cast %95 : vector<1x1x22x52xf32> to vector<22x52xf32>
    %c2_96 = arith.constant 2 : index
    %97 = memref.load %arg1[%c2_96] : memref<81xf32, #tpu.memory_space<smem>>
    %98 = vector.broadcast %97 : f32 to vector<22x52xf32>
    %99 = arith.mulf %96, %98 : vector<22x52xf32>
    %100 = arith.addf %86, %99 : vector<22x52xf32>
    %c11 = arith.constant 11 : index
    %101 = memref.load %arg1[%c11] : memref<81xf32, #tpu.memory_space<smem>>
    %102 = vector.broadcast %101 : f32 to vector<22x52xf32>
    %103 = arith.mulf %96, %102 : vector<22x52xf32>
    %104 = arith.addf %90, %103 : vector<22x52xf32>
    %c20 = arith.constant 20 : index
    %105 = memref.load %arg1[%c20] : memref<81xf32, #tpu.memory_space<smem>>
    %106 = vector.broadcast %105 : f32 to vector<22x52xf32>
    %107 = arith.mulf %96, %106 : vector<22x52xf32>
    %108 = arith.addf %94, %107 : vector<22x52xf32>
    %c0_97 = arith.constant 0 : index
    %c1_98 = arith.constant 1 : index
    %c0_99 = arith.constant 0 : index
    %c0_100 = arith.constant 0 : index
    %109 = vector.load %arg6[%c0_97, %c1_98, %c0_99, %c0_100] : memref<3x3x24x52xf32, #tpu.memory_space<vmem>>, vector<1x1x22x52xf32>
    %110 = vector.shape_cast %109 : vector<1x1x22x52xf32> to vector<22x52xf32>
    %c7 = arith.constant 7 : index
    %111 = memref.load %arg1[%c7] : memref<81xf32, #tpu.memory_space<smem>>
    %112 = vector.broadcast %111 : f32 to vector<22x52xf32>
    %113 = arith.mulf %110, %112 : vector<22x52xf32>
    %114 = arith.addf %100, %113 : vector<22x52xf32>
    %c16 = arith.constant 16 : index
    %115 = memref.load %arg1[%c16] : memref<81xf32, #tpu.memory_space<smem>>
    %116 = vector.broadcast %115 : f32 to vector<22x52xf32>
    %117 = arith.mulf %110, %116 : vector<22x52xf32>
    %118 = arith.addf %104, %117 : vector<22x52xf32>
    %c25 = arith.constant 25 : index
    %119 = memref.load %arg1[%c25] : memref<81xf32, #tpu.memory_space<smem>>
    %120 = vector.broadcast %119 : f32 to vector<22x52xf32>
    %121 = arith.mulf %110, %120 : vector<22x52xf32>
    %122 = arith.addf %108, %121 : vector<22x52xf32>
    %c0_101 = arith.constant 0 : index
    %c1_102 = arith.constant 1 : index
    %c1_103 = arith.constant 1 : index
    %c0_104 = arith.constant 0 : index
    %123 = vector.load %arg6[%c0_101, %c1_102, %c1_103, %c0_104] : memref<3x3x24x52xf32, #tpu.memory_space<vmem>>, vector<1x1x22x52xf32>
    %124 = vector.shape_cast %123 : vector<1x1x22x52xf32> to vector<22x52xf32>
    %c4 = arith.constant 4 : index
    %125 = memref.load %arg1[%c4] : memref<81xf32, #tpu.memory_space<smem>>
    %126 = vector.broadcast %125 : f32 to vector<22x52xf32>
    %127 = arith.mulf %124, %126 : vector<22x52xf32>
    %128 = arith.addf %114, %127 : vector<22x52xf32>
    %c13 = arith.constant 13 : index
    %129 = memref.load %arg1[%c13] : memref<81xf32, #tpu.memory_space<smem>>
    %130 = vector.broadcast %129 : f32 to vector<22x52xf32>
    %131 = arith.mulf %124, %130 : vector<22x52xf32>
    %132 = arith.addf %118, %131 : vector<22x52xf32>
    %c22 = arith.constant 22 : index
    %133 = memref.load %arg1[%c22] : memref<81xf32, #tpu.memory_space<smem>>
    %134 = vector.broadcast %133 : f32 to vector<22x52xf32>
    %135 = arith.mulf %124, %134 : vector<22x52xf32>
    %136 = arith.addf %122, %135 : vector<22x52xf32>
    %c0_105 = arith.constant 0 : index
    %c1_106 = arith.constant 1 : index
    %c2_107 = arith.constant 2 : index
    %c0_108 = arith.constant 0 : index
    %137 = vector.load %arg6[%c0_105, %c1_106, %c2_107, %c0_108] : memref<3x3x24x52xf32, #tpu.memory_space<vmem>>, vector<1x1x22x52xf32>
    %138 = vector.shape_cast %137 : vector<1x1x22x52xf32> to vector<22x52xf32>
    %c1_109 = arith.constant 1 : index
    %139 = memref.load %arg1[%c1_109] : memref<81xf32, #tpu.memory_space<smem>>
    %140 = vector.broadcast %139 : f32 to vector<22x52xf32>
    %141 = arith.mulf %138, %140 : vector<22x52xf32>
    %142 = arith.addf %128, %141 : vector<22x52xf32>
    %c10 = arith.constant 10 : index
    %143 = memref.load %arg1[%c10] : memref<81xf32, #tpu.memory_space<smem>>
    %144 = vector.broadcast %143 : f32 to vector<22x52xf32>
    %145 = arith.mulf %138, %144 : vector<22x52xf32>
    %146 = arith.addf %132, %145 : vector<22x52xf32>
    %c19 = arith.constant 19 : index
    %147 = memref.load %arg1[%c19] : memref<81xf32, #tpu.memory_space<smem>>
    %148 = vector.broadcast %147 : f32 to vector<22x52xf32>
    %149 = arith.mulf %138, %148 : vector<22x52xf32>
    %150 = arith.addf %136, %149 : vector<22x52xf32>
    %c0_110 = arith.constant 0 : index
    %c2_111 = arith.constant 2 : index
    %c0_112 = arith.constant 0 : index
    %c0_113 = arith.constant 0 : index
    %151 = vector.load %arg6[%c0_110, %c2_111, %c0_112, %c0_113] : memref<3x3x24x52xf32, #tpu.memory_space<vmem>>, vector<1x1x22x52xf32>
    %152 = vector.shape_cast %151 : vector<1x1x22x52xf32> to vector<22x52xf32>
    %c6 = arith.constant 6 : index
    %153 = memref.load %arg1[%c6] : memref<81xf32, #tpu.memory_space<smem>>
    %154 = vector.broadcast %153 : f32 to vector<22x52xf32>
    %155 = arith.mulf %152, %154 : vector<22x52xf32>
    %156 = arith.addf %142, %155 : vector<22x52xf32>
    %c15 = arith.constant 15 : index
    %157 = memref.load %arg1[%c15] : memref<81xf32, #tpu.memory_space<smem>>
    %158 = vector.broadcast %157 : f32 to vector<22x52xf32>
    %159 = arith.mulf %152, %158 : vector<22x52xf32>
    %160 = arith.addf %146, %159 : vector<22x52xf32>
    %c24 = arith.constant 24 : index
    %161 = memref.load %arg1[%c24] : memref<81xf32, #tpu.memory_space<smem>>
    %162 = vector.broadcast %161 : f32 to vector<22x52xf32>
    %163 = arith.mulf %152, %162 : vector<22x52xf32>
    %164 = arith.addf %150, %163 : vector<22x52xf32>
    %c0_114 = arith.constant 0 : index
    %c2_115 = arith.constant 2 : index
    %c1_116 = arith.constant 1 : index
    %c0_117 = arith.constant 0 : index
    %165 = vector.load %arg6[%c0_114, %c2_115, %c1_116, %c0_117] : memref<3x3x24x52xf32, #tpu.memory_space<vmem>>, vector<1x1x22x52xf32>
    %166 = vector.shape_cast %165 : vector<1x1x22x52xf32> to vector<22x52xf32>
    %c3 = arith.constant 3 : index
    %167 = memref.load %arg1[%c3] : memref<81xf32, #tpu.memory_space<smem>>
    %168 = vector.broadcast %167 : f32 to vector<22x52xf32>
    %169 = arith.mulf %166, %168 : vector<22x52xf32>
    %170 = arith.addf %156, %169 : vector<22x52xf32>
    %c12 = arith.constant 12 : index
    %171 = memref.load %arg1[%c12] : memref<81xf32, #tpu.memory_space<smem>>
    %172 = vector.broadcast %171 : f32 to vector<22x52xf32>
    %173 = arith.mulf %166, %172 : vector<22x52xf32>
    %174 = arith.addf %160, %173 : vector<22x52xf32>
    %c21 = arith.constant 21 : index
    %175 = memref.load %arg1[%c21] : memref<81xf32, #tpu.memory_space<smem>>
    %176 = vector.broadcast %175 : f32 to vector<22x52xf32>
    %177 = arith.mulf %166, %176 : vector<22x52xf32>
    %178 = arith.addf %164, %177 : vector<22x52xf32>
    %c0_118 = arith.constant 0 : index
    %c2_119 = arith.constant 2 : index
    %c2_120 = arith.constant 2 : index
    %c0_121 = arith.constant 0 : index
    %179 = vector.load %arg6[%c0_118, %c2_119, %c2_120, %c0_121] : memref<3x3x24x52xf32, #tpu.memory_space<vmem>>, vector<1x1x22x52xf32>
    %180 = vector.shape_cast %179 : vector<1x1x22x52xf32> to vector<22x52xf32>
    %c0_122 = arith.constant 0 : index
    %181 = memref.load %arg1[%c0_122] : memref<81xf32, #tpu.memory_space<smem>>
    %182 = vector.broadcast %181 : f32 to vector<22x52xf32>
    %183 = arith.mulf %180, %182 : vector<22x52xf32>
    %184 = arith.addf %170, %183 : vector<22x52xf32>
    %c9 = arith.constant 9 : index
    %185 = memref.load %arg1[%c9] : memref<81xf32, #tpu.memory_space<smem>>
    %186 = vector.broadcast %185 : f32 to vector<22x52xf32>
    %187 = arith.mulf %180, %186 : vector<22x52xf32>
    %188 = arith.addf %174, %187 : vector<22x52xf32>
    %c18 = arith.constant 18 : index
    %189 = memref.load %arg1[%c18] : memref<81xf32, #tpu.memory_space<smem>>
    %190 = vector.broadcast %189 : f32 to vector<22x52xf32>
    %191 = arith.mulf %180, %190 : vector<22x52xf32>
    %192 = arith.addf %178, %191 : vector<22x52xf32>
    %c1_123 = arith.constant 1 : index
    %c0_124 = arith.constant 0 : index
    %c0_125 = arith.constant 0 : index
    %c0_126 = arith.constant 0 : index
    %193 = vector.load %arg6[%c1_123, %c0_124, %c0_125, %c0_126] : memref<3x3x24x52xf32, #tpu.memory_space<vmem>>, vector<1x1x22x52xf32>
    %194 = vector.shape_cast %193 : vector<1x1x22x52xf32> to vector<22x52xf32>
    %c35 = arith.constant 35 : index
    %195 = memref.load %arg1[%c35] : memref<81xf32, #tpu.memory_space<smem>>
    %196 = vector.broadcast %195 : f32 to vector<22x52xf32>
    %197 = arith.mulf %194, %196 : vector<22x52xf32>
    %198 = arith.addf %184, %197 : vector<22x52xf32>
    %c44 = arith.constant 44 : index
    %199 = memref.load %arg1[%c44] : memref<81xf32, #tpu.memory_space<smem>>
    %200 = vector.broadcast %199 : f32 to vector<22x52xf32>
    %201 = arith.mulf %194, %200 : vector<22x52xf32>
    %202 = arith.addf %188, %201 : vector<22x52xf32>
    %c53 = arith.constant 53 : index
    %203 = memref.load %arg1[%c53] : memref<81xf32, #tpu.memory_space<smem>>
    %204 = vector.broadcast %203 : f32 to vector<22x52xf32>
    %205 = arith.mulf %194, %204 : vector<22x52xf32>
    %206 = arith.addf %192, %205 : vector<22x52xf32>
    %c1_127 = arith.constant 1 : index
    %c0_128 = arith.constant 0 : index
    %c1_129 = arith.constant 1 : index
    %c0_130 = arith.constant 0 : index
    %207 = vector.load %arg6[%c1_127, %c0_128, %c1_129, %c0_130] : memref<3x3x24x52xf32, #tpu.memory_space<vmem>>, vector<1x1x22x52xf32>
    %208 = vector.shape_cast %207 : vector<1x1x22x52xf32> to vector<22x52xf32>
    %c32 = arith.constant 32 : index
    %209 = memref.load %arg1[%c32] : memref<81xf32, #tpu.memory_space<smem>>
    %210 = vector.broadcast %209 : f32 to vector<22x52xf32>
    %211 = arith.mulf %208, %210 : vector<22x52xf32>
    %212 = arith.addf %198, %211 : vector<22x52xf32>
    %c41 = arith.constant 41 : index
    %213 = memref.load %arg1[%c41] : memref<81xf32, #tpu.memory_space<smem>>
    %214 = vector.broadcast %213 : f32 to vector<22x52xf32>
    %215 = arith.mulf %208, %214 : vector<22x52xf32>
    %216 = arith.addf %202, %215 : vector<22x52xf32>
    %c50 = arith.constant 50 : index
    %217 = memref.load %arg1[%c50] : memref<81xf32, #tpu.memory_space<smem>>
    %218 = vector.broadcast %217 : f32 to vector<22x52xf32>
    %219 = arith.mulf %208, %218 : vector<22x52xf32>
    %220 = arith.addf %206, %219 : vector<22x52xf32>
    %c1_131 = arith.constant 1 : index
    %c0_132 = arith.constant 0 : index
    %c2_133 = arith.constant 2 : index
    %c0_134 = arith.constant 0 : index
    %221 = vector.load %arg6[%c1_131, %c0_132, %c2_133, %c0_134] : memref<3x3x24x52xf32, #tpu.memory_space<vmem>>, vector<1x1x22x52xf32>
    %222 = vector.shape_cast %221 : vector<1x1x22x52xf32> to vector<22x52xf32>
    %c29 = arith.constant 29 : index
    %223 = memref.load %arg1[%c29] : memref<81xf32, #tpu.memory_space<smem>>
    %224 = vector.broadcast %223 : f32 to vector<22x52xf32>
    %225 = arith.mulf %222, %224 : vector<22x52xf32>
    %226 = arith.addf %212, %225 : vector<22x52xf32>
    %c38 = arith.constant 38 : index
    %227 = memref.load %arg1[%c38] : memref<81xf32, #tpu.memory_space<smem>>
    %228 = vector.broadcast %227 : f32 to vector<22x52xf32>
    %229 = arith.mulf %222, %228 : vector<22x52xf32>
    %230 = arith.addf %216, %229 : vector<22x52xf32>
    %c47 = arith.constant 47 : index
    %231 = memref.load %arg1[%c47] : memref<81xf32, #tpu.memory_space<smem>>
    %232 = vector.broadcast %231 : f32 to vector<22x52xf32>
    %233 = arith.mulf %222, %232 : vector<22x52xf32>
    %234 = arith.addf %220, %233 : vector<22x52xf32>
    %c1_135 = arith.constant 1 : index
    %c1_136 = arith.constant 1 : index
    %c0_137 = arith.constant 0 : index
    %c0_138 = arith.constant 0 : index
    %235 = vector.load %arg6[%c1_135, %c1_136, %c0_137, %c0_138] : memref<3x3x24x52xf32, #tpu.memory_space<vmem>>, vector<1x1x22x52xf32>
    %236 = vector.shape_cast %235 : vector<1x1x22x52xf32> to vector<22x52xf32>
    %c34 = arith.constant 34 : index
    %237 = memref.load %arg1[%c34] : memref<81xf32, #tpu.memory_space<smem>>
    %238 = vector.broadcast %237 : f32 to vector<22x52xf32>
    %239 = arith.mulf %236, %238 : vector<22x52xf32>
    %240 = arith.addf %226, %239 : vector<22x52xf32>
    %c43 = arith.constant 43 : index
    %241 = memref.load %arg1[%c43] : memref<81xf32, #tpu.memory_space<smem>>
    %242 = vector.broadcast %241 : f32 to vector<22x52xf32>
    %243 = arith.mulf %236, %242 : vector<22x52xf32>
    %244 = arith.addf %230, %243 : vector<22x52xf32>
    %c52 = arith.constant 52 : index
    %245 = memref.load %arg1[%c52] : memref<81xf32, #tpu.memory_space<smem>>
    %246 = vector.broadcast %245 : f32 to vector<22x52xf32>
    %247 = arith.mulf %236, %246 : vector<22x52xf32>
    %248 = arith.addf %234, %247 : vector<22x52xf32>
    %c1_139 = arith.constant 1 : index
    %c1_140 = arith.constant 1 : index
    %c1_141 = arith.constant 1 : index
    %c0_142 = arith.constant 0 : index
    %249 = vector.load %arg6[%c1_139, %c1_140, %c1_141, %c0_142] : memref<3x3x24x52xf32, #tpu.memory_space<vmem>>, vector<1x1x22x52xf32>
    %250 = vector.shape_cast %249 : vector<1x1x22x52xf32> to vector<22x52xf32>
    %c31 = arith.constant 31 : index
    %251 = memref.load %arg1[%c31] : memref<81xf32, #tpu.memory_space<smem>>
    %252 = vector.broadcast %251 : f32 to vector<22x52xf32>
    %253 = arith.mulf %250, %252 : vector<22x52xf32>
    %254 = arith.addf %240, %253 : vector<22x52xf32>
    %c40 = arith.constant 40 : index
    %255 = memref.load %arg1[%c40] : memref<81xf32, #tpu.memory_space<smem>>
    %256 = vector.broadcast %255 : f32 to vector<22x52xf32>
    %257 = arith.mulf %250, %256 : vector<22x52xf32>
    %258 = arith.addf %244, %257 : vector<22x52xf32>
    %c49 = arith.constant 49 : index
    %259 = memref.load %arg1[%c49] : memref<81xf32, #tpu.memory_space<smem>>
    %260 = vector.broadcast %259 : f32 to vector<22x52xf32>
    %261 = arith.mulf %250, %260 : vector<22x52xf32>
    %262 = arith.addf %248, %261 : vector<22x52xf32>
    %c1_143 = arith.constant 1 : index
    %c1_144 = arith.constant 1 : index
    %c2_145 = arith.constant 2 : index
    %c0_146 = arith.constant 0 : index
    %263 = vector.load %arg6[%c1_143, %c1_144, %c2_145, %c0_146] : memref<3x3x24x52xf32, #tpu.memory_space<vmem>>, vector<1x1x22x52xf32>
    %264 = vector.shape_cast %263 : vector<1x1x22x52xf32> to vector<22x52xf32>
    %c28 = arith.constant 28 : index
    %265 = memref.load %arg1[%c28] : memref<81xf32, #tpu.memory_space<smem>>
    %266 = vector.broadcast %265 : f32 to vector<22x52xf32>
    %267 = arith.mulf %264, %266 : vector<22x52xf32>
    %268 = arith.addf %254, %267 : vector<22x52xf32>
    %c37 = arith.constant 37 : index
    %269 = memref.load %arg1[%c37] : memref<81xf32, #tpu.memory_space<smem>>
    %270 = vector.broadcast %269 : f32 to vector<22x52xf32>
    %271 = arith.mulf %264, %270 : vector<22x52xf32>
    %272 = arith.addf %258, %271 : vector<22x52xf32>
    %c46 = arith.constant 46 : index
    %273 = memref.load %arg1[%c46] : memref<81xf32, #tpu.memory_space<smem>>
    %274 = vector.broadcast %273 : f32 to vector<22x52xf32>
    %275 = arith.mulf %264, %274 : vector<22x52xf32>
    %276 = arith.addf %262, %275 : vector<22x52xf32>
    %c1_147 = arith.constant 1 : index
    %c2_148 = arith.constant 2 : index
    %c0_149 = arith.constant 0 : index
    %c0_150 = arith.constant 0 : index
    %277 = vector.load %arg6[%c1_147, %c2_148, %c0_149, %c0_150] : memref<3x3x24x52xf32, #tpu.memory_space<vmem>>, vector<1x1x22x52xf32>
    %278 = vector.shape_cast %277 : vector<1x1x22x52xf32> to vector<22x52xf32>
    %c33 = arith.constant 33 : index
    %279 = memref.load %arg1[%c33] : memref<81xf32, #tpu.memory_space<smem>>
    %280 = vector.broadcast %279 : f32 to vector<22x52xf32>
    %281 = arith.mulf %278, %280 : vector<22x52xf32>
    %282 = arith.addf %268, %281 : vector<22x52xf32>
    %c42 = arith.constant 42 : index
    %283 = memref.load %arg1[%c42] : memref<81xf32, #tpu.memory_space<smem>>
    %284 = vector.broadcast %283 : f32 to vector<22x52xf32>
    %285 = arith.mulf %278, %284 : vector<22x52xf32>
    %286 = arith.addf %272, %285 : vector<22x52xf32>
    %c51 = arith.constant 51 : index
    %287 = memref.load %arg1[%c51] : memref<81xf32, #tpu.memory_space<smem>>
    %288 = vector.broadcast %287 : f32 to vector<22x52xf32>
    %289 = arith.mulf %278, %288 : vector<22x52xf32>
    %290 = arith.addf %276, %289 : vector<22x52xf32>
    %c1_151 = arith.constant 1 : index
    %c2_152 = arith.constant 2 : index
    %c1_153 = arith.constant 1 : index
    %c0_154 = arith.constant 0 : index
    %291 = vector.load %arg6[%c1_151, %c2_152, %c1_153, %c0_154] : memref<3x3x24x52xf32, #tpu.memory_space<vmem>>, vector<1x1x22x52xf32>
    %292 = vector.shape_cast %291 : vector<1x1x22x52xf32> to vector<22x52xf32>
    %c30 = arith.constant 30 : index
    %293 = memref.load %arg1[%c30] : memref<81xf32, #tpu.memory_space<smem>>
    %294 = vector.broadcast %293 : f32 to vector<22x52xf32>
    %295 = arith.mulf %292, %294 : vector<22x52xf32>
    %296 = arith.addf %282, %295 : vector<22x52xf32>
    %c39 = arith.constant 39 : index
    %297 = memref.load %arg1[%c39] : memref<81xf32, #tpu.memory_space<smem>>
    %298 = vector.broadcast %297 : f32 to vector<22x52xf32>
    %299 = arith.mulf %292, %298 : vector<22x52xf32>
    %300 = arith.addf %286, %299 : vector<22x52xf32>
    %c48 = arith.constant 48 : index
    %301 = memref.load %arg1[%c48] : memref<81xf32, #tpu.memory_space<smem>>
    %302 = vector.broadcast %301 : f32 to vector<22x52xf32>
    %303 = arith.mulf %292, %302 : vector<22x52xf32>
    %304 = arith.addf %290, %303 : vector<22x52xf32>
    %c1_155 = arith.constant 1 : index
    %c2_156 = arith.constant 2 : index
    %c2_157 = arith.constant 2 : index
    %c0_158 = arith.constant 0 : index
    %305 = vector.load %arg6[%c1_155, %c2_156, %c2_157, %c0_158] : memref<3x3x24x52xf32, #tpu.memory_space<vmem>>, vector<1x1x22x52xf32>
    %306 = vector.shape_cast %305 : vector<1x1x22x52xf32> to vector<22x52xf32>
    %c27 = arith.constant 27 : index
    %307 = memref.load %arg1[%c27] : memref<81xf32, #tpu.memory_space<smem>>
    %308 = vector.broadcast %307 : f32 to vector<22x52xf32>
    %309 = arith.mulf %306, %308 : vector<22x52xf32>
    %310 = arith.addf %296, %309 : vector<22x52xf32>
    %c36 = arith.constant 36 : index
    %311 = memref.load %arg1[%c36] : memref<81xf32, #tpu.memory_space<smem>>
    %312 = vector.broadcast %311 : f32 to vector<22x52xf32>
    %313 = arith.mulf %306, %312 : vector<22x52xf32>
    %314 = arith.addf %300, %313 : vector<22x52xf32>
    %c45 = arith.constant 45 : index
    %315 = memref.load %arg1[%c45] : memref<81xf32, #tpu.memory_space<smem>>
    %316 = vector.broadcast %315 : f32 to vector<22x52xf32>
    %317 = arith.mulf %306, %316 : vector<22x52xf32>
    %318 = arith.addf %304, %317 : vector<22x52xf32>
    %c2_159 = arith.constant 2 : index
    %c0_160 = arith.constant 0 : index
    %c0_161 = arith.constant 0 : index
    %c0_162 = arith.constant 0 : index
    %319 = vector.load %arg6[%c2_159, %c0_160, %c0_161, %c0_162] : memref<3x3x24x52xf32, #tpu.memory_space<vmem>>, vector<1x1x22x52xf32>
    %320 = vector.shape_cast %319 : vector<1x1x22x52xf32> to vector<22x52xf32>
    %c62 = arith.constant 62 : index
    %321 = memref.load %arg1[%c62] : memref<81xf32, #tpu.memory_space<smem>>
    %322 = vector.broadcast %321 : f32 to vector<22x52xf32>
    %323 = arith.mulf %320, %322 : vector<22x52xf32>
    %324 = arith.addf %310, %323 : vector<22x52xf32>
    %c71 = arith.constant 71 : index
    %325 = memref.load %arg1[%c71] : memref<81xf32, #tpu.memory_space<smem>>
    %326 = vector.broadcast %325 : f32 to vector<22x52xf32>
    %327 = arith.mulf %320, %326 : vector<22x52xf32>
    %328 = arith.addf %314, %327 : vector<22x52xf32>
    %c80 = arith.constant 80 : index
    %329 = memref.load %arg1[%c80] : memref<81xf32, #tpu.memory_space<smem>>
    %330 = vector.broadcast %329 : f32 to vector<22x52xf32>
    %331 = arith.mulf %320, %330 : vector<22x52xf32>
    %332 = arith.addf %318, %331 : vector<22x52xf32>
    %c2_163 = arith.constant 2 : index
    %c0_164 = arith.constant 0 : index
    %c1_165 = arith.constant 1 : index
    %c0_166 = arith.constant 0 : index
    %333 = vector.load %arg6[%c2_163, %c0_164, %c1_165, %c0_166] : memref<3x3x24x52xf32, #tpu.memory_space<vmem>>, vector<1x1x22x52xf32>
    %334 = vector.shape_cast %333 : vector<1x1x22x52xf32> to vector<22x52xf32>
    %c59 = arith.constant 59 : index
    %335 = memref.load %arg1[%c59] : memref<81xf32, #tpu.memory_space<smem>>
    %336 = vector.broadcast %335 : f32 to vector<22x52xf32>
    %337 = arith.mulf %334, %336 : vector<22x52xf32>
    %338 = arith.addf %324, %337 : vector<22x52xf32>
    %c68 = arith.constant 68 : index
    %339 = memref.load %arg1[%c68] : memref<81xf32, #tpu.memory_space<smem>>
    %340 = vector.broadcast %339 : f32 to vector<22x52xf32>
    %341 = arith.mulf %334, %340 : vector<22x52xf32>
    %342 = arith.addf %328, %341 : vector<22x52xf32>
    %c77 = arith.constant 77 : index
    %343 = memref.load %arg1[%c77] : memref<81xf32, #tpu.memory_space<smem>>
    %344 = vector.broadcast %343 : f32 to vector<22x52xf32>
    %345 = arith.mulf %334, %344 : vector<22x52xf32>
    %346 = arith.addf %332, %345 : vector<22x52xf32>
    %c2_167 = arith.constant 2 : index
    %c0_168 = arith.constant 0 : index
    %c2_169 = arith.constant 2 : index
    %c0_170 = arith.constant 0 : index
    %347 = vector.load %arg6[%c2_167, %c0_168, %c2_169, %c0_170] : memref<3x3x24x52xf32, #tpu.memory_space<vmem>>, vector<1x1x22x52xf32>
    %348 = vector.shape_cast %347 : vector<1x1x22x52xf32> to vector<22x52xf32>
    %c56 = arith.constant 56 : index
    %349 = memref.load %arg1[%c56] : memref<81xf32, #tpu.memory_space<smem>>
    %350 = vector.broadcast %349 : f32 to vector<22x52xf32>
    %351 = arith.mulf %348, %350 : vector<22x52xf32>
    %352 = arith.addf %338, %351 : vector<22x52xf32>
    %c65 = arith.constant 65 : index
    %353 = memref.load %arg1[%c65] : memref<81xf32, #tpu.memory_space<smem>>
    %354 = vector.broadcast %353 : f32 to vector<22x52xf32>
    %355 = arith.mulf %348, %354 : vector<22x52xf32>
    %356 = arith.addf %342, %355 : vector<22x52xf32>
    %c74 = arith.constant 74 : index
    %357 = memref.load %arg1[%c74] : memref<81xf32, #tpu.memory_space<smem>>
    %358 = vector.broadcast %357 : f32 to vector<22x52xf32>
    %359 = arith.mulf %348, %358 : vector<22x52xf32>
    %360 = arith.addf %346, %359 : vector<22x52xf32>
    %c2_171 = arith.constant 2 : index
    %c1_172 = arith.constant 1 : index
    %c0_173 = arith.constant 0 : index
    %c0_174 = arith.constant 0 : index
    %361 = vector.load %arg6[%c2_171, %c1_172, %c0_173, %c0_174] : memref<3x3x24x52xf32, #tpu.memory_space<vmem>>, vector<1x1x22x52xf32>
    %362 = vector.shape_cast %361 : vector<1x1x22x52xf32> to vector<22x52xf32>
    %c61 = arith.constant 61 : index
    %363 = memref.load %arg1[%c61] : memref<81xf32, #tpu.memory_space<smem>>
    %364 = vector.broadcast %363 : f32 to vector<22x52xf32>
    %365 = arith.mulf %362, %364 : vector<22x52xf32>
    %366 = arith.addf %352, %365 : vector<22x52xf32>
    %c70 = arith.constant 70 : index
    %367 = memref.load %arg1[%c70] : memref<81xf32, #tpu.memory_space<smem>>
    %368 = vector.broadcast %367 : f32 to vector<22x52xf32>
    %369 = arith.mulf %362, %368 : vector<22x52xf32>
    %370 = arith.addf %356, %369 : vector<22x52xf32>
    %c79 = arith.constant 79 : index
    %371 = memref.load %arg1[%c79] : memref<81xf32, #tpu.memory_space<smem>>
    %372 = vector.broadcast %371 : f32 to vector<22x52xf32>
    %373 = arith.mulf %362, %372 : vector<22x52xf32>
    %374 = arith.addf %360, %373 : vector<22x52xf32>
    %c2_175 = arith.constant 2 : index
    %c1_176 = arith.constant 1 : index
    %c1_177 = arith.constant 1 : index
    %c0_178 = arith.constant 0 : index
    %375 = vector.load %arg6[%c2_175, %c1_176, %c1_177, %c0_178] : memref<3x3x24x52xf32, #tpu.memory_space<vmem>>, vector<1x1x22x52xf32>
    %376 = vector.shape_cast %375 : vector<1x1x22x52xf32> to vector<22x52xf32>
    %c58 = arith.constant 58 : index
    %377 = memref.load %arg1[%c58] : memref<81xf32, #tpu.memory_space<smem>>
    %378 = vector.broadcast %377 : f32 to vector<22x52xf32>
    %379 = arith.mulf %376, %378 : vector<22x52xf32>
    %380 = arith.addf %366, %379 : vector<22x52xf32>
    %c67 = arith.constant 67 : index
    %381 = memref.load %arg1[%c67] : memref<81xf32, #tpu.memory_space<smem>>
    %382 = vector.broadcast %381 : f32 to vector<22x52xf32>
    %383 = arith.mulf %376, %382 : vector<22x52xf32>
    %384 = arith.addf %370, %383 : vector<22x52xf32>
    %c76 = arith.constant 76 : index
    %385 = memref.load %arg1[%c76] : memref<81xf32, #tpu.memory_space<smem>>
    %386 = vector.broadcast %385 : f32 to vector<22x52xf32>
    %387 = arith.mulf %376, %386 : vector<22x52xf32>
    %388 = arith.addf %374, %387 : vector<22x52xf32>
    %c2_179 = arith.constant 2 : index
    %c1_180 = arith.constant 1 : index
    %c2_181 = arith.constant 2 : index
    %c0_182 = arith.constant 0 : index
    %389 = vector.load %arg6[%c2_179, %c1_180, %c2_181, %c0_182] : memref<3x3x24x52xf32, #tpu.memory_space<vmem>>, vector<1x1x22x52xf32>
    %390 = vector.shape_cast %389 : vector<1x1x22x52xf32> to vector<22x52xf32>
    %c55 = arith.constant 55 : index
    %391 = memref.load %arg1[%c55] : memref<81xf32, #tpu.memory_space<smem>>
    %392 = vector.broadcast %391 : f32 to vector<22x52xf32>
    %393 = arith.mulf %390, %392 : vector<22x52xf32>
    %394 = arith.addf %380, %393 : vector<22x52xf32>
    %c64 = arith.constant 64 : index
    %395 = memref.load %arg1[%c64] : memref<81xf32, #tpu.memory_space<smem>>
    %396 = vector.broadcast %395 : f32 to vector<22x52xf32>
    %397 = arith.mulf %390, %396 : vector<22x52xf32>
    %398 = arith.addf %384, %397 : vector<22x52xf32>
    %c73 = arith.constant 73 : index
    %399 = memref.load %arg1[%c73] : memref<81xf32, #tpu.memory_space<smem>>
    %400 = vector.broadcast %399 : f32 to vector<22x52xf32>
    %401 = arith.mulf %390, %400 : vector<22x52xf32>
    %402 = arith.addf %388, %401 : vector<22x52xf32>
    %c2_183 = arith.constant 2 : index
    %c2_184 = arith.constant 2 : index
    %c0_185 = arith.constant 0 : index
    %c0_186 = arith.constant 0 : index
    %403 = vector.load %arg6[%c2_183, %c2_184, %c0_185, %c0_186] : memref<3x3x24x52xf32, #tpu.memory_space<vmem>>, vector<1x1x22x52xf32>
    %404 = vector.shape_cast %403 : vector<1x1x22x52xf32> to vector<22x52xf32>
    %c60 = arith.constant 60 : index
    %405 = memref.load %arg1[%c60] : memref<81xf32, #tpu.memory_space<smem>>
    %406 = vector.broadcast %405 : f32 to vector<22x52xf32>
    %407 = arith.mulf %404, %406 : vector<22x52xf32>
    %408 = arith.addf %394, %407 : vector<22x52xf32>
    %c69 = arith.constant 69 : index
    %409 = memref.load %arg1[%c69] : memref<81xf32, #tpu.memory_space<smem>>
    %410 = vector.broadcast %409 : f32 to vector<22x52xf32>
    %411 = arith.mulf %404, %410 : vector<22x52xf32>
    %412 = arith.addf %398, %411 : vector<22x52xf32>
    %c78 = arith.constant 78 : index
    %413 = memref.load %arg1[%c78] : memref<81xf32, #tpu.memory_space<smem>>
    %414 = vector.broadcast %413 : f32 to vector<22x52xf32>
    %415 = arith.mulf %404, %414 : vector<22x52xf32>
    %416 = arith.addf %402, %415 : vector<22x52xf32>
    %c2_187 = arith.constant 2 : index
    %c2_188 = arith.constant 2 : index
    %c1_189 = arith.constant 1 : index
    %c0_190 = arith.constant 0 : index
    %417 = vector.load %arg6[%c2_187, %c2_188, %c1_189, %c0_190] : memref<3x3x24x52xf32, #tpu.memory_space<vmem>>, vector<1x1x22x52xf32>
    %418 = vector.shape_cast %417 : vector<1x1x22x52xf32> to vector<22x52xf32>
    %c57 = arith.constant 57 : index
    %419 = memref.load %arg1[%c57] : memref<81xf32, #tpu.memory_space<smem>>
    %420 = vector.broadcast %419 : f32 to vector<22x52xf32>
    %421 = arith.mulf %418, %420 : vector<22x52xf32>
    %422 = arith.addf %408, %421 : vector<22x52xf32>
    %c66 = arith.constant 66 : index
    %423 = memref.load %arg1[%c66] : memref<81xf32, #tpu.memory_space<smem>>
    %424 = vector.broadcast %423 : f32 to vector<22x52xf32>
    %425 = arith.mulf %418, %424 : vector<22x52xf32>
    %426 = arith.addf %412, %425 : vector<22x52xf32>
    %c75 = arith.constant 75 : index
    %427 = memref.load %arg1[%c75] : memref<81xf32, #tpu.memory_space<smem>>
    %428 = vector.broadcast %427 : f32 to vector<22x52xf32>
    %429 = arith.mulf %418, %428 : vector<22x52xf32>
    %430 = arith.addf %416, %429 : vector<22x52xf32>
    %c2_191 = arith.constant 2 : index
    %c2_192 = arith.constant 2 : index
    %c2_193 = arith.constant 2 : index
    %c0_194 = arith.constant 0 : index
    %431 = vector.load %arg6[%c2_191, %c2_192, %c2_193, %c0_194] : memref<3x3x24x52xf32, #tpu.memory_space<vmem>>, vector<1x1x22x52xf32>
    %432 = vector.shape_cast %431 : vector<1x1x22x52xf32> to vector<22x52xf32>
    %c54 = arith.constant 54 : index
    %433 = memref.load %arg1[%c54] : memref<81xf32, #tpu.memory_space<smem>>
    %434 = vector.broadcast %433 : f32 to vector<22x52xf32>
    %435 = arith.mulf %432, %434 : vector<22x52xf32>
    %436 = arith.addf %422, %435 : vector<22x52xf32>
    %c63 = arith.constant 63 : index
    %437 = memref.load %arg1[%c63] : memref<81xf32, #tpu.memory_space<smem>>
    %438 = vector.broadcast %437 : f32 to vector<22x52xf32>
    %439 = arith.mulf %432, %438 : vector<22x52xf32>
    %440 = arith.addf %426, %439 : vector<22x52xf32>
    %c72 = arith.constant 72 : index
    %441 = memref.load %arg1[%c72] : memref<81xf32, #tpu.memory_space<smem>>
    %442 = vector.broadcast %441 : f32 to vector<22x52xf32>
    %443 = arith.mulf %432, %442 : vector<22x52xf32>
    %444 = arith.addf %430, %443 : vector<22x52xf32>
    %c0_195 = arith.constant 0 : index
    %c0_196 = arith.constant 0 : index
    %c0_197 = arith.constant 0 : index
    %445 = vector.load %arg7[%c0_195, %c0_196, %c0_197] : memref<3x22x52xf32, #tpu.memory_space<vmem>>, vector<1x22x52xf32>
    %446 = vector.shape_cast %445 : vector<1x22x52xf32> to vector<22x52xf32>
    %447 = vector.shape_cast %436 : vector<22x52xf32> to vector<1x22x52xf32>
    tpu.vector_store %arg7[%c0_195, %c0_196, %c0_197], %447 {strides = array<i32>} : memref<3x22x52xf32, #tpu.memory_space<vmem>>, vector<1x22x52xf32>,
    %c1_198 = arith.constant 1 : index
    %c0_199 = arith.constant 0 : index
    %c0_200 = arith.constant 0 : index
    %448 = vector.load %arg7[%c1_198, %c0_199, %c0_200] : memref<3x22x52xf32, #tpu.memory_space<vmem>>, vector<1x22x52xf32>
    %449 = vector.shape_cast %448 : vector<1x22x52xf32> to vector<22x52xf32>
    %450 = vector.shape_cast %440 : vector<22x52xf32> to vector<1x22x52xf32>
    tpu.vector_store %arg7[%c1_198, %c0_199, %c0_200], %450 {strides = array<i32>} : memref<3x22x52xf32, #tpu.memory_space<vmem>>, vector<1x22x52xf32>,
    %c2_201 = arith.constant 2 : index
    %c0_202 = arith.constant 0 : index
    %c0_203 = arith.constant 0 : index
    %451 = vector.load %arg7[%c2_201, %c0_202, %c0_203] : memref<3x22x52xf32, #tpu.memory_space<vmem>>, vector<1x22x52xf32>
    %452 = vector.shape_cast %451 : vector<1x22x52xf32> to vector<22x52xf32>
    %453 = vector.shape_cast %444 : vector<22x52xf32> to vector<1x22x52xf32>
    tpu.vector_store %arg7[%c2_201, %c0_202, %c0_203], %453 {strides = array<i32>} : memref<3x22x52xf32, #tpu.memory_space<vmem>>, vector<1x22x52xf32>,
    %c0_204 = arith.constant 0 : index
    %c0_205 = arith.constant 0 : index
    %c0_206 = arith.constant 0 : index
    %454 = vector.load %arg7[%c0_204, %c0_205, %c0_206] : memref<3x22x52xf32, #tpu.memory_space<vmem>>, vector<1x22x50xf32>
    %455 = vector.shape_cast %454 : vector<1x22x50xf32> to vector<22x50xf32>
    %c0_207 = arith.constant 0 : index
    %c0_208 = arith.constant 0 : index
    %c0_209 = arith.constant 0 : index
    %c0_210 = arith.constant 0 : index
    %456 = vector.load %arg8[%c0_207, %c0_208, %c0_209, %c0_210] : memref<3x3x22x50xf32, #tpu.memory_space<vmem>>, vector<1x1x22x50xf32>
    %457 = vector.shape_cast %456 : vector<1x1x22x50xf32> to vector<22x50xf32>
    %458 = vector.shape_cast %455 : vector<22x50xf32> to vector<1x1x22x50xf32>
    tpu.vector_store %arg8[%c0_207, %c0_208, %c0_209, %c0_210], %458 {strides = array<i32>} : memref<3x3x22x50xf32, #tpu.memory_space<vmem>>, vector<1x1x22x50xf32>,
    %c0_211 = arith.constant 0 : index
    %c0_212 = arith.constant 0 : index
    %c1_213 = arith.constant 1 : index
    %459 = vector.load %arg7[%c0_211, %c0_212, %c1_213] : memref<3x22x52xf32, #tpu.memory_space<vmem>>, vector<1x22x50xf32>
    %460 = vector.shape_cast %459 : vector<1x22x50xf32> to vector<22x50xf32>
    %c0_214 = arith.constant 0 : index
    %c1_215 = arith.constant 1 : index
    %c0_216 = arith.constant 0 : index
    %c0_217 = arith.constant 0 : index
    %461 = vector.load %arg8[%c0_214, %c1_215, %c0_216, %c0_217] : memref<3x3x22x50xf32, #tpu.memory_space<vmem>>, vector<1x1x22x50xf32>
    %462 = vector.shape_cast %461 : vector<1x1x22x50xf32> to vector<22x50xf32>
    %463 = vector.shape_cast %460 : vector<22x50xf32> to vector<1x1x22x50xf32>
    tpu.vector_store %arg8[%c0_214, %c1_215, %c0_216, %c0_217], %463 {strides = array<i32>} : memref<3x3x22x50xf32, #tpu.memory_space<vmem>>, vector<1x1x22x50xf32>,
    %c0_218 = arith.constant 0 : index
    %c0_219 = arith.constant 0 : index
    %c2_220 = arith.constant 2 : index
    %464 = vector.load %arg7[%c0_218, %c0_219, %c2_220] : memref<3x22x52xf32, #tpu.memory_space<vmem>>, vector<1x22x50xf32>
    %465 = vector.shape_cast %464 : vector<1x22x50xf32> to vector<22x50xf32>
    %c0_221 = arith.constant 0 : index
    %c2_222 = arith.constant 2 : index
    %c0_223 = arith.constant 0 : index
    %c0_224 = arith.constant 0 : index
    %466 = vector.load %arg8[%c0_221, %c2_222, %c0_223, %c0_224] : memref<3x3x22x50xf32, #tpu.memory_space<vmem>>, vector<1x1x22x50xf32>
    %467 = vector.shape_cast %466 : vector<1x1x22x50xf32> to vector<22x50xf32>
    %468 = vector.shape_cast %465 : vector<22x50xf32> to vector<1x1x22x50xf32>
    tpu.vector_store %arg8[%c0_221, %c2_222, %c0_223, %c0_224], %468 {strides = array<i32>} : memref<3x3x22x50xf32, #tpu.memory_space<vmem>>, vector<1x1x22x50xf32>,
    %c1_225 = arith.constant 1 : index
    %c0_226 = arith.constant 0 : index
    %c0_227 = arith.constant 0 : index
    %469 = vector.load %arg7[%c1_225, %c0_226, %c0_227] : memref<3x22x52xf32, #tpu.memory_space<vmem>>, vector<1x22x50xf32>
    %470 = vector.shape_cast %469 : vector<1x22x50xf32> to vector<22x50xf32>
    %c1_228 = arith.constant 1 : index
    %c0_229 = arith.constant 0 : index
    %c0_230 = arith.constant 0 : index
    %c0_231 = arith.constant 0 : index
    %471 = vector.load %arg8[%c1_228, %c0_229, %c0_230, %c0_231] : memref<3x3x22x50xf32, #tpu.memory_space<vmem>>, vector<1x1x22x50xf32>
    %472 = vector.shape_cast %471 : vector<1x1x22x50xf32> to vector<22x50xf32>
    %473 = vector.shape_cast %470 : vector<22x50xf32> to vector<1x1x22x50xf32>
    tpu.vector_store %arg8[%c1_228, %c0_229, %c0_230, %c0_231], %473 {strides = array<i32>} : memref<3x3x22x50xf32, #tpu.memory_space<vmem>>, vector<1x1x22x50xf32>,
    %c1_232 = arith.constant 1 : index
    %c0_233 = arith.constant 0 : index
    %c1_234 = arith.constant 1 : index
    %474 = vector.load %arg7[%c1_232, %c0_233, %c1_234] : memref<3x22x52xf32, #tpu.memory_space<vmem>>, vector<1x22x50xf32>
    %475 = vector.shape_cast %474 : vector<1x22x50xf32> to vector<22x50xf32>
    %c1_235 = arith.constant 1 : index
    %c1_236 = arith.constant 1 : index
    %c0_237 = arith.constant 0 : index
    %c0_238 = arith.constant 0 : index
    %476 = vector.load %arg8[%c1_235, %c1_236, %c0_237, %c0_238] : memref<3x3x22x50xf32, #tpu.memory_space<vmem>>, vector<1x1x22x50xf32>
    %477 = vector.shape_cast %476 : vector<1x1x22x50xf32> to vector<22x50xf32>
    %478 = vector.shape_cast %475 : vector<22x50xf32> to vector<1x1x22x50xf32>
    tpu.vector_store %arg8[%c1_235, %c1_236, %c0_237, %c0_238], %478 {strides = array<i32>} : memref<3x3x22x50xf32, #tpu.memory_space<vmem>>, vector<1x1x22x50xf32>,
    %c1_239 = arith.constant 1 : index
    %c0_240 = arith.constant 0 : index
    %c2_241 = arith.constant 2 : index
    %479 = vector.load %arg7[%c1_239, %c0_240, %c2_241] : memref<3x22x52xf32, #tpu.memory_space<vmem>>, vector<1x22x50xf32>
    %480 = vector.shape_cast %479 : vector<1x22x50xf32> to vector<22x50xf32>
    %c1_242 = arith.constant 1 : index
    %c2_243 = arith.constant 2 : index
    %c0_244 = arith.constant 0 : index
    %c0_245 = arith.constant 0 : index
    %481 = vector.load %arg8[%c1_242, %c2_243, %c0_244, %c0_245] : memref<3x3x22x50xf32, #tpu.memory_space<vmem>>, vector<1x1x22x50xf32>
    %482 = vector.shape_cast %481 : vector<1x1x22x50xf32> to vector<22x50xf32>
    %483 = vector.shape_cast %480 : vector<22x50xf32> to vector<1x1x22x50xf32>
    tpu.vector_store %arg8[%c1_242, %c2_243, %c0_244, %c0_245], %483 {strides = array<i32>} : memref<3x3x22x50xf32, #tpu.memory_space<vmem>>, vector<1x1x22x50xf32>,
    %c2_246 = arith.constant 2 : index
    %c0_247 = arith.constant 0 : index
    %c0_248 = arith.constant 0 : index
    %484 = vector.load %arg7[%c2_246, %c0_247, %c0_248] : memref<3x22x52xf32, #tpu.memory_space<vmem>>, vector<1x22x50xf32>
    %485 = vector.shape_cast %484 : vector<1x22x50xf32> to vector<22x50xf32>
    %c2_249 = arith.constant 2 : index
    %c0_250 = arith.constant 0 : index
    %c0_251 = arith.constant 0 : index
    %c0_252 = arith.constant 0 : index
    %486 = vector.load %arg8[%c2_249, %c0_250, %c0_251, %c0_252] : memref<3x3x22x50xf32, #tpu.memory_space<vmem>>, vector<1x1x22x50xf32>
    %487 = vector.shape_cast %486 : vector<1x1x22x50xf32> to vector<22x50xf32>
    %488 = vector.shape_cast %485 : vector<22x50xf32> to vector<1x1x22x50xf32>
    tpu.vector_store %arg8[%c2_249, %c0_250, %c0_251, %c0_252], %488 {strides = array<i32>} : memref<3x3x22x50xf32, #tpu.memory_space<vmem>>, vector<1x1x22x50xf32>,
    %c2_253 = arith.constant 2 : index
    %c0_254 = arith.constant 0 : index
    %c1_255 = arith.constant 1 : index
    %489 = vector.load %arg7[%c2_253, %c0_254, %c1_255] : memref<3x22x52xf32, #tpu.memory_space<vmem>>, vector<1x22x50xf32>
    %490 = vector.shape_cast %489 : vector<1x22x50xf32> to vector<22x50xf32>
    %c2_256 = arith.constant 2 : index
    %c1_257 = arith.constant 1 : index
    %c0_258 = arith.constant 0 : index
    %c0_259 = arith.constant 0 : index
    %491 = vector.load %arg8[%c2_256, %c1_257, %c0_258, %c0_259] : memref<3x3x22x50xf32, #tpu.memory_space<vmem>>, vector<1x1x22x50xf32>
    %492 = vector.shape_cast %491 : vector<1x1x22x50xf32> to vector<22x50xf32>
    %493 = vector.shape_cast %490 : vector<22x50xf32> to vector<1x1x22x50xf32>
    tpu.vector_store %arg8[%c2_256, %c1_257, %c0_258, %c0_259], %493 {strides = array<i32>} : memref<3x3x22x50xf32, #tpu.memory_space<vmem>>, vector<1x1x22x50xf32>,
    %c2_260 = arith.constant 2 : index
    %c0_261 = arith.constant 0 : index
    %c2_262 = arith.constant 2 : index
    %494 = vector.load %arg7[%c2_260, %c0_261, %c2_262] : memref<3x22x52xf32, #tpu.memory_space<vmem>>, vector<1x22x50xf32>
    %495 = vector.shape_cast %494 : vector<1x22x50xf32> to vector<22x50xf32>
    %c2_263 = arith.constant 2 : index
    %c2_264 = arith.constant 2 : index
    %c0_265 = arith.constant 0 : index
    %c0_266 = arith.constant 0 : index
    %496 = vector.load %arg8[%c2_263, %c2_264, %c0_265, %c0_266] : memref<3x3x22x50xf32, #tpu.memory_space<vmem>>, vector<1x1x22x50xf32>
    %497 = vector.shape_cast %496 : vector<1x1x22x50xf32> to vector<22x50xf32>
    %498 = vector.shape_cast %495 : vector<22x50xf32> to vector<1x1x22x50xf32>
    tpu.vector_store %arg8[%c2_263, %c2_264, %c0_265, %c0_266], %498 {strides = array<i32>} : memref<3x3x22x50xf32, #tpu.memory_space<vmem>>, vector<1x1x22x50xf32>,
    %c0_267 = arith.constant 0 : index
    %499 = memref.load %arg4[%c0_267] : memref<3xf32, #tpu.memory_space<smem>>
    %500 = vector.broadcast %499 : f32 to vector<20x50xf32>
    %c1_268 = arith.constant 1 : index
    %501 = memref.load %arg4[%c1_268] : memref<3xf32, #tpu.memory_space<smem>>
    %502 = vector.broadcast %501 : f32 to vector<20x50xf32>
    %c2_269 = arith.constant 2 : index
    %503 = memref.load %arg4[%c2_269] : memref<3xf32, #tpu.memory_space<smem>>
    %504 = vector.broadcast %503 : f32 to vector<20x50xf32>
    %c0_270 = arith.constant 0 : index
    %c0_271 = arith.constant 0 : index
    %c0_272 = arith.constant 0 : index
    %c0_273 = arith.constant 0 : index
    %505 = vector.load %arg8[%c0_270, %c0_271, %c0_272, %c0_273] : memref<3x3x22x50xf32, #tpu.memory_space<vmem>>, vector<1x1x20x50xf32>
    %506 = vector.shape_cast %505 : vector<1x1x20x50xf32> to vector<20x50xf32>
    %c0_274 = arith.constant 0 : index
    %507 = memref.load %arg3[%c0_274] : memref<81xf32, #tpu.memory_space<smem>>
    %508 = vector.broadcast %507 : f32 to vector<20x50xf32>
    %509 = arith.mulf %506, %508 : vector<20x50xf32>
    %510 = arith.addf %500, %509 : vector<20x50xf32>
    %c27_275 = arith.constant 27 : index
    %511 = memref.load %arg3[%c27_275] : memref<81xf32, #tpu.memory_space<smem>>
    %512 = vector.broadcast %511 : f32 to vector<20x50xf32>
    %513 = arith.mulf %506, %512 : vector<20x50xf32>
    %514 = arith.addf %502, %513 : vector<20x50xf32>
    %c54_276 = arith.constant 54 : index
    %515 = memref.load %arg3[%c54_276] : memref<81xf32, #tpu.memory_space<smem>>
    %516 = vector.broadcast %515 : f32 to vector<20x50xf32>
    %517 = arith.mulf %506, %516 : vector<20x50xf32>
    %518 = arith.addf %504, %517 : vector<20x50xf32>
    %c0_277 = arith.constant 0 : index
    %c0_278 = arith.constant 0 : index
    %c1_279 = arith.constant 1 : index
    %c0_280 = arith.constant 0 : index
    %519 = vector.load %arg8[%c0_277, %c0_278, %c1_279, %c0_280] : memref<3x3x22x50xf32, #tpu.memory_space<vmem>>, vector<1x1x20x50xf32>
    %520 = vector.shape_cast %519 : vector<1x1x20x50xf32> to vector<20x50xf32>
    %c3_281 = arith.constant 3 : index
    %521 = memref.load %arg3[%c3_281] : memref<81xf32, #tpu.memory_space<smem>>
    %522 = vector.broadcast %521 : f32 to vector<20x50xf32>
    %523 = arith.mulf %520, %522 : vector<20x50xf32>
    %524 = arith.addf %510, %523 : vector<20x50xf32>
    %c30_282 = arith.constant 30 : index
    %525 = memref.load %arg3[%c30_282] : memref<81xf32, #tpu.memory_space<smem>>
    %526 = vector.broadcast %525 : f32 to vector<20x50xf32>
    %527 = arith.mulf %520, %526 : vector<20x50xf32>
    %528 = arith.addf %514, %527 : vector<20x50xf32>
    %c57_283 = arith.constant 57 : index
    %529 = memref.load %arg3[%c57_283] : memref<81xf32, #tpu.memory_space<smem>>
    %530 = vector.broadcast %529 : f32 to vector<20x50xf32>
    %531 = arith.mulf %520, %530 : vector<20x50xf32>
    %532 = arith.addf %518, %531 : vector<20x50xf32>
    %c0_284 = arith.constant 0 : index
    %c0_285 = arith.constant 0 : index
    %c2_286 = arith.constant 2 : index
    %c0_287 = arith.constant 0 : index
    %533 = vector.load %arg8[%c0_284, %c0_285, %c2_286, %c0_287] : memref<3x3x22x50xf32, #tpu.memory_space<vmem>>, vector<1x1x20x50xf32>
    %534 = vector.shape_cast %533 : vector<1x1x20x50xf32> to vector<20x50xf32>
    %c6_288 = arith.constant 6 : index
    %535 = memref.load %arg3[%c6_288] : memref<81xf32, #tpu.memory_space<smem>>
    %536 = vector.broadcast %535 : f32 to vector<20x50xf32>
    %537 = arith.mulf %534, %536 : vector<20x50xf32>
    %538 = arith.addf %524, %537 : vector<20x50xf32>
    %c33_289 = arith.constant 33 : index
    %539 = memref.load %arg3[%c33_289] : memref<81xf32, #tpu.memory_space<smem>>
    %540 = vector.broadcast %539 : f32 to vector<20x50xf32>
    %541 = arith.mulf %534, %540 : vector<20x50xf32>
    %542 = arith.addf %528, %541 : vector<20x50xf32>
    %c60_290 = arith.constant 60 : index
    %543 = memref.load %arg3[%c60_290] : memref<81xf32, #tpu.memory_space<smem>>
    %544 = vector.broadcast %543 : f32 to vector<20x50xf32>
    %545 = arith.mulf %534, %544 : vector<20x50xf32>
    %546 = arith.addf %532, %545 : vector<20x50xf32>
    %c0_291 = arith.constant 0 : index
    %c1_292 = arith.constant 1 : index
    %c0_293 = arith.constant 0 : index
    %c0_294 = arith.constant 0 : index
    %547 = vector.load %arg8[%c0_291, %c1_292, %c0_293, %c0_294] : memref<3x3x22x50xf32, #tpu.memory_space<vmem>>, vector<1x1x20x50xf32>
    %548 = vector.shape_cast %547 : vector<1x1x20x50xf32> to vector<20x50xf32>
    %c1_295 = arith.constant 1 : index
    %549 = memref.load %arg3[%c1_295] : memref<81xf32, #tpu.memory_space<smem>>
    %550 = vector.broadcast %549 : f32 to vector<20x50xf32>
    %551 = arith.mulf %548, %550 : vector<20x50xf32>
    %552 = arith.addf %538, %551 : vector<20x50xf32>
    %c28_296 = arith.constant 28 : index
    %553 = memref.load %arg3[%c28_296] : memref<81xf32, #tpu.memory_space<smem>>
    %554 = vector.broadcast %553 : f32 to vector<20x50xf32>
    %555 = arith.mulf %548, %554 : vector<20x50xf32>
    %556 = arith.addf %542, %555 : vector<20x50xf32>
    %c55_297 = arith.constant 55 : index
    %557 = memref.load %arg3[%c55_297] : memref<81xf32, #tpu.memory_space<smem>>
    %558 = vector.broadcast %557 : f32 to vector<20x50xf32>
    %559 = arith.mulf %548, %558 : vector<20x50xf32>
    %560 = arith.addf %546, %559 : vector<20x50xf32>
    %c0_298 = arith.constant 0 : index
    %c1_299 = arith.constant 1 : index
    %c1_300 = arith.constant 1 : index
    %c0_301 = arith.constant 0 : index
    %561 = vector.load %arg8[%c0_298, %c1_299, %c1_300, %c0_301] : memref<3x3x22x50xf32, #tpu.memory_space<vmem>>, vector<1x1x20x50xf32>
    %562 = vector.shape_cast %561 : vector<1x1x20x50xf32> to vector<20x50xf32>
    %c4_302 = arith.constant 4 : index
    %563 = memref.load %arg3[%c4_302] : memref<81xf32, #tpu.memory_space<smem>>
    %564 = vector.broadcast %563 : f32 to vector<20x50xf32>
    %565 = arith.mulf %562, %564 : vector<20x50xf32>
    %566 = arith.addf %552, %565 : vector<20x50xf32>
    %c31_303 = arith.constant 31 : index
    %567 = memref.load %arg3[%c31_303] : memref<81xf32, #tpu.memory_space<smem>>
    %568 = vector.broadcast %567 : f32 to vector<20x50xf32>
    %569 = arith.mulf %562, %568 : vector<20x50xf32>
    %570 = arith.addf %556, %569 : vector<20x50xf32>
    %c58_304 = arith.constant 58 : index
    %571 = memref.load %arg3[%c58_304] : memref<81xf32, #tpu.memory_space<smem>>
    %572 = vector.broadcast %571 : f32 to vector<20x50xf32>
    %573 = arith.mulf %562, %572 : vector<20x50xf32>
    %574 = arith.addf %560, %573 : vector<20x50xf32>
    %c0_305 = arith.constant 0 : index
    %c1_306 = arith.constant 1 : index
    %c2_307 = arith.constant 2 : index
    %c0_308 = arith.constant 0 : index
    %575 = vector.load %arg8[%c0_305, %c1_306, %c2_307, %c0_308] : memref<3x3x22x50xf32, #tpu.memory_space<vmem>>, vector<1x1x20x50xf32>
    %576 = vector.shape_cast %575 : vector<1x1x20x50xf32> to vector<20x50xf32>
    %c7_309 = arith.constant 7 : index
    %577 = memref.load %arg3[%c7_309] : memref<81xf32, #tpu.memory_space<smem>>
    %578 = vector.broadcast %577 : f32 to vector<20x50xf32>
    %579 = arith.mulf %576, %578 : vector<20x50xf32>
    %580 = arith.addf %566, %579 : vector<20x50xf32>
    %c34_310 = arith.constant 34 : index
    %581 = memref.load %arg3[%c34_310] : memref<81xf32, #tpu.memory_space<smem>>
    %582 = vector.broadcast %581 : f32 to vector<20x50xf32>
    %583 = arith.mulf %576, %582 : vector<20x50xf32>
    %584 = arith.addf %570, %583 : vector<20x50xf32>
    %c61_311 = arith.constant 61 : index
    %585 = memref.load %arg3[%c61_311] : memref<81xf32, #tpu.memory_space<smem>>
    %586 = vector.broadcast %585 : f32 to vector<20x50xf32>
    %587 = arith.mulf %576, %586 : vector<20x50xf32>
    %588 = arith.addf %574, %587 : vector<20x50xf32>
    %c0_312 = arith.constant 0 : index
    %c2_313 = arith.constant 2 : index
    %c0_314 = arith.constant 0 : index
    %c0_315 = arith.constant 0 : index
    %589 = vector.load %arg8[%c0_312, %c2_313, %c0_314, %c0_315] : memref<3x3x22x50xf32, #tpu.memory_space<vmem>>, vector<1x1x20x50xf32>
    %590 = vector.shape_cast %589 : vector<1x1x20x50xf32> to vector<20x50xf32>
    %c2_316 = arith.constant 2 : index
    %591 = memref.load %arg3[%c2_316] : memref<81xf32, #tpu.memory_space<smem>>
    %592 = vector.broadcast %591 : f32 to vector<20x50xf32>
    %593 = arith.mulf %590, %592 : vector<20x50xf32>
    %594 = arith.addf %580, %593 : vector<20x50xf32>
    %c29_317 = arith.constant 29 : index
    %595 = memref.load %arg3[%c29_317] : memref<81xf32, #tpu.memory_space<smem>>
    %596 = vector.broadcast %595 : f32 to vector<20x50xf32>
    %597 = arith.mulf %590, %596 : vector<20x50xf32>
    %598 = arith.addf %584, %597 : vector<20x50xf32>
    %c56_318 = arith.constant 56 : index
    %599 = memref.load %arg3[%c56_318] : memref<81xf32, #tpu.memory_space<smem>>
    %600 = vector.broadcast %599 : f32 to vector<20x50xf32>
    %601 = arith.mulf %590, %600 : vector<20x50xf32>
    %602 = arith.addf %588, %601 : vector<20x50xf32>
    %c0_319 = arith.constant 0 : index
    %c2_320 = arith.constant 2 : index
    %c1_321 = arith.constant 1 : index
    %c0_322 = arith.constant 0 : index
    %603 = vector.load %arg8[%c0_319, %c2_320, %c1_321, %c0_322] : memref<3x3x22x50xf32, #tpu.memory_space<vmem>>, vector<1x1x20x50xf32>
    %604 = vector.shape_cast %603 : vector<1x1x20x50xf32> to vector<20x50xf32>
    %c5_323 = arith.constant 5 : index
    %605 = memref.load %arg3[%c5_323] : memref<81xf32, #tpu.memory_space<smem>>
    %606 = vector.broadcast %605 : f32 to vector<20x50xf32>
    %607 = arith.mulf %604, %606 : vector<20x50xf32>
    %608 = arith.addf %594, %607 : vector<20x50xf32>
    %c32_324 = arith.constant 32 : index
    %609 = memref.load %arg3[%c32_324] : memref<81xf32, #tpu.memory_space<smem>>
    %610 = vector.broadcast %609 : f32 to vector<20x50xf32>
    %611 = arith.mulf %604, %610 : vector<20x50xf32>
    %612 = arith.addf %598, %611 : vector<20x50xf32>
    %c59_325 = arith.constant 59 : index
    %613 = memref.load %arg3[%c59_325] : memref<81xf32, #tpu.memory_space<smem>>
    %614 = vector.broadcast %613 : f32 to vector<20x50xf32>
    %615 = arith.mulf %604, %614 : vector<20x50xf32>
    %616 = arith.addf %602, %615 : vector<20x50xf32>
    %c0_326 = arith.constant 0 : index
    %c2_327 = arith.constant 2 : index
    %c2_328 = arith.constant 2 : index
    %c0_329 = arith.constant 0 : index
    %617 = vector.load %arg8[%c0_326, %c2_327, %c2_328, %c0_329] : memref<3x3x22x50xf32, #tpu.memory_space<vmem>>, vector<1x1x20x50xf32>
    %618 = vector.shape_cast %617 : vector<1x1x20x50xf32> to vector<20x50xf32>
    %c8_330 = arith.constant 8 : index
    %619 = memref.load %arg3[%c8_330] : memref<81xf32, #tpu.memory_space<smem>>
    %620 = vector.broadcast %619 : f32 to vector<20x50xf32>
    %621 = arith.mulf %618, %620 : vector<20x50xf32>
    %622 = arith.addf %608, %621 : vector<20x50xf32>
    %c35_331 = arith.constant 35 : index
    %623 = memref.load %arg3[%c35_331] : memref<81xf32, #tpu.memory_space<smem>>
    %624 = vector.broadcast %623 : f32 to vector<20x50xf32>
    %625 = arith.mulf %618, %624 : vector<20x50xf32>
    %626 = arith.addf %612, %625 : vector<20x50xf32>
    %c62_332 = arith.constant 62 : index
    %627 = memref.load %arg3[%c62_332] : memref<81xf32, #tpu.memory_space<smem>>
    %628 = vector.broadcast %627 : f32 to vector<20x50xf32>
    %629 = arith.mulf %618, %628 : vector<20x50xf32>
    %630 = arith.addf %616, %629 : vector<20x50xf32>
    %c1_333 = arith.constant 1 : index
    %c0_334 = arith.constant 0 : index
    %c0_335 = arith.constant 0 : index
    %c0_336 = arith.constant 0 : index
    %631 = vector.load %arg8[%c1_333, %c0_334, %c0_335, %c0_336] : memref<3x3x22x50xf32, #tpu.memory_space<vmem>>, vector<1x1x20x50xf32>
    %632 = vector.shape_cast %631 : vector<1x1x20x50xf32> to vector<20x50xf32>
    %c9_337 = arith.constant 9 : index
    %633 = memref.load %arg3[%c9_337] : memref<81xf32, #tpu.memory_space<smem>>
    %634 = vector.broadcast %633 : f32 to vector<20x50xf32>
    %635 = arith.mulf %632, %634 : vector<20x50xf32>
    %636 = arith.addf %622, %635 : vector<20x50xf32>
    %c36_338 = arith.constant 36 : index
    %637 = memref.load %arg3[%c36_338] : memref<81xf32, #tpu.memory_space<smem>>
    %638 = vector.broadcast %637 : f32 to vector<20x50xf32>
    %639 = arith.mulf %632, %638 : vector<20x50xf32>
    %640 = arith.addf %626, %639 : vector<20x50xf32>
    %c63_339 = arith.constant 63 : index
    %641 = memref.load %arg3[%c63_339] : memref<81xf32, #tpu.memory_space<smem>>
    %642 = vector.broadcast %641 : f32 to vector<20x50xf32>
    %643 = arith.mulf %632, %642 : vector<20x50xf32>
    %644 = arith.addf %630, %643 : vector<20x50xf32>
    %c1_340 = arith.constant 1 : index
    %c0_341 = arith.constant 0 : index
    %c1_342 = arith.constant 1 : index
    %c0_343 = arith.constant 0 : index
    %645 = vector.load %arg8[%c1_340, %c0_341, %c1_342, %c0_343] : memref<3x3x22x50xf32, #tpu.memory_space<vmem>>, vector<1x1x20x50xf32>
    %646 = vector.shape_cast %645 : vector<1x1x20x50xf32> to vector<20x50xf32>
    %c12_344 = arith.constant 12 : index
    %647 = memref.load %arg3[%c12_344] : memref<81xf32, #tpu.memory_space<smem>>
    %648 = vector.broadcast %647 : f32 to vector<20x50xf32>
    %649 = arith.mulf %646, %648 : vector<20x50xf32>
    %650 = arith.addf %636, %649 : vector<20x50xf32>
    %c39_345 = arith.constant 39 : index
    %651 = memref.load %arg3[%c39_345] : memref<81xf32, #tpu.memory_space<smem>>
    %652 = vector.broadcast %651 : f32 to vector<20x50xf32>
    %653 = arith.mulf %646, %652 : vector<20x50xf32>
    %654 = arith.addf %640, %653 : vector<20x50xf32>
    %c66_346 = arith.constant 66 : index
    %655 = memref.load %arg3[%c66_346] : memref<81xf32, #tpu.memory_space<smem>>
    %656 = vector.broadcast %655 : f32 to vector<20x50xf32>
    %657 = arith.mulf %646, %656 : vector<20x50xf32>
    %658 = arith.addf %644, %657 : vector<20x50xf32>
    %c1_347 = arith.constant 1 : index
    %c0_348 = arith.constant 0 : index
    %c2_349 = arith.constant 2 : index
    %c0_350 = arith.constant 0 : index
    %659 = vector.load %arg8[%c1_347, %c0_348, %c2_349, %c0_350] : memref<3x3x22x50xf32, #tpu.memory_space<vmem>>, vector<1x1x20x50xf32>
    %660 = vector.shape_cast %659 : vector<1x1x20x50xf32> to vector<20x50xf32>
    %c15_351 = arith.constant 15 : index
    %661 = memref.load %arg3[%c15_351] : memref<81xf32, #tpu.memory_space<smem>>
    %662 = vector.broadcast %661 : f32 to vector<20x50xf32>
    %663 = arith.mulf %660, %662 : vector<20x50xf32>
    %664 = arith.addf %650, %663 : vector<20x50xf32>
    %c42_352 = arith.constant 42 : index
    %665 = memref.load %arg3[%c42_352] : memref<81xf32, #tpu.memory_space<smem>>
    %666 = vector.broadcast %665 : f32 to vector<20x50xf32>
    %667 = arith.mulf %660, %666 : vector<20x50xf32>
    %668 = arith.addf %654, %667 : vector<20x50xf32>
    %c69_353 = arith.constant 69 : index
    %669 = memref.load %arg3[%c69_353] : memref<81xf32, #tpu.memory_space<smem>>
    %670 = vector.broadcast %669 : f32 to vector<20x50xf32>
    %671 = arith.mulf %660, %670 : vector<20x50xf32>
    %672 = arith.addf %658, %671 : vector<20x50xf32>
    %c1_354 = arith.constant 1 : index
    %c1_355 = arith.constant 1 : index
    %c0_356 = arith.constant 0 : index
    %c0_357 = arith.constant 0 : index
    %673 = vector.load %arg8[%c1_354, %c1_355, %c0_356, %c0_357] : memref<3x3x22x50xf32, #tpu.memory_space<vmem>>, vector<1x1x20x50xf32>
    %674 = vector.shape_cast %673 : vector<1x1x20x50xf32> to vector<20x50xf32>
    %c10_358 = arith.constant 10 : index
    %675 = memref.load %arg3[%c10_358] : memref<81xf32, #tpu.memory_space<smem>>
    %676 = vector.broadcast %675 : f32 to vector<20x50xf32>
    %677 = arith.mulf %674, %676 : vector<20x50xf32>
    %678 = arith.addf %664, %677 : vector<20x50xf32>
    %c37_359 = arith.constant 37 : index
    %679 = memref.load %arg3[%c37_359] : memref<81xf32, #tpu.memory_space<smem>>
    %680 = vector.broadcast %679 : f32 to vector<20x50xf32>
    %681 = arith.mulf %674, %680 : vector<20x50xf32>
    %682 = arith.addf %668, %681 : vector<20x50xf32>
    %c64_360 = arith.constant 64 : index
    %683 = memref.load %arg3[%c64_360] : memref<81xf32, #tpu.memory_space<smem>>
    %684 = vector.broadcast %683 : f32 to vector<20x50xf32>
    %685 = arith.mulf %674, %684 : vector<20x50xf32>
    %686 = arith.addf %672, %685 : vector<20x50xf32>
    %c1_361 = arith.constant 1 : index
    %c1_362 = arith.constant 1 : index
    %c1_363 = arith.constant 1 : index
    %c0_364 = arith.constant 0 : index
    %687 = vector.load %arg8[%c1_361, %c1_362, %c1_363, %c0_364] : memref<3x3x22x50xf32, #tpu.memory_space<vmem>>, vector<1x1x20x50xf32>
    %688 = vector.shape_cast %687 : vector<1x1x20x50xf32> to vector<20x50xf32>
    %c13_365 = arith.constant 13 : index
    %689 = memref.load %arg3[%c13_365] : memref<81xf32, #tpu.memory_space<smem>>
    %690 = vector.broadcast %689 : f32 to vector<20x50xf32>
    %691 = arith.mulf %688, %690 : vector<20x50xf32>
    %692 = arith.addf %678, %691 : vector<20x50xf32>
    %c40_366 = arith.constant 40 : index
    %693 = memref.load %arg3[%c40_366] : memref<81xf32, #tpu.memory_space<smem>>
    %694 = vector.broadcast %693 : f32 to vector<20x50xf32>
    %695 = arith.mulf %688, %694 : vector<20x50xf32>
    %696 = arith.addf %682, %695 : vector<20x50xf32>
    %c67_367 = arith.constant 67 : index
    %697 = memref.load %arg3[%c67_367] : memref<81xf32, #tpu.memory_space<smem>>
    %698 = vector.broadcast %697 : f32 to vector<20x50xf32>
    %699 = arith.mulf %688, %698 : vector<20x50xf32>
    %700 = arith.addf %686, %699 : vector<20x50xf32>
    %c1_368 = arith.constant 1 : index
    %c1_369 = arith.constant 1 : index
    %c2_370 = arith.constant 2 : index
    %c0_371 = arith.constant 0 : index
    %701 = vector.load %arg8[%c1_368, %c1_369, %c2_370, %c0_371] : memref<3x3x22x50xf32, #tpu.memory_space<vmem>>, vector<1x1x20x50xf32>
    %702 = vector.shape_cast %701 : vector<1x1x20x50xf32> to vector<20x50xf32>
    %c16_372 = arith.constant 16 : index
    %703 = memref.load %arg3[%c16_372] : memref<81xf32, #tpu.memory_space<smem>>
    %704 = vector.broadcast %703 : f32 to vector<20x50xf32>
    %705 = arith.mulf %702, %704 : vector<20x50xf32>
    %706 = arith.addf %692, %705 : vector<20x50xf32>
    %c43_373 = arith.constant 43 : index
    %707 = memref.load %arg3[%c43_373] : memref<81xf32, #tpu.memory_space<smem>>
    %708 = vector.broadcast %707 : f32 to vector<20x50xf32>
    %709 = arith.mulf %702, %708 : vector<20x50xf32>
    %710 = arith.addf %696, %709 : vector<20x50xf32>
    %c70_374 = arith.constant 70 : index
    %711 = memref.load %arg3[%c70_374] : memref<81xf32, #tpu.memory_space<smem>>
    %712 = vector.broadcast %711 : f32 to vector<20x50xf32>
    %713 = arith.mulf %702, %712 : vector<20x50xf32>
    %714 = arith.addf %700, %713 : vector<20x50xf32>
    %c1_375 = arith.constant 1 : index
    %c2_376 = arith.constant 2 : index
    %c0_377 = arith.constant 0 : index
    %c0_378 = arith.constant 0 : index
    %715 = vector.load %arg8[%c1_375, %c2_376, %c0_377, %c0_378] : memref<3x3x22x50xf32, #tpu.memory_space<vmem>>, vector<1x1x20x50xf32>
    %716 = vector.shape_cast %715 : vector<1x1x20x50xf32> to vector<20x50xf32>
    %c11_379 = arith.constant 11 : index
    %717 = memref.load %arg3[%c11_379] : memref<81xf32, #tpu.memory_space<smem>>
    %718 = vector.broadcast %717 : f32 to vector<20x50xf32>
    %719 = arith.mulf %716, %718 : vector<20x50xf32>
    %720 = arith.addf %706, %719 : vector<20x50xf32>
    %c38_380 = arith.constant 38 : index
    %721 = memref.load %arg3[%c38_380] : memref<81xf32, #tpu.memory_space<smem>>
    %722 = vector.broadcast %721 : f32 to vector<20x50xf32>
    %723 = arith.mulf %716, %722 : vector<20x50xf32>
    %724 = arith.addf %710, %723 : vector<20x50xf32>
    %c65_381 = arith.constant 65 : index
    %725 = memref.load %arg3[%c65_381] : memref<81xf32, #tpu.memory_space<smem>>
    %726 = vector.broadcast %725 : f32 to vector<20x50xf32>
    %727 = arith.mulf %716, %726 : vector<20x50xf32>
    %728 = arith.addf %714, %727 : vector<20x50xf32>
    %c1_382 = arith.constant 1 : index
    %c2_383 = arith.constant 2 : index
    %c1_384 = arith.constant 1 : index
    %c0_385 = arith.constant 0 : index
    %729 = vector.load %arg8[%c1_382, %c2_383, %c1_384, %c0_385] : memref<3x3x22x50xf32, #tpu.memory_space<vmem>>, vector<1x1x20x50xf32>
    %730 = vector.shape_cast %729 : vector<1x1x20x50xf32> to vector<20x50xf32>
    %c14_386 = arith.constant 14 : index
    %731 = memref.load %arg3[%c14_386] : memref<81xf32, #tpu.memory_space<smem>>
    %732 = vector.broadcast %731 : f32 to vector<20x50xf32>
    %733 = arith.mulf %730, %732 : vector<20x50xf32>
    %734 = arith.addf %720, %733 : vector<20x50xf32>
    %c41_387 = arith.constant 41 : index
    %735 = memref.load %arg3[%c41_387] : memref<81xf32, #tpu.memory_space<smem>>
    %736 = vector.broadcast %735 : f32 to vector<20x50xf32>
    %737 = arith.mulf %730, %736 : vector<20x50xf32>
    %738 = arith.addf %724, %737 : vector<20x50xf32>
    %c68_388 = arith.constant 68 : index
    %739 = memref.load %arg3[%c68_388] : memref<81xf32, #tpu.memory_space<smem>>
    %740 = vector.broadcast %739 : f32 to vector<20x50xf32>
    %741 = arith.mulf %730, %740 : vector<20x50xf32>
    %742 = arith.addf %728, %741 : vector<20x50xf32>
    %c1_389 = arith.constant 1 : index
    %c2_390 = arith.constant 2 : index
    %c2_391 = arith.constant 2 : index
    %c0_392 = arith.constant 0 : index
    %743 = vector.load %arg8[%c1_389, %c2_390, %c2_391, %c0_392] : memref<3x3x22x50xf32, #tpu.memory_space<vmem>>, vector<1x1x20x50xf32>
    %744 = vector.shape_cast %743 : vector<1x1x20x50xf32> to vector<20x50xf32>
    %c17_393 = arith.constant 17 : index
    %745 = memref.load %arg3[%c17_393] : memref<81xf32, #tpu.memory_space<smem>>
    %746 = vector.broadcast %745 : f32 to vector<20x50xf32>
    %747 = arith.mulf %744, %746 : vector<20x50xf32>
    %748 = arith.addf %734, %747 : vector<20x50xf32>
    %c44_394 = arith.constant 44 : index
    %749 = memref.load %arg3[%c44_394] : memref<81xf32, #tpu.memory_space<smem>>
    %750 = vector.broadcast %749 : f32 to vector<20x50xf32>
    %751 = arith.mulf %744, %750 : vector<20x50xf32>
    %752 = arith.addf %738, %751 : vector<20x50xf32>
    %c71_395 = arith.constant 71 : index
    %753 = memref.load %arg3[%c71_395] : memref<81xf32, #tpu.memory_space<smem>>
    %754 = vector.broadcast %753 : f32 to vector<20x50xf32>
    %755 = arith.mulf %744, %754 : vector<20x50xf32>
    %756 = arith.addf %742, %755 : vector<20x50xf32>
    %c2_396 = arith.constant 2 : index
    %c0_397 = arith.constant 0 : index
    %c0_398 = arith.constant 0 : index
    %c0_399 = arith.constant 0 : index
    %757 = vector.load %arg8[%c2_396, %c0_397, %c0_398, %c0_399] : memref<3x3x22x50xf32, #tpu.memory_space<vmem>>, vector<1x1x20x50xf32>
    %758 = vector.shape_cast %757 : vector<1x1x20x50xf32> to vector<20x50xf32>
    %c18_400 = arith.constant 18 : index
    %759 = memref.load %arg3[%c18_400] : memref<81xf32, #tpu.memory_space<smem>>
    %760 = vector.broadcast %759 : f32 to vector<20x50xf32>
    %761 = arith.mulf %758, %760 : vector<20x50xf32>
    %762 = arith.addf %748, %761 : vector<20x50xf32>
    %c45_401 = arith.constant 45 : index
    %763 = memref.load %arg3[%c45_401] : memref<81xf32, #tpu.memory_space<smem>>
    %764 = vector.broadcast %763 : f32 to vector<20x50xf32>
    %765 = arith.mulf %758, %764 : vector<20x50xf32>
    %766 = arith.addf %752, %765 : vector<20x50xf32>
    %c72_402 = arith.constant 72 : index
    %767 = memref.load %arg3[%c72_402] : memref<81xf32, #tpu.memory_space<smem>>
    %768 = vector.broadcast %767 : f32 to vector<20x50xf32>
    %769 = arith.mulf %758, %768 : vector<20x50xf32>
    %770 = arith.addf %756, %769 : vector<20x50xf32>
    %c2_403 = arith.constant 2 : index
    %c0_404 = arith.constant 0 : index
    %c1_405 = arith.constant 1 : index
    %c0_406 = arith.constant 0 : index
    %771 = vector.load %arg8[%c2_403, %c0_404, %c1_405, %c0_406] : memref<3x3x22x50xf32, #tpu.memory_space<vmem>>, vector<1x1x20x50xf32>
    %772 = vector.shape_cast %771 : vector<1x1x20x50xf32> to vector<20x50xf32>
    %c21_407 = arith.constant 21 : index
    %773 = memref.load %arg3[%c21_407] : memref<81xf32, #tpu.memory_space<smem>>
    %774 = vector.broadcast %773 : f32 to vector<20x50xf32>
    %775 = arith.mulf %772, %774 : vector<20x50xf32>
    %776 = arith.addf %762, %775 : vector<20x50xf32>
    %c48_408 = arith.constant 48 : index
    %777 = memref.load %arg3[%c48_408] : memref<81xf32, #tpu.memory_space<smem>>
    %778 = vector.broadcast %777 : f32 to vector<20x50xf32>
    %779 = arith.mulf %772, %778 : vector<20x50xf32>
    %780 = arith.addf %766, %779 : vector<20x50xf32>
    %c75_409 = arith.constant 75 : index
    %781 = memref.load %arg3[%c75_409] : memref<81xf32, #tpu.memory_space<smem>>
    %782 = vector.broadcast %781 : f32 to vector<20x50xf32>
    %783 = arith.mulf %772, %782 : vector<20x50xf32>
    %784 = arith.addf %770, %783 : vector<20x50xf32>
    %c2_410 = arith.constant 2 : index
    %c0_411 = arith.constant 0 : index
    %c2_412 = arith.constant 2 : index
    %c0_413 = arith.constant 0 : index
    %785 = vector.load %arg8[%c2_410, %c0_411, %c2_412, %c0_413] : memref<3x3x22x50xf32, #tpu.memory_space<vmem>>, vector<1x1x20x50xf32>
    %786 = vector.shape_cast %785 : vector<1x1x20x50xf32> to vector<20x50xf32>
    %c24_414 = arith.constant 24 : index
    %787 = memref.load %arg3[%c24_414] : memref<81xf32, #tpu.memory_space<smem>>
    %788 = vector.broadcast %787 : f32 to vector<20x50xf32>
    %789 = arith.mulf %786, %788 : vector<20x50xf32>
    %790 = arith.addf %776, %789 : vector<20x50xf32>
    %c51_415 = arith.constant 51 : index
    %791 = memref.load %arg3[%c51_415] : memref<81xf32, #tpu.memory_space<smem>>
    %792 = vector.broadcast %791 : f32 to vector<20x50xf32>
    %793 = arith.mulf %786, %792 : vector<20x50xf32>
    %794 = arith.addf %780, %793 : vector<20x50xf32>
    %c78_416 = arith.constant 78 : index
    %795 = memref.load %arg3[%c78_416] : memref<81xf32, #tpu.memory_space<smem>>
    %796 = vector.broadcast %795 : f32 to vector<20x50xf32>
    %797 = arith.mulf %786, %796 : vector<20x50xf32>
    %798 = arith.addf %784, %797 : vector<20x50xf32>
    %c2_417 = arith.constant 2 : index
    %c1_418 = arith.constant 1 : index
    %c0_419 = arith.constant 0 : index
    %c0_420 = arith.constant 0 : index
    %799 = vector.load %arg8[%c2_417, %c1_418, %c0_419, %c0_420] : memref<3x3x22x50xf32, #tpu.memory_space<vmem>>, vector<1x1x20x50xf32>
    %800 = vector.shape_cast %799 : vector<1x1x20x50xf32> to vector<20x50xf32>
    %c19_421 = arith.constant 19 : index
    %801 = memref.load %arg3[%c19_421] : memref<81xf32, #tpu.memory_space<smem>>
    %802 = vector.broadcast %801 : f32 to vector<20x50xf32>
    %803 = arith.mulf %800, %802 : vector<20x50xf32>
    %804 = arith.addf %790, %803 : vector<20x50xf32>
    %c46_422 = arith.constant 46 : index
    %805 = memref.load %arg3[%c46_422] : memref<81xf32, #tpu.memory_space<smem>>
    %806 = vector.broadcast %805 : f32 to vector<20x50xf32>
    %807 = arith.mulf %800, %806 : vector<20x50xf32>
    %808 = arith.addf %794, %807 : vector<20x50xf32>
    %c73_423 = arith.constant 73 : index
    %809 = memref.load %arg3[%c73_423] : memref<81xf32, #tpu.memory_space<smem>>
    %810 = vector.broadcast %809 : f32 to vector<20x50xf32>
    %811 = arith.mulf %800, %810 : vector<20x50xf32>
    %812 = arith.addf %798, %811 : vector<20x50xf32>
    %c2_424 = arith.constant 2 : index
    %c1_425 = arith.constant 1 : index
    %c1_426 = arith.constant 1 : index
    %c0_427 = arith.constant 0 : index
    %813 = vector.load %arg8[%c2_424, %c1_425, %c1_426, %c0_427] : memref<3x3x22x50xf32, #tpu.memory_space<vmem>>, vector<1x1x20x50xf32>
    %814 = vector.shape_cast %813 : vector<1x1x20x50xf32> to vector<20x50xf32>
    %c22_428 = arith.constant 22 : index
    %815 = memref.load %arg3[%c22_428] : memref<81xf32, #tpu.memory_space<smem>>
    %816 = vector.broadcast %815 : f32 to vector<20x50xf32>
    %817 = arith.mulf %814, %816 : vector<20x50xf32>
    %818 = arith.addf %804, %817 : vector<20x50xf32>
    %c49_429 = arith.constant 49 : index
    %819 = memref.load %arg3[%c49_429] : memref<81xf32, #tpu.memory_space<smem>>
    %820 = vector.broadcast %819 : f32 to vector<20x50xf32>
    %821 = arith.mulf %814, %820 : vector<20x50xf32>
    %822 = arith.addf %808, %821 : vector<20x50xf32>
    %c76_430 = arith.constant 76 : index
    %823 = memref.load %arg3[%c76_430] : memref<81xf32, #tpu.memory_space<smem>>
    %824 = vector.broadcast %823 : f32 to vector<20x50xf32>
    %825 = arith.mulf %814, %824 : vector<20x50xf32>
    %826 = arith.addf %812, %825 : vector<20x50xf32>
    %c2_431 = arith.constant 2 : index
    %c1_432 = arith.constant 1 : index
    %c2_433 = arith.constant 2 : index
    %c0_434 = arith.constant 0 : index
    %827 = vector.load %arg8[%c2_431, %c1_432, %c2_433, %c0_434] : memref<3x3x22x50xf32, #tpu.memory_space<vmem>>, vector<1x1x20x50xf32>
    %828 = vector.shape_cast %827 : vector<1x1x20x50xf32> to vector<20x50xf32>
    %c25_435 = arith.constant 25 : index
    %829 = memref.load %arg3[%c25_435] : memref<81xf32, #tpu.memory_space<smem>>
    %830 = vector.broadcast %829 : f32 to vector<20x50xf32>
    %831 = arith.mulf %828, %830 : vector<20x50xf32>
    %832 = arith.addf %818, %831 : vector<20x50xf32>
    %c52_436 = arith.constant 52 : index
    %833 = memref.load %arg3[%c52_436] : memref<81xf32, #tpu.memory_space<smem>>
    %834 = vector.broadcast %833 : f32 to vector<20x50xf32>
    %835 = arith.mulf %828, %834 : vector<20x50xf32>
    %836 = arith.addf %822, %835 : vector<20x50xf32>
    %c79_437 = arith.constant 79 : index
    %837 = memref.load %arg3[%c79_437] : memref<81xf32, #tpu.memory_space<smem>>
    %838 = vector.broadcast %837 : f32 to vector<20x50xf32>
    %839 = arith.mulf %828, %838 : vector<20x50xf32>
    %840 = arith.addf %826, %839 : vector<20x50xf32>
    %c2_438 = arith.constant 2 : index
    %c2_439 = arith.constant 2 : index
    %c0_440 = arith.constant 0 : index
    %c0_441 = arith.constant 0 : index
    %841 = vector.load %arg8[%c2_438, %c2_439, %c0_440, %c0_441] : memref<3x3x22x50xf32, #tpu.memory_space<vmem>>, vector<1x1x20x50xf32>
    %842 = vector.shape_cast %841 : vector<1x1x20x50xf32> to vector<20x50xf32>
    %c20_442 = arith.constant 20 : index
    %843 = memref.load %arg3[%c20_442] : memref<81xf32, #tpu.memory_space<smem>>
    %844 = vector.broadcast %843 : f32 to vector<20x50xf32>
    %845 = arith.mulf %842, %844 : vector<20x50xf32>
    %846 = arith.addf %832, %845 : vector<20x50xf32>
    %c47_443 = arith.constant 47 : index
    %847 = memref.load %arg3[%c47_443] : memref<81xf32, #tpu.memory_space<smem>>
    %848 = vector.broadcast %847 : f32 to vector<20x50xf32>
    %849 = arith.mulf %842, %848 : vector<20x50xf32>
    %850 = arith.addf %836, %849 : vector<20x50xf32>
    %c74_444 = arith.constant 74 : index
    %851 = memref.load %arg3[%c74_444] : memref<81xf32, #tpu.memory_space<smem>>
    %852 = vector.broadcast %851 : f32 to vector<20x50xf32>
    %853 = arith.mulf %842, %852 : vector<20x50xf32>
    %854 = arith.addf %840, %853 : vector<20x50xf32>
    %c2_445 = arith.constant 2 : index
    %c2_446 = arith.constant 2 : index
    %c1_447 = arith.constant 1 : index
    %c0_448 = arith.constant 0 : index
    %855 = vector.load %arg8[%c2_445, %c2_446, %c1_447, %c0_448] : memref<3x3x22x50xf32, #tpu.memory_space<vmem>>, vector<1x1x20x50xf32>
    %856 = vector.shape_cast %855 : vector<1x1x20x50xf32> to vector<20x50xf32>
    %c23_449 = arith.constant 23 : index
    %857 = memref.load %arg3[%c23_449] : memref<81xf32, #tpu.memory_space<smem>>
    %858 = vector.broadcast %857 : f32 to vector<20x50xf32>
    %859 = arith.mulf %856, %858 : vector<20x50xf32>
    %860 = arith.addf %846, %859 : vector<20x50xf32>
    %c50_450 = arith.constant 50 : index
    %861 = memref.load %arg3[%c50_450] : memref<81xf32, #tpu.memory_space<smem>>
    %862 = vector.broadcast %861 : f32 to vector<20x50xf32>
    %863 = arith.mulf %856, %862 : vector<20x50xf32>
    %864 = arith.addf %850, %863 : vector<20x50xf32>
    %c77_451 = arith.constant 77 : index
    %865 = memref.load %arg3[%c77_451] : memref<81xf32, #tpu.memory_space<smem>>
    %866 = vector.broadcast %865 : f32 to vector<20x50xf32>
    %867 = arith.mulf %856, %866 : vector<20x50xf32>
    %868 = arith.addf %854, %867 : vector<20x50xf32>
    %c2_452 = arith.constant 2 : index
    %c2_453 = arith.constant 2 : index
    %c2_454 = arith.constant 2 : index
    %c0_455 = arith.constant 0 : index
    %869 = vector.load %arg8[%c2_452, %c2_453, %c2_454, %c0_455] : memref<3x3x22x50xf32, #tpu.memory_space<vmem>>, vector<1x1x20x50xf32>
    %870 = vector.shape_cast %869 : vector<1x1x20x50xf32> to vector<20x50xf32>
    %c26_456 = arith.constant 26 : index
    %871 = memref.load %arg3[%c26_456] : memref<81xf32, #tpu.memory_space<smem>>
    %872 = vector.broadcast %871 : f32 to vector<20x50xf32>
    %873 = arith.mulf %870, %872 : vector<20x50xf32>
    %874 = arith.addf %860, %873 : vector<20x50xf32>
    %c53_457 = arith.constant 53 : index
    %875 = memref.load %arg3[%c53_457] : memref<81xf32, #tpu.memory_space<smem>>
    %876 = vector.broadcast %875 : f32 to vector<20x50xf32>
    %877 = arith.mulf %870, %876 : vector<20x50xf32>
    %878 = arith.addf %864, %877 : vector<20x50xf32>
    %c80_458 = arith.constant 80 : index
    %879 = memref.load %arg3[%c80_458] : memref<81xf32, #tpu.memory_space<smem>>
    %880 = vector.broadcast %879 : f32 to vector<20x50xf32>
    %881 = arith.mulf %870, %880 : vector<20x50xf32>
    %882 = arith.addf %868, %881 : vector<20x50xf32>
    %c0_459 = arith.constant 0 : index
    %c0_460 = arith.constant 0 : index
    %883 = vector.load %arg9[%c0_459, %c0_460] : memref<60x50xf32, #tpu.memory_space<vmem>>, vector<20x50xf32>
    tpu.vector_store %arg9[%c0_459, %c0_460], %874 {strides = array<i32>} : memref<60x50xf32, #tpu.memory_space<vmem>>, vector<20x50xf32>,
    %c20_461 = arith.constant 20 : index
    %c0_462 = arith.constant 0 : index
    %884 = vector.load %arg9[%c20_461, %c0_462] : memref<60x50xf32, #tpu.memory_space<vmem>>, vector<20x50xf32>
    tpu.vector_store %arg9[%c20_461, %c0_462], %878 {strides = array<i32>} : memref<60x50xf32, #tpu.memory_space<vmem>>, vector<20x50xf32>,
    %c40_463 = arith.constant 40 : index
    %c0_464 = arith.constant 0 : index
    %885 = vector.load %arg9[%c40_463, %c0_464] : memref<60x50xf32, #tpu.memory_space<vmem>>, vector<20x50xf32>
    tpu.vector_store %arg9[%c40_463, %c0_464], %882 {strides = array<i32>} : memref<60x50xf32, #tpu.memory_space<vmem>>, vector<20x50xf32>,
    %886 = tpu.iota {dimensions = array<i32: 0>} : vector<50x3xi32>
    %887 = tpu.iota {dimensions = array<i32: 1>} : vector<50x3xi32>
    %cst_465 = arith.constant 0.000000e+00 : f32
    %888 = vector.broadcast %cst_465 : f32 to vector<50x3xf32>
    %c0_i32 = arith.constant 0 : i32
    %889 = vector.broadcast %c0_i32 : i32 to vector<50x3xi32>
    %890 = arith.cmpi eq, %887, %889 : vector<50x3xi32>
    %c0_i32_466 = arith.constant 0 : i32
    %891 = vector.broadcast %c0_i32_466 : i32 to vector<50x3xi32>
    %892 = arith.cmpi sge, %886, %891 : vector<50x3xi32>
    %893 = arith.andi %890, %892 : vector<50x3xi1>
    %c17_i32 = arith.constant 17 : i32
    %894 = vector.broadcast %c17_i32 : i32 to vector<50x3xi32>
    %895 = arith.cmpi slt, %886, %894 : vector<50x3xi32>
    %896 = arith.andi %893, %895 : vector<50x3xi1>
    %cst_467 = arith.constant 0.0588235296 : f32
    %cst_468 = arith.constant 0.000000e+00 : f32
    %897 = vector.broadcast %cst_467 : f32 to vector<50x3xf32>
    %898 = vector.broadcast %cst_468 : f32 to vector<50x3xf32>
    %899 = arith.select %896, %897, %898 : vector<50x3xi1>, vector<50x3xf32>
    %900 = arith.addf %888, %899 : vector<50x3xf32>
    %c1_i32 = arith.constant 1 : i32
    %901 = vector.broadcast %c1_i32 : i32 to vector<50x3xi32>
    %902 = arith.cmpi eq, %887, %901 : vector<50x3xi32>
    %c16_i32 = arith.constant 16 : i32
    %903 = vector.broadcast %c16_i32 : i32 to vector<50x3xi32>
    %904 = arith.cmpi sge, %886, %903 : vector<50x3xi32>
    %905 = arith.andi %902, %904 : vector<50x3xi1>
    %c34_i32 = arith.constant 34 : i32
    %906 = vector.broadcast %c34_i32 : i32 to vector<50x3xi32>
    %907 = arith.cmpi slt, %886, %906 : vector<50x3xi32>
    %908 = arith.andi %905, %907 : vector<50x3xi1>
    %cst_469 = arith.constant 0.055555556 : f32
    %cst_470 = arith.constant 0.000000e+00 : f32
    %909 = vector.broadcast %cst_469 : f32 to vector<50x3xf32>
    %910 = vector.broadcast %cst_470 : f32 to vector<50x3xf32>
    %911 = arith.select %908, %909, %910 : vector<50x3xi1>, vector<50x3xf32>
    %912 = arith.addf %900, %911 : vector<50x3xf32>
    %c2_i32 = arith.constant 2 : i32
    %913 = vector.broadcast %c2_i32 : i32 to vector<50x3xi32>
    %914 = arith.cmpi eq, %887, %913 : vector<50x3xi32>
    %c33_i32 = arith.constant 33 : i32
    %915 = vector.broadcast %c33_i32 : i32 to vector<50x3xi32>
    %916 = arith.cmpi sge, %886, %915 : vector<50x3xi32>
    %917 = arith.andi %914, %916 : vector<50x3xi1>
    %c50_i32 = arith.constant 50 : i32
    %918 = vector.broadcast %c50_i32 : i32 to vector<50x3xi32>
    %919 = arith.cmpi slt, %886, %918 : vector<50x3xi32>
    %920 = arith.andi %917, %919 : vector<50x3xi1>
    %cst_471 = arith.constant 0.0588235296 : f32
    %cst_472 = arith.constant 0.000000e+00 : f32
    %921 = vector.broadcast %cst_471 : f32 to vector<50x3xf32>
    %922 = vector.broadcast %cst_472 : f32 to vector<50x3xf32>
    %923 = arith.select %920, %921, %922 : vector<50x3xi1>, vector<50x3xf32>
    %924 = arith.addf %912, %923 : vector<50x3xf32>
    %925 = tpu.iota {dimensions = array<i32: 0>} : vector<9x60xi32>
    %926 = tpu.iota {dimensions = array<i32: 1>} : vector<9x60xi32>
    %cst_473 = arith.constant 0.000000e+00 : f32
    %927 = vector.broadcast %cst_473 : f32 to vector<9x60xf32>
    %c0_i32_474 = arith.constant 0 : i32
    %928 = vector.broadcast %c0_i32_474 : i32 to vector<9x60xi32>
    %929 = arith.cmpi eq, %925, %928 : vector<9x60xi32>
    %c0_i32_475 = arith.constant 0 : i32
    %930 = vector.broadcast %c0_i32_475 : i32 to vector<9x60xi32>
    %931 = arith.cmpi sge, %926, %930 : vector<9x60xi32>
    %932 = arith.andi %929, %931 : vector<9x60xi1>
    %c7_i32 = arith.constant 7 : i32
    %933 = vector.broadcast %c7_i32 : i32 to vector<9x60xi32>
    %934 = arith.cmpi slt, %926, %933 : vector<9x60xi32>
    %935 = arith.andi %932, %934 : vector<9x60xi1>
    %cst_476 = arith.constant 0.142857149 : f32
    %cst_477 = arith.constant 0.000000e+00 : f32
    %936 = vector.broadcast %cst_476 : f32 to vector<9x60xf32>
    %937 = vector.broadcast %cst_477 : f32 to vector<9x60xf32>
    %938 = arith.select %935, %936, %937 : vector<9x60xi1>, vector<9x60xf32>
    %939 = arith.addf %927, %938 : vector<9x60xf32>
    %c1_i32_478 = arith.constant 1 : i32
    %940 = vector.broadcast %c1_i32_478 : i32 to vector<9x60xi32>
    %941 = arith.cmpi eq, %925, %940 : vector<9x60xi32>
    %c6_i32 = arith.constant 6 : i32
    %942 = vector.broadcast %c6_i32 : i32 to vector<9x60xi32>
    %943 = arith.cmpi sge, %926, %942 : vector<9x60xi32>
    %944 = arith.andi %941, %943 : vector<9x60xi1>
    %c14_i32 = arith.constant 14 : i32
    %945 = vector.broadcast %c14_i32 : i32 to vector<9x60xi32>
    %946 = arith.cmpi slt, %926, %945 : vector<9x60xi32>
    %947 = arith.andi %944, %946 : vector<9x60xi1>
    %cst_479 = arith.constant 1.250000e-01 : f32
    %cst_480 = arith.constant 0.000000e+00 : f32
    %948 = vector.broadcast %cst_479 : f32 to vector<9x60xf32>
    %949 = vector.broadcast %cst_480 : f32 to vector<9x60xf32>
    %950 = arith.select %947, %948, %949 : vector<9x60xi1>, vector<9x60xf32>
    %951 = arith.addf %939, %950 : vector<9x60xf32>
    %c2_i32_481 = arith.constant 2 : i32
    %952 = vector.broadcast %c2_i32_481 : i32 to vector<9x60xi32>
    %953 = arith.cmpi eq, %925, %952 : vector<9x60xi32>
    %c13_i32 = arith.constant 13 : i32
    %954 = vector.broadcast %c13_i32 : i32 to vector<9x60xi32>
    %955 = arith.cmpi sge, %926, %954 : vector<9x60xi32>
    %956 = arith.andi %953, %955 : vector<9x60xi1>
    %c20_i32 = arith.constant 20 : i32
    %957 = vector.broadcast %c20_i32 : i32 to vector<9x60xi32>
    %958 = arith.cmpi slt, %926, %957 : vector<9x60xi32>
    %959 = arith.andi %956, %958 : vector<9x60xi1>
    %cst_482 = arith.constant 0.142857149 : f32
    %cst_483 = arith.constant 0.000000e+00 : f32
    %960 = vector.broadcast %cst_482 : f32 to vector<9x60xf32>
    %961 = vector.broadcast %cst_483 : f32 to vector<9x60xf32>
    %962 = arith.select %959, %960, %961 : vector<9x60xi1>, vector<9x60xf32>
    %963 = arith.addf %951, %962 : vector<9x60xf32>
    %c3_i32 = arith.constant 3 : i32
    %964 = vector.broadcast %c3_i32 : i32 to vector<9x60xi32>
    %965 = arith.cmpi eq, %925, %964 : vector<9x60xi32>
    %c20_i32_484 = arith.constant 20 : i32
    %966 = vector.broadcast %c20_i32_484 : i32 to vector<9x60xi32>
    %967 = arith.cmpi sge, %926, %966 : vector<9x60xi32>
    %968 = arith.andi %965, %967 : vector<9x60xi1>
    %c27_i32 = arith.constant 27 : i32
    %969 = vector.broadcast %c27_i32 : i32 to vector<9x60xi32>
    %970 = arith.cmpi slt, %926, %969 : vector<9x60xi32>
    %971 = arith.andi %968, %970 : vector<9x60xi1>
    %cst_485 = arith.constant 0.142857149 : f32
    %cst_486 = arith.constant 0.000000e+00 : f32
    %972 = vector.broadcast %cst_485 : f32 to vector<9x60xf32>
    %973 = vector.broadcast %cst_486 : f32 to vector<9x60xf32>
    %974 = arith.select %971, %972, %973 : vector<9x60xi1>, vector<9x60xf32>
    %975 = arith.addf %963, %974 : vector<9x60xf32>
    %c4_i32 = arith.constant 4 : i32
    %976 = vector.broadcast %c4_i32 : i32 to vector<9x60xi32>
    %977 = arith.cmpi eq, %925, %976 : vector<9x60xi32>
    %c26_i32 = arith.constant 26 : i32
    %978 = vector.broadcast %c26_i32 : i32 to vector<9x60xi32>
    %979 = arith.cmpi sge, %926, %978 : vector<9x60xi32>
    %980 = arith.andi %977, %979 : vector<9x60xi1>
    %c34_i32_487 = arith.constant 34 : i32
    %981 = vector.broadcast %c34_i32_487 : i32 to vector<9x60xi32>
    %982 = arith.cmpi slt, %926, %981 : vector<9x60xi32>
    %983 = arith.andi %980, %982 : vector<9x60xi1>
    %cst_488 = arith.constant 1.250000e-01 : f32
    %cst_489 = arith.constant 0.000000e+00 : f32
    %984 = vector.broadcast %cst_488 : f32 to vector<9x60xf32>
    %985 = vector.broadcast %cst_489 : f32 to vector<9x60xf32>
    %986 = arith.select %983, %984, %985 : vector<9x60xi1>, vector<9x60xf32>
    %987 = arith.addf %975, %986 : vector<9x60xf32>
    %c5_i32 = arith.constant 5 : i32
    %988 = vector.broadcast %c5_i32 : i32 to vector<9x60xi32>
    %989 = arith.cmpi eq, %925, %988 : vector<9x60xi32>
    %c33_i32_490 = arith.constant 33 : i32
    %990 = vector.broadcast %c33_i32_490 : i32 to vector<9x60xi32>
    %991 = arith.cmpi sge, %926, %990 : vector<9x60xi32>
    %992 = arith.andi %989, %991 : vector<9x60xi1>
    %c40_i32 = arith.constant 40 : i32
    %993 = vector.broadcast %c40_i32 : i32 to vector<9x60xi32>
    %994 = arith.cmpi slt, %926, %993 : vector<9x60xi32>
    %995 = arith.andi %992, %994 : vector<9x60xi1>
    %cst_491 = arith.constant 0.142857149 : f32
    %cst_492 = arith.constant 0.000000e+00 : f32
    %996 = vector.broadcast %cst_491 : f32 to vector<9x60xf32>
    %997 = vector.broadcast %cst_492 : f32 to vector<9x60xf32>
    %998 = arith.select %995, %996, %997 : vector<9x60xi1>, vector<9x60xf32>
    %999 = arith.addf %987, %998 : vector<9x60xf32>
    %c6_i32_493 = arith.constant 6 : i32
    %1000 = vector.broadcast %c6_i32_493 : i32 to vector<9x60xi32>
    %1001 = arith.cmpi eq, %925, %1000 : vector<9x60xi32>
    %c40_i32_494 = arith.constant 40 : i32
    %1002 = vector.broadcast %c40_i32_494 : i32 to vector<9x60xi32>
    %1003 = arith.cmpi sge, %926, %1002 : vector<9x60xi32>
    %1004 = arith.andi %1001, %1003 : vector<9x60xi1>
    %c47_i32 = arith.constant 47 : i32
    %1005 = vector.broadcast %c47_i32 : i32 to vector<9x60xi32>
    %1006 = arith.cmpi slt, %926, %1005 : vector<9x60xi32>
    %1007 = arith.andi %1004, %1006 : vector<9x60xi1>
    %cst_495 = arith.constant 0.142857149 : f32
    %cst_496 = arith.constant 0.000000e+00 : f32
    %1008 = vector.broadcast %cst_495 : f32 to vector<9x60xf32>
    %1009 = vector.broadcast %cst_496 : f32 to vector<9x60xf32>
    %1010 = arith.select %1007, %1008, %1009 : vector<9x60xi1>, vector<9x60xf32>
    %1011 = arith.addf %999, %1010 : vector<9x60xf32>
    %c7_i32_497 = arith.constant 7 : i32
    %1012 = vector.broadcast %c7_i32_497 : i32 to vector<9x60xi32>
    %1013 = arith.cmpi eq, %925, %1012 : vector<9x60xi32>
    %c46_i32 = arith.constant 46 : i32
    %1014 = vector.broadcast %c46_i32 : i32 to vector<9x60xi32>
    %1015 = arith.cmpi sge, %926, %1014 : vector<9x60xi32>
    %1016 = arith.andi %1013, %1015 : vector<9x60xi1>
    %c54_i32 = arith.constant 54 : i32
    %1017 = vector.broadcast %c54_i32 : i32 to vector<9x60xi32>
    %1018 = arith.cmpi slt, %926, %1017 : vector<9x60xi32>
    %1019 = arith.andi %1016, %1018 : vector<9x60xi1>
    %cst_498 = arith.constant 1.250000e-01 : f32
    %cst_499 = arith.constant 0.000000e+00 : f32
    %1020 = vector.broadcast %cst_498 : f32 to vector<9x60xf32>
    %1021 = vector.broadcast %cst_499 : f32 to vector<9x60xf32>
    %1022 = arith.select %1019, %1020, %1021 : vector<9x60xi1>, vector<9x60xf32>
    %1023 = arith.addf %1011, %1022 : vector<9x60xf32>
    %c8_i32 = arith.constant 8 : i32
    %1024 = vector.broadcast %c8_i32 : i32 to vector<9x60xi32>
    %1025 = arith.cmpi eq, %925, %1024 : vector<9x60xi32>
    %c53_i32 = arith.constant 53 : i32
    %1026 = vector.broadcast %c53_i32 : i32 to vector<9x60xi32>
    %1027 = arith.cmpi sge, %926, %1026 : vector<9x60xi32>
    %1028 = arith.andi %1025, %1027 : vector<9x60xi1>
    %c60_i32 = arith.constant 60 : i32
    %1029 = vector.broadcast %c60_i32 : i32 to vector<9x60xi32>
    %1030 = arith.cmpi slt, %926, %1029 : vector<9x60xi32>
    %1031 = arith.andi %1028, %1030 : vector<9x60xi1>
    %cst_500 = arith.constant 0.142857149 : f32
    %cst_501 = arith.constant 0.000000e+00 : f32
    %1032 = vector.broadcast %cst_500 : f32 to vector<9x60xf32>
    %1033 = vector.broadcast %cst_501 : f32 to vector<9x60xf32>
    %1034 = arith.select %1031, %1032, %1033 : vector<9x60xi1>, vector<9x60xf32>
    %1035 = arith.addf %1023, %1034 : vector<9x60xf32>
    %c0_502 = arith.constant 0 : index
    %c0_503 = arith.constant 0 : index
    %1036 = vector.load %arg9[%c0_502, %c0_503] : memref<60x50xf32, #tpu.memory_space<vmem>>, vector<60x50xf32>
    %cst_504 = arith.constant dense<0.000000e+00> : vector<60x3xf32>
    %1037 = tpu.matmul %1036, %924, %cst_504 {dimension_numbers = #tpu.dot_dimension_numbers<[1], [0], [0], [1], [0, 0, 1, 1], [], []>, precision = #tpu.contract_precision<fp32>} : vector<60x50xf32>, vector<50x3xf32>, vector<60x3xf32> -> vector<60x3xf32>
    %cst_505 = arith.constant dense<0.000000e+00> : vector<9x3xf32>
    %1038 = tpu.matmul %1035, %1037, %cst_505 {dimension_numbers = #tpu.dot_dimension_numbers<[1], [0], [0], [1], [0, 0, 1, 1], [], []>, precision = #tpu.contract_precision<fp32>} : vector<9x60xf32>, vector<60x3xf32>, vector<9x3xf32> -> vector<9x3xf32>
    %cst_506 = arith.constant 0.000000e+00 : f32
    %1039 = vector.broadcast %cst_506 : f32 to vector<9x3xf32>
    %1040 = arith.subf %1039, %1038 : vector<9x3xf32>
    %1041 = math.exp %1040 : vector<9x3xf32>
    %cst_507 = arith.constant 1.000000e+00 : f32
    %1042 = vector.broadcast %cst_507 : f32 to vector<9x3xf32>
    %1043 = arith.addf %1042, %1041 : vector<9x3xf32>
    %cst_508 = arith.constant 1.000000e+00 : f32
    %1044 = vector.broadcast %cst_508 : f32 to vector<9x3xf32>
    %1045 = arith.divf %1044, %1043 : vector<9x3xf32>
    %c0_509 = arith.constant 0 : index
    %c0_510 = arith.constant 0 : index
    %1046 = vector.load %arg5[%c0_509, %c0_510] : memref<9x3xf32, #tpu.memory_space<vmem>>, vector<9x3xf32>
    tpu.vector_store %arg5[%c0_509, %c0_510], %1045 {strides = array<i32>} : memref<9x3xf32, #tpu.memory_space<vmem>>, vector<9x3xf32>,
    return
  }
}

</mosaic_0001>

<llo_original>
// kernel: model_forward.1
$region0: #{model_forward.1}
  #allocation0 [shape = 'u32[]', space=smem, size = 0x4, offset = 0x4, fixed_abs, tag = 'smem constant byte address 0x4 - core index']
  #allocation1 [shape = 'u32[144,128]{1,0:T(1,128)}', space=vmem, size = 0x12000, scoped, tag = 'internal scratch']
  #allocation2 [shape = 'f32[3,3,24,52]{3,2,1,0:T(8,128)}', space=vmem, size = 0x1b000, scoped, tag = 'scratch operand']
  #allocation3 [shape = 'f32[3,22,52]{2,1,0:T(8,128)}', space=vmem, size = 0x9000, scoped, tag = 'scratch operand']
  #allocation4 [shape = 'f32[3,3,22,50]{3,2,1,0:T(8,128)}', space=vmem, size = 0x1b000, scoped, tag = 'scratch operand']
  #allocation5 [shape = 'f32[60,50]{1,0:T(8,128)}', space=vmem, size = 0x8000, scoped, tag = 'scratch operand']
  %s0 = inlined_call_operand.vmem [shape: f32[1,3,20,50], index: 0, kind: input, shape index: {}]
  %s1 = inlined_call_operand.vmem [shape: f32[81], index: 1, kind: input, shape index: {}]
  %s2 = inlined_call_operand.vmem [shape: f32[3], index: 2, kind: input, shape index: {}]
  %s3 = inlined_call_operand.vmem [shape: f32[81], index: 3, kind: input, shape index: {}]
  %s4 = inlined_call_operand.vmem [shape: f32[3], index: 4, kind: input, shape index: {}]
  %s5 = inlined_call_operand.vmem [shape: f32[9,3], index: 5, kind: output, shape index: {}]
  %s6 = sld [smem:[#allocation0]]
  $region46: #{model_forward.1} parent=0
    _
  %s8 = ssub.s32 1, %s6
  %s9 = scalar_select 0, %s8, %s6
  $region1: #{model_forward.1} parent=0
    #allocation6 [shape = 'u8[512]{0}', space=smem, size = 0x200, scoped, tag = 'input window, operand 1, single buffered']
    #allocation7 [shape = 's32[1]{0}', space=sflag, size = 0x4, scoped, tag = 'scoped memory for model_forward.1']
    #allocation8 [shape = 'u8[512]{0}', space=smem, size = 0x200, scoped, tag = 'input window, operand 2, single buffered']
    #allocation9 [shape = 's32[1]{0}', space=sflag, size = 0x4, scoped, tag = 'scoped memory for model_forward.1']
    #allocation10 [shape = 'u8[512]{0}', space=smem, size = 0x200, scoped, tag = 'input window, operand 3, single buffered']
    #allocation11 [shape = 'u8[512]{0}', space=smem, size = 0x200, scoped, tag = 'input window, operand 4, single buffered']
    #allocation12 [shape = 's32[1]{0}', space=sflag, size = 0x4, scoped, tag = 'scoped memory for model_forward.1']
    %10 = vsyncpa [#allocation7], 0
    %11 = vsyncpa [#allocation9], 0
    %12 = vsyncpa [#allocation12], 0
    // Predicated region
    $region2: #{model_forward.1} parent=1 // pred_check
      _
    $region3: #{model_forward.1} parent=1 // pred_check_branch
      %14 = sbr.rel (0) target = $region5
    $region4: #{model_forward.1} parent=1 // pred_region
      _
    $region5: #{model_forward.1} parent=1 // pred_fallthru
      _
    // Predicated region
    $region6: #{model_forward.1} parent=1 // pred_check
      _
    $region7: #{model_forward.1} parent=1 // pred_check_branch
      %16 = sbr.rel (0) target = $region9
    $region8: #{model_forward.1} parent=1 // pred_region
      %s18 = ssub.s32 16, 16
      %19 = vsyncadd [#allocation7], %s18
      %s21 = sshll.u32 %s1, 4
      %s22 = int_to_ptr.vmem [resolvable:$true] %s21
      %24 = dma.vmem_to_smem %s22, 16, [#allocation6], [#allocation7]
    $region9: #{model_forward.1} parent=1 // pred_fallthru
      _
    // Predicated region
    $region10: #{model_forward.1} parent=1 // pred_check
      _
    $region11: #{model_forward.1} parent=1 // pred_check_branch
      %26 = sbr.rel (0) target = $region13
    $region12: #{model_forward.1} parent=1 // pred_region
      %s28 = ssub.s32 16, 16
      %29 = vsyncadd [#allocation9], %s28
      %s31 = sshll.u32 %s2, 4
      %s32 = int_to_ptr.vmem [resolvable:$true] %s31
      %34 = dma.vmem_to_smem %s32, 16, [#allocation8], [#allocation9]
    $region13: #{model_forward.1} parent=1 // pred_fallthru
      _
    // Predicated region
    $region14: #{model_forward.1} parent=1 // pred_check
      _
    $region15: #{model_forward.1} parent=1 // pred_check_branch
      %36 = sbr.rel (0) target = $region17
    $region16: #{model_forward.1} parent=1 // pred_region
      %s38 = ssub.s32 16, 16
      %39 = vsyncadd [#allocation9], %s38
      %s41 = sshll.u32 %s3, 4
      %s42 = int_to_ptr.vmem [resolvable:$true] %s41
      %44 = dma.vmem_to_smem %s42, 16, [#allocation10], [#allocation9]
    $region17: #{model_forward.1} parent=1 // pred_fallthru
      _
    // Predicated region
    $region18: #{model_forward.1} parent=1 // pred_check
      _
    $region19: #{model_forward.1} parent=1 // pred_check_branch
      %46 = sbr.rel (0) target = $region21
    $region20: #{model_forward.1} parent=1 // pred_region
      %s48 = ssub.s32 16, 16
      %49 = vsyncadd [#allocation12], %s48
      %s51 = sshll.u32 %s4, 4
      %s52 = int_to_ptr.vmem [resolvable:$true] %s51
      %54 = dma.vmem_to_smem %s52, 16, [#allocation11], [#allocation12]
    $region21: #{model_forward.1} parent=1 // pred_fallthru
      _
    // Predicated region
    $region22: #{model_forward.1} parent=1 // pred_check
      _
    $region23: #{model_forward.1} parent=1 // pred_check_branch
      %56 = sbr.rel (0) target = $region25
    $region24: #{model_forward.1} parent=1 // pred_region
      %57 = dma.done [#allocation7], 16
    $region25: #{model_forward.1} parent=1 // pred_fallthru
      _
    // Predicated region
    $region26: #{model_forward.1} parent=1 // pred_check
      _
    $region27: #{model_forward.1} parent=1 // pred_check_branch
      %59 = sbr.rel (0) target = $region29
    $region28: #{model_forward.1} parent=1 // pred_region
      %60 = dma.done [#allocation9], 16
    $region29: #{model_forward.1} parent=1 // pred_fallthru
      _
    // Predicated region
    $region30: #{model_forward.1} parent=1 // pred_check
      _
    $region31: #{model_forward.1} parent=1 // pred_check_branch
      %62 = sbr.rel (0) target = $region33
    $region32: #{model_forward.1} parent=1 // pred_region
      %63 = dma.done [#allocation9], 16
    $region33: #{model_forward.1} parent=1 // pred_fallthru
      _
    // Predicated region
    $region34: #{model_forward.1} parent=1 // pred_check
      _
    $region35: #{model_forward.1} parent=1 // pred_check_branch
      %65 = sbr.rel (0) target = $region37
    $region36: #{model_forward.1} parent=1 // pred_region
      %66 = dma.done [#allocation12], 16
    $region37: #{model_forward.1} parent=1 // pred_fallthru
      _
    %67 = sfence
    %v68 = vld [vmem:[%s0] sm:$0xff]
    %v69 = vld [vmem:[%s0 + $0x8] sm:$0xff]
    %v70 = vld [vmem:[%s0 + $0x10] sm:$0xf]
    %vm71 = vcmask 424960
    %72 = vst.msk [vmem:[#allocation2] sm:$0xff] %vm71, 0.0
    %73 = vst.msk [vmem:[#allocation2 + $0x8] sm:$0xff] %vm71, 0.0
    %74 = vst.msk [vmem:[#allocation2 + $0x10] sm:$0xff] %vm71, 0.0
    %78 = vrot.lane.b32.xlu0 %v68, 2
    %v79 = vpop.permute.xlu0 %78
    %80 = vrot.lane.b32.xlu0 %v69, 2
    %v81 = vpop.permute.xlu0 %80
    %82 = vrot.lane.b32.xlu0 %v70, 2
    %v83 = vpop.permute.xlu0 %82
    %vm87 = vcmask 424976
    %88 = vst.msk [vmem:[#allocation2 + $0x2] sm:$0xff] %vm87, %v79
    %89 = vst.msk [vmem:[#allocation2 + $0xa] sm:$0xff] %vm87, %v81
    %vm90 = vcmask 420880
    %91 = vst.msk [vmem:[#allocation2 + $0x12] sm:$0xf] %vm90, %v83
    %s92 = scalar_lea.vmem [#allocation2], 24
    %93 = vst.msk [vmem:[%s92] sm:$0xff] %vm71, 0.0
    %94 = vst.msk [vmem:[%s92 + $0x8] sm:$0xff] %vm71, 0.0
    %95 = vst.msk [vmem:[%s92 + $0x10] sm:$0xff] %vm71, 0.0
    %96 = vrot.lane.b32.xlu0 %v68, 1
    %v97 = vpop.permute.xlu0 %96
    %98 = vrot.lane.b32.xlu0 %v69, 1
    %v99 = vpop.permute.xlu0 %98
    %100 = vrot.lane.b32.xlu0 %v70, 1
    %v101 = vpop.permute.xlu0 %100
    %vm105 = vcmask 416776
    %106 = vst.msk [vmem:[%s92 + $0x2] sm:$0xff] %vm105, %v97
    %107 = vst.msk [vmem:[%s92 + $0xa] sm:$0xff] %vm105, %v99
    %vm108 = vcmask 412680
    %109 = vst.msk [vmem:[%s92 + $0x12] sm:$0xf] %vm108, %v101
    %s110 = scalar_lea.vmem [#allocation2], 48
    %111 = vst.msk [vmem:[%s110] sm:$0xff] %vm71, 0.0
    %112 = vst.msk [vmem:[%s110 + $0x8] sm:$0xff] %vm71, 0.0
    %113 = vst.msk [vmem:[%s110 + $0x10] sm:$0xff] %vm71, 0.0
    %vm114 = vcmask 408576
    %115 = vst.msk [vmem:[%s110 + $0x2] sm:$0xff] %vm114, %v68
    %116 = vst.msk [vmem:[%s110 + $0xa] sm:$0xff] %vm114, %v69
    %vm117 = vcmask 404480
    %118 = vst.msk [vmem:[%s110 + $0x12] sm:$0xf] %vm117, %v70
    %s119 = scalar_lea.vmem %s0, 24
    %v120 = vld [vmem:[%s119] sm:$0xff]
    %v121 = vld [vmem:[%s119 + $0x8] sm:$0xff]
    %v122 = vld [vmem:[%s119 + $0x10] sm:$0xf]
    %s123 = scalar_lea.vmem [#allocation2], 72
    %124 = vst.msk [vmem:[%s123] sm:$0xff] %vm71, 0.0
    %125 = vst.msk [vmem:[%s123 + $0x8] sm:$0xff] %vm71, 0.0
    %126 = vst.msk [vmem:[%s123 + $0x10] sm:$0xff] %vm71, 0.0
    %130 = vrot.lane.b32.xlu0 %v120, 2
    %v131 = vpop.permute.xlu0 %130
    %132 = vrot.lane.b32.xlu0 %v121, 2
    %v133 = vpop.permute.xlu0 %132
    %134 = vrot.lane.b32.xlu0 %v122, 2
    %v135 = vpop.permute.xlu0 %134
    %139 = vst.msk [vmem:[%s123 + $0x2] sm:$0xff] %vm87, %v131
    %140 = vst.msk [vmem:[%s123 + $0xa] sm:$0xff] %vm87, %v133
    %141 = vst.msk [vmem:[%s123 + $0x12] sm:$0xf] %vm90, %v135
    %s142 = scalar_lea.vmem [#allocation2], 96
    %143 = vst.msk [vmem:[%s142] sm:$0xff] %vm71, 0.0
    %144 = vst.msk [vmem:[%s142 + $0x8] sm:$0xff] %vm71, 0.0
    %145 = vst.msk [vmem:[%s142 + $0x10] sm:$0xff] %vm71, 0.0
    %146 = vrot.lane.b32.xlu0 %v120, 1
    %v147 = vpop.permute.xlu0 %146
    %148 = vrot.lane.b32.xlu0 %v121, 1
    %v149 = vpop.permute.xlu0 %148
    %150 = vrot.lane.b32.xlu0 %v122, 1
    %v151 = vpop.permute.xlu0 %150
    %155 = vst.msk [vmem:[%s142 + $0x2] sm:$0xff] %vm105, %v147
    %156 = vst.msk [vmem:[%s142 + $0xa] sm:$0xff] %vm105, %v149
    %157 = vst.msk [vmem:[%s142 + $0x12] sm:$0xf] %vm108, %v151
    %s158 = scalar_lea.vmem [#allocation2], 120
    %159 = vst.msk [vmem:[%s158] sm:$0xff] %vm71, 0.0
    %160 = vst.msk [vmem:[%s158 + $0x8] sm:$0xff] %vm71, 0.0
    %161 = vst.msk [vmem:[%s158 + $0x10] sm:$0xff] %vm71, 0.0
    %162 = vst.msk [vmem:[%s158 + $0x2] sm:$0xff] %vm114, %v120
    %163 = vst.msk [vmem:[%s158 + $0xa] sm:$0xff] %vm114, %v121
    %164 = vst.msk [vmem:[%s158 + $0x12] sm:$0xf] %vm117, %v122
    %s165 = scalar_lea.vmem %s0, 48
    %v166 = vld [vmem:[%s165] sm:$0xff]
    %v167 = vld [vmem:[%s165 + $0x8] sm:$0xff]
    %v168 = vld [vmem:[%s165 + $0x10] sm:$0xf]
    %s169 = scalar_lea.vmem [#allocation2], 144
    %170 = vst.msk [vmem:[%s169] sm:$0xff] %vm71, 0.0
    %171 = vst.msk [vmem:[%s169 + $0x8] sm:$0xff] %vm71, 0.0
    %172 = vst.msk [vmem:[%s169 + $0x10] sm:$0xff] %vm71, 0.0
    %176 = vrot.lane.b32.xlu0 %v166, 2
    %v177 = vpop.permute.xlu0 %176
    %178 = vrot.lane.b32.xlu0 %v167, 2
    %v179 = vpop.permute.xlu0 %178
    %180 = vrot.lane.b32.xlu0 %v168, 2
    %v181 = vpop.permute.xlu0 %180
    %185 = vst.msk [vmem:[%s169 + $0x2] sm:$0xff] %vm87, %v177
    %186 = vst.msk [vmem:[%s169 + $0xa] sm:$0xff] %vm87, %v179
    %187 = vst.msk [vmem:[%s169 + $0x12] sm:$0xf] %vm90, %v181
    %s188 = scalar_lea.vmem [#allocation2], 168
    %189 = vst.msk [vmem:[%s188] sm:$0xff] %vm71, 0.0
    %190 = vst.msk [vmem:[%s188 + $0x8] sm:$0xff] %vm71, 0.0
    %191 = vst.msk [vmem:[%s188 + $0x10] sm:$0xff] %vm71, 0.0
    %192 = vrot.lane.b32.xlu0 %v166, 1
    %v193 = vpop.permute.xlu0 %192
    %194 = vrot.lane.b32.xlu0 %v167, 1
    %v195 = vpop.permute.xlu0 %194
    %196 = vrot.lane.b32.xlu0 %v168, 1
    %v197 = vpop.permute.xlu0 %196
    %201 = vst.msk [vmem:[%s188 + $0x2] sm:$0xff] %vm105, %v193
    %202 = vst.msk [vmem:[%s188 + $0xa] sm:$0xff] %vm105, %v195
    %203 = vst.msk [vmem:[%s188 + $0x12] sm:$0xf] %vm108, %v197
    %s204 = scalar_lea.vmem [#allocation2], 192
    %205 = vst.msk [vmem:[%s204] sm:$0xff] %vm71, 0.0
    %206 = vst.msk [vmem:[%s204 + $0x8] sm:$0xff] %vm71, 0.0
    %207 = vst.msk [vmem:[%s204 + $0x10] sm:$0xff] %vm71, 0.0
    %208 = vst.msk [vmem:[%s204 + $0x2] sm:$0xff] %vm114, %v166
    %209 = vst.msk [vmem:[%s204 + $0xa] sm:$0xff] %vm114, %v167
    %210 = vst.msk [vmem:[%s204 + $0x12] sm:$0xf] %vm117, %v168
    %s211 = sld [smem:[#allocation8]]
    %v212 = vstv %s211
    %s213 = sld [smem:[#allocation8 + $0x1]]
    %v214 = vstv %s213
    %s215 = sld [smem:[#allocation8 + $0x2]]
    %v216 = vstv %s215
    %v217 = vld [vmem:[#allocation2] sm:$0xff]
    %v218 = vld [vmem:[#allocation2 + $0x8] sm:$0xff]
    %v219 = vld [vmem:[#allocation2 + $0x10] sm:$0x3f]
    %s220 = sld [smem:[#allocation6 + $0x8]]
    %v221 = vstv %s220
    %v222 = vmul.f32 %v217, %v221
    %v223 = vmul.f32 %v218, %v221
    %v224 = vmul.f32 %v219, %v221
    %v225 = vadd.f32 %v212, %v222
    %v226 = vadd.f32 %v212, %v223
    %v227 = vadd.f32 %v212, %v224
    %s228 = sld [smem:[#allocation6 + $0x11]]
    %v229 = vstv %s228
    %v230 = vmul.f32 %v217, %v229
    %v231 = vmul.f32 %v218, %v229
    %v232 = vmul.f32 %v219, %v229
    %v233 = vadd.f32 %v214, %v230
    %v234 = vadd.f32 %v214, %v231
    %v235 = vadd.f32 %v214, %v232
    %s236 = sld [smem:[#allocation6 + $0x1a]]
    %v237 = vstv %s236
    %v238 = vmul.f32 %v217, %v237
    %v239 = vmul.f32 %v218, %v237
    %v240 = vmul.f32 %v219, %v237
    %v241 = vadd.f32 %v216, %v238
    %v242 = vadd.f32 %v216, %v239
    %v243 = vadd.f32 %v216, %v240
    %v244 = vld [vmem:[#allocation2 + $0x1] sm:$0xff]
    %v245 = vld [vmem:[#allocation2 + $0x9] sm:$0xff]
    %v246 = vld [vmem:[#allocation2 + $0x11] sm:$0x3f]
    %s247 = sld [smem:[#allocation6 + $0x5]]
    %v248 = vstv %s247
    %v249 = vmul.f32 %v244, %v248
    %v250 = vmul.f32 %v245, %v248
    %v251 = vmul.f32 %v246, %v248
    %v252 = vadd.f32 %v225, %v249
    %v253 = vadd.f32 %v226, %v250
    %v254 = vadd.f32 %v227, %v251
    %s255 = sld [smem:[#allocation6 + $0xe]]
    %v256 = vstv %s255
    %v257 = vmul.f32 %v244, %v256
    %v258 = vmul.f32 %v245, %v256
    %v259 = vmul.f32 %v246, %v256
    %v260 = vadd.f32 %v233, %v257
    %v261 = vadd.f32 %v234, %v258
    %v262 = vadd.f32 %v235, %v259
    %s263 = sld [smem:[#allocation6 + $0x17]]
    %v264 = vstv %s263
    %v265 = vmul.f32 %v244, %v264
    %v266 = vmul.f32 %v245, %v264
    %v267 = vmul.f32 %v246, %v264
    %v268 = vadd.f32 %v241, %v265
    %v269 = vadd.f32 %v242, %v266
    %v270 = vadd.f32 %v243, %v267
    %v271 = vld [vmem:[#allocation2 + $0x2] sm:$0xff]
    %v272 = vld [vmem:[#allocation2 + $0xa] sm:$0xff]
    %v273 = vld [vmem:[#allocation2 + $0x12] sm:$0x3f]
    %s274 = sld [smem:[#allocation6 + $0x2]]
    %v275 = vstv %s274
    %v276 = vmul.f32 %v271, %v275
    %v277 = vmul.f32 %v272, %v275
    %v278 = vmul.f32 %v273, %v275
    %v279 = vadd.f32 %v252, %v276
    %v280 = vadd.f32 %v253, %v277
    %v281 = vadd.f32 %v254, %v278
    %s282 = sld [smem:[#allocation6 + $0xb]]
    %v283 = vstv %s282
    %v284 = vmul.f32 %v271, %v283
    %v285 = vmul.f32 %v272, %v283
    %v286 = vmul.f32 %v273, %v283
    %v287 = vadd.f32 %v260, %v284
    %v288 = vadd.f32 %v261, %v285
    %v289 = vadd.f32 %v262, %v286
    %s290 = sld [smem:[#allocation6 + $0x14]]
    %v291 = vstv %s290
    %v292 = vmul.f32 %v271, %v291
    %v293 = vmul.f32 %v272, %v291
    %v294 = vmul.f32 %v273, %v291
    %v295 = vadd.f32 %v268, %v292
    %v296 = vadd.f32 %v269, %v293
    %v297 = vadd.f32 %v270, %v294
    %v298 = vld [vmem:[%s92] sm:$0xff]
    %v299 = vld [vmem:[%s92 + $0x8] sm:$0xff]
    %v300 = vld [vmem:[%s92 + $0x10] sm:$0x3f]
    %s301 = sld [smem:[#allocation6 + $0x7]]
    %v302 = vstv %s301
    %v303 = vmul.f32 %v298, %v302
    %v304 = vmul.f32 %v299, %v302
    %v305 = vmul.f32 %v300, %v302
    %v306 = vadd.f32 %v279, %v303
    %v307 = vadd.f32 %v280, %v304
    %v308 = vadd.f32 %v281, %v305
    %s309 = sld [smem:[#allocation6 + $0x10]]
    %v310 = vstv %s309
    %v311 = vmul.f32 %v298, %v310
    %v312 = vmul.f32 %v299, %v310
    %v313 = vmul.f32 %v300, %v310
    %v314 = vadd.f32 %v287, %v311
    %v315 = vadd.f32 %v288, %v312
    %v316 = vadd.f32 %v289, %v313
    %s317 = sld [smem:[#allocation6 + $0x19]]
    %v318 = vstv %s317
    %v319 = vmul.f32 %v298, %v318
    %v320 = vmul.f32 %v299, %v318
    %v321 = vmul.f32 %v300, %v318
    %v322 = vadd.f32 %v295, %v319
    %v323 = vadd.f32 %v296, %v320
    %v324 = vadd.f32 %v297, %v321
    %v325 = vld [vmem:[%s92 + $0x1] sm:$0xff]
    %v326 = vld [vmem:[%s92 + $0x9] sm:$0xff]
    %v327 = vld [vmem:[%s92 + $0x11] sm:$0x3f]
    %s328 = sld [smem:[#allocation6 + $0x4]]
    %v329 = vstv %s328
    %v330 = vmul.f32 %v325, %v329
    %v331 = vmul.f32 %v326, %v329
    %v332 = vmul.f32 %v327, %v329
    %v333 = vadd.f32 %v306, %v330
    %v334 = vadd.f32 %v307, %v331
    %v335 = vadd.f32 %v308, %v332
    %s336 = sld [smem:[#allocation6 + $0xd]]
    %v337 = vstv %s336
    %v338 = vmul.f32 %v325, %v337
    %v339 = vmul.f32 %v326, %v337
    %v340 = vmul.f32 %v327, %v337
    %v341 = vadd.f32 %v314, %v338
    %v342 = vadd.f32 %v315, %v339
    %v343 = vadd.f32 %v316, %v340
    %s344 = sld [smem:[#allocation6 + $0x16]]
    %v345 = vstv %s344
    %v346 = vmul.f32 %v325, %v345
    %v347 = vmul.f32 %v326, %v345
    %v348 = vmul.f32 %v327, %v345
    %v349 = vadd.f32 %v322, %v346
    %v350 = vadd.f32 %v323, %v347
    %v351 = vadd.f32 %v324, %v348
    %v352 = vld [vmem:[%s92 + $0x2] sm:$0xff]
    %v353 = vld [vmem:[%s92 + $0xa] sm:$0xff]
    %v354 = vld [vmem:[%s92 + $0x12] sm:$0x3f]
    %s355 = sld [smem:[#allocation6 + $0x1]]
    %v356 = vstv %s355
    %v357 = vmul.f32 %v352, %v356
    %v358 = vmul.f32 %v353, %v356
    %v359 = vmul.f32 %v354, %v356
    %v360 = vadd.f32 %v333, %v357
    %v361 = vadd.f32 %v334, %v358
    %v362 = vadd.f32 %v335, %v359
    %s363 = sld [smem:[#allocation6 + $0xa]]
    %v364 = vstv %s363
    %v365 = vmul.f32 %v352, %v364
    %v366 = vmul.f32 %v353, %v364
    %v367 = vmul.f32 %v354, %v364
    %v368 = vadd.f32 %v341, %v365
    %v369 = vadd.f32 %v342, %v366
    %v370 = vadd.f32 %v343, %v367
    %s371 = sld [smem:[#allocation6 + $0x13]]
    %v372 = vstv %s371
    %v373 = vmul.f32 %v352, %v372
    %v374 = vmul.f32 %v353, %v372
    %v375 = vmul.f32 %v354, %v372
    %v376 = vadd.f32 %v349, %v373
    %v377 = vadd.f32 %v350, %v374
    %v378 = vadd.f32 %v351, %v375
    %v379 = vld [vmem:[%s110] sm:$0xff]
    %v380 = vld [vmem:[%s110 + $0x8] sm:$0xff]
    %v381 = vld [vmem:[%s110 + $0x10] sm:$0x3f]
    %s382 = sld [smem:[#allocation6 + $0x6]]
    %v383 = vstv %s382
    %v384 = vmul.f32 %v379, %v383
    %v385 = vmul.f32 %v380, %v383
    %v386 = vmul.f32 %v381, %v383
    %v387 = vadd.f32 %v360, %v384
    %v388 = vadd.f32 %v361, %v385
    %v389 = vadd.f32 %v362, %v386
    %s390 = sld [smem:[#allocation6 + $0xf]]
    %v391 = vstv %s390
    %v392 = vmul.f32 %v379, %v391
    %v393 = vmul.f32 %v380, %v391
    %v394 = vmul.f32 %v381, %v391
    %v395 = vadd.f32 %v368, %v392
    %v396 = vadd.f32 %v369, %v393
    %v397 = vadd.f32 %v370, %v394
    %s398 = sld [smem:[#allocation6 + $0x18]]
    %v399 = vstv %s398
    %v400 = vmul.f32 %v379, %v399
    %v401 = vmul.f32 %v380, %v399
    %v402 = vmul.f32 %v381, %v399
    %v403 = vadd.f32 %v376, %v400
    %v404 = vadd.f32 %v377, %v401
    %v405 = vadd.f32 %v378, %v402
    %v406 = vld [vmem:[%s110 + $0x1] sm:$0xff]
    %v407 = vld [vmem:[%s110 + $0x9] sm:$0xff]
    %v408 = vld [vmem:[%s110 + $0x11] sm:$0x3f]
    %s409 = sld [smem:[#allocation6 + $0x3]]
    %v410 = vstv %s409
    %v411 = vmul.f32 %v406, %v410
    %v412 = vmul.f32 %v407, %v410
    %v413 = vmul.f32 %v408, %v410
    %v414 = vadd.f32 %v387, %v411
    %v415 = vadd.f32 %v388, %v412
    %v416 = vadd.f32 %v389, %v413
    %s417 = sld [smem:[#allocation6 + $0xc]]
    %v418 = vstv %s417
    %v419 = vmul.f32 %v406, %v418
    %v420 = vmul.f32 %v407, %v418
    %v421 = vmul.f32 %v408, %v418
    %v422 = vadd.f32 %v395, %v419
    %v423 = vadd.f32 %v396, %v420
    %v424 = vadd.f32 %v397, %v421
    %s425 = sld [smem:[#allocation6 + $0x15]]
    %v426 = vstv %s425
    %v427 = vmul.f32 %v406, %v426
    %v428 = vmul.f32 %v407, %v426
    %v429 = vmul.f32 %v408, %v426
    %v430 = vadd.f32 %v403, %v427
    %v431 = vadd.f32 %v404, %v428
    %v432 = vadd.f32 %v405, %v429
    %v433 = vld [vmem:[%s110 + $0x2] sm:$0xff]
    %v434 = vld [vmem:[%s110 + $0xa] sm:$0xff]
    %v435 = vld [vmem:[%s110 + $0x12] sm:$0x3f]
    %s436 = sld [smem:[#allocation6]]
    %v437 = vstv %s436
    %v438 = vmul.f32 %v433, %v437
    %v439 = vmul.f32 %v434, %v437
    %v440 = vmul.f32 %v435, %v437
    %v441 = vadd.f32 %v414, %v438
    %v442 = vadd.f32 %v415, %v439
    %v443 = vadd.f32 %v416, %v440
    %s444 = sld [smem:[#allocation6 + $0x9]]
    %v445 = vstv %s444
    %v446 = vmul.f32 %v433, %v445
    %v447 = vmul.f32 %v434, %v445
    %v448 = vmul.f32 %v435, %v445
    %v449 = vadd.f32 %v422, %v446
    %v450 = vadd.f32 %v423, %v447
    %v451 = vadd.f32 %v424, %v448
    %s452 = sld [smem:[#allocation6 + $0x12]]
    %v453 = vstv %s452
    %v454 = vmul.f32 %v433, %v453
    %v455 = vmul.f32 %v434, %v453
    %v456 = vmul.f32 %v435, %v453
    %v457 = vadd.f32 %v430, %v454
    %v458 = vadd.f32 %v431, %v455
    %v459 = vadd.f32 %v432, %v456
    %v460 = vld [vmem:[%s123] sm:$0xff]
    %v461 = vld [vmem:[%s123 + $0x8] sm:$0xff]
    %v462 = vld [vmem:[%s123 + $0x10] sm:$0x3f]
    %s463 = sld [smem:[#allocation6 + $0x23]]
    %v464 = vstv %s463
    %v465 = vmul.f32 %v460, %v464
    %v466 = vmul.f32 %v461, %v464
    %v467 = vmul.f32 %v462, %v464
    %v468 = vadd.f32 %v441, %v465
    %v469 = vadd.f32 %v442, %v466
    %v470 = vadd.f32 %v443, %v467
    %s471 = sld [smem:[#allocation6 + $0x2c]]
    %v472 = vstv %s471
    %v473 = vmul.f32 %v460, %v472
    %v474 = vmul.f32 %v461, %v472
    %v475 = vmul.f32 %v462, %v472
    %v476 = vadd.f32 %v449, %v473
    %v477 = vadd.f32 %v450, %v474
    %v478 = vadd.f32 %v451, %v475
    %s479 = sld [smem:[#allocation6 + $0x35]]
    %v480 = vstv %s479
    %v481 = vmul.f32 %v460, %v480
    %v482 = vmul.f32 %v461, %v480
    %v483 = vmul.f32 %v462, %v480
    %v484 = vadd.f32 %v457, %v481
    %v485 = vadd.f32 %v458, %v482
    %v486 = vadd.f32 %v459, %v483
    %v487 = vld [vmem:[%s123 + $0x1] sm:$0xff]
    %v488 = vld [vmem:[%s123 + $0x9] sm:$0xff]
    %v489 = vld [vmem:[%s123 + $0x11] sm:$0x3f]
    %s490 = sld [smem:[#allocation6 + $0x20]]
    %v491 = vstv %s490
    %v492 = vmul.f32 %v487, %v491
    %v493 = vmul.f32 %v488, %v491
    %v494 = vmul.f32 %v489, %v491
    %v495 = vadd.f32 %v468, %v492
    %v496 = vadd.f32 %v469, %v493
    %v497 = vadd.f32 %v470, %v494
    %s498 = sld [smem:[#allocation6 + $0x29]]
    %v499 = vstv %s498
    %v500 = vmul.f32 %v487, %v499
    %v501 = vmul.f32 %v488, %v499
    %v502 = vmul.f32 %v489, %v499
    %v503 = vadd.f32 %v476, %v500
    %v504 = vadd.f32 %v477, %v501
    %v505 = vadd.f32 %v478, %v502
    %s506 = sld [smem:[#allocation6 + $0x32]]
    %v507 = vstv %s506
    %v508 = vmul.f32 %v487, %v507
    %v509 = vmul.f32 %v488, %v507
    %v510 = vmul.f32 %v489, %v507
    %v511 = vadd.f32 %v484, %v508
    %v512 = vadd.f32 %v485, %v509
    %v513 = vadd.f32 %v486, %v510
    %v514 = vld [vmem:[%s123 + $0x2] sm:$0xff]
    %v515 = vld [vmem:[%s123 + $0xa] sm:$0xff]
    %v516 = vld [vmem:[%s123 + $0x12] sm:$0x3f]
    %s517 = sld [smem:[#allocation6 + $0x1d]]
    %v518 = vstv %s517
    %v519 = vmul.f32 %v514, %v518
    %v520 = vmul.f32 %v515, %v518
    %v521 = vmul.f32 %v516, %v518
    %v522 = vadd.f32 %v495, %v519
    %v523 = vadd.f32 %v496, %v520
    %v524 = vadd.f32 %v497, %v521
    %s525 = sld [smem:[#allocation6 + $0x26]]
    %v526 = vstv %s525
    %v527 = vmul.f32 %v514, %v526
    %v528 = vmul.f32 %v515, %v526
    %v529 = vmul.f32 %v516, %v526
    %v530 = vadd.f32 %v503, %v527
    %v531 = vadd.f32 %v504, %v528
    %v532 = vadd.f32 %v505, %v529
    %s533 = sld [smem:[#allocation6 + $0x2f]]
    %v534 = vstv %s533
    %v535 = vmul.f32 %v514, %v534
    %v536 = vmul.f32 %v515, %v534
    %v537 = vmul.f32 %v516, %v534
    %v538 = vadd.f32 %v511, %v535
    %v539 = vadd.f32 %v512, %v536
    %v540 = vadd.f32 %v513, %v537
    %v541 = vld [vmem:[%s142] sm:$0xff]
    %v542 = vld [vmem:[%s142 + $0x8] sm:$0xff]
    %v543 = vld [vmem:[%s142 + $0x10] sm:$0x3f]
    %s544 = sld [smem:[#allocation6 + $0x22]]
    %v545 = vstv %s544
    %v546 = vmul.f32 %v541, %v545
    %v547 = vmul.f32 %v542, %v545
    %v548 = vmul.f32 %v543, %v545
    %v549 = vadd.f32 %v522, %v546
    %v550 = vadd.f32 %v523, %v547
    %v551 = vadd.f32 %v524, %v548
    %s552 = sld [smem:[#allocation6 + $0x2b]]
    %v553 = vstv %s552
    %v554 = vmul.f32 %v541, %v553
    %v555 = vmul.f32 %v542, %v553
    %v556 = vmul.f32 %v543, %v553
    %v557 = vadd.f32 %v530, %v554
    %v558 = vadd.f32 %v531, %v555
    %v559 = vadd.f32 %v532, %v556
    %s560 = sld [smem:[#allocation6 + $0x34]]
    %v561 = vstv %s560
    %v562 = vmul.f32 %v541, %v561
    %v563 = vmul.f32 %v542, %v561
    %v564 = vmul.f32 %v543, %v561
    %v565 = vadd.f32 %v538, %v562
    %v566 = vadd.f32 %v539, %v563
    %v567 = vadd.f32 %v540, %v564
    %v568 = vld [vmem:[%s142 + $0x1] sm:$0xff]
    %v569 = vld [vmem:[%s142 + $0x9] sm:$0xff]
    %v570 = vld [vmem:[%s142 + $0x11] sm:$0x3f]
    %s571 = sld [smem:[#allocation6 + $0x1f]]
    %v572 = vstv %s571
    %v573 = vmul.f32 %v568, %v572
    %v574 = vmul.f32 %v569, %v572
    %v575 = vmul.f32 %v570, %v572
    %v576 = vadd.f32 %v549, %v573
    %v577 = vadd.f32 %v550, %v574
    %v578 = vadd.f32 %v551, %v575
    %s579 = sld [smem:[#allocation6 + $0x28]]
    %v580 = vstv %s579
    %v581 = vmul.f32 %v568, %v580
    %v582 = vmul.f32 %v569, %v580
    %v583 = vmul.f32 %v570, %v580
    %v584 = vadd.f32 %v557, %v581
    %v585 = vadd.f32 %v558, %v582
    %v586 = vadd.f32 %v559, %v583
    %s587 = sld [smem:[#allocation6 + $0x31]]
    %v588 = vstv %s587
    %v589 = vmul.f32 %v568, %v588
    %v590 = vmul.f32 %v569, %v588
    %v591 = vmul.f32 %v570, %v588
    %v592 = vadd.f32 %v565, %v589
    %v593 = vadd.f32 %v566, %v590
    %v594 = vadd.f32 %v567, %v591
    %v595 = vld [vmem:[%s142 + $0x2] sm:$0xff]
    %v596 = vld [vmem:[%s142 + $0xa] sm:$0xff]
    %v597 = vld [vmem:[%s142 + $0x12] sm:$0x3f]
    %s598 = sld [smem:[#allocation6 + $0x1c]]
    %v599 = vstv %s598
    %v600 = vmul.f32 %v595, %v599
    %v601 = vmul.f32 %v596, %v599
    %v602 = vmul.f32 %v597, %v599
    %v603 = vadd.f32 %v576, %v600
    %v604 = vadd.f32 %v577, %v601
    %v605 = vadd.f32 %v578, %v602
    %s606 = sld [smem:[#allocation6 + $0x25]]
    %v607 = vstv %s606
    %v608 = vmul.f32 %v595, %v607
    %v609 = vmul.f32 %v596, %v607
    %v610 = vmul.f32 %v597, %v607
    %v611 = vadd.f32 %v584, %v608
    %v612 = vadd.f32 %v585, %v609
    %v613 = vadd.f32 %v586, %v610
    %s614 = sld [smem:[#allocation6 + $0x2e]]
    %v615 = vstv %s614
    %v616 = vmul.f32 %v595, %v615
    %v617 = vmul.f32 %v596, %v615
    %v618 = vmul.f32 %v597, %v615
    %v619 = vadd.f32 %v592, %v616
    %v620 = vadd.f32 %v593, %v617
    %v621 = vadd.f32 %v594, %v618
    %v622 = vld [vmem:[%s158] sm:$0xff]
    %v623 = vld [vmem:[%s158 + $0x8] sm:$0xff]
    %v624 = vld [vmem:[%s158 + $0x10] sm:$0x3f]
    %s625 = sld [smem:[#allocation6 + $0x21]]
    %v626 = vstv %s625
    %v627 = vmul.f32 %v622, %v626
    %v628 = vmul.f32 %v623, %v626
    %v629 = vmul.f32 %v624, %v626
    %v630 = vadd.f32 %v603, %v627
    %v631 = vadd.f32 %v604, %v628
    %v632 = vadd.f32 %v605, %v629
    %s633 = sld [smem:[#allocation6 + $0x2a]]
    %v634 = vstv %s633
    %v635 = vmul.f32 %v622, %v634
    %v636 = vmul.f32 %v623, %v634
    %v637 = vmul.f32 %v624, %v634
    %v638 = vadd.f32 %v611, %v635
    %v639 = vadd.f32 %v612, %v636
    %v640 = vadd.f32 %v613, %v637
    %s641 = sld [smem:[#allocation6 + $0x33]]
    %v642 = vstv %s641
    %v643 = vmul.f32 %v622, %v642
    %v644 = vmul.f32 %v623, %v642
    %v645 = vmul.f32 %v624, %v642
    %v646 = vadd.f32 %v619, %v643
    %v647 = vadd.f32 %v620, %v644
    %v648 = vadd.f32 %v621, %v645
    %v649 = vld [vmem:[%s158 + $0x1] sm:$0xff]
    %v650 = vld [vmem:[%s158 + $0x9] sm:$0xff]
    %v651 = vld [vmem:[%s158 + $0x11] sm:$0x3f]
    %s652 = sld [smem:[#allocation6 + $0x1e]]
    %v653 = vstv %s652
    %v654 = vmul.f32 %v649, %v653
    %v655 = vmul.f32 %v650, %v653
    %v656 = vmul.f32 %v651, %v653
    %v657 = vadd.f32 %v630, %v654
    %v658 = vadd.f32 %v631, %v655
    %v659 = vadd.f32 %v632, %v656
    %s660 = sld [smem:[#allocation6 + $0x27]]
    %v661 = vstv %s660
    %v662 = vmul.f32 %v649, %v661
    %v663 = vmul.f32 %v650, %v661
    %v664 = vmul.f32 %v651, %v661
    %v665 = vadd.f32 %v638, %v662
    %v666 = vadd.f32 %v639, %v663
    %v667 = vadd.f32 %v640, %v664
    %s668 = sld [smem:[#allocation6 + $0x30]]
    %v669 = vstv %s668
    %v670 = vmul.f32 %v649, %v669
    %v671 = vmul.f32 %v650, %v669
    %v672 = vmul.f32 %v651, %v669
    %v673 = vadd.f32 %v646, %v670
    %v674 = vadd.f32 %v647, %v671
    %v675 = vadd.f32 %v648, %v672
    %v676 = vld [vmem:[%s158 + $0x2] sm:$0xff]
    %v677 = vld [vmem:[%s158 + $0xa] sm:$0xff]
    %v678 = vld [vmem:[%s158 + $0x12] sm:$0x3f]
    %s679 = sld [smem:[#allocation6 + $0x1b]]
    %v680 = vstv %s679
    %v681 = vmul.f32 %v676, %v680
    %v682 = vmul.f32 %v677, %v680
    %v683 = vmul.f32 %v678, %v680
    %v684 = vadd.f32 %v657, %v681
    %v685 = vadd.f32 %v658, %v682
    %v686 = vadd.f32 %v659, %v683
    %s687 = sld [smem:[#allocation6 + $0x24]]
    %v688 = vstv %s687
    %v689 = vmul.f32 %v676, %v688
    %v690 = vmul.f32 %v677, %v688
    %v691 = vmul.f32 %v678, %v688
    %v692 = vadd.f32 %v665, %v689
    %v693 = vadd.f32 %v666, %v690
    %v694 = vadd.f32 %v667, %v691
    %s695 = sld [smem:[#allocation6 + $0x2d]]
    %v696 = vstv %s695
    %v697 = vmul.f32 %v676, %v696
    %v698 = vmul.f32 %v677, %v696
    %v699 = vmul.f32 %v678, %v696
    %v700 = vadd.f32 %v673, %v697
    %v701 = vadd.f32 %v674, %v698
    %v702 = vadd.f32 %v675, %v699
    %v703 = vld [vmem:[%s169] sm:$0xff]
    %v704 = vld [vmem:[%s169 + $0x8] sm:$0xff]
    %v705 = vld [vmem:[%s169 + $0x10] sm:$0x3f]
    %s706 = sld [smem:[#allocation6 + $0x3e]]
    %v707 = vstv %s706
    %v708 = vmul.f32 %v703, %v707
    %v709 = vmul.f32 %v704, %v707
    %v710 = vmul.f32 %v705, %v707
    %v711 = vadd.f32 %v684, %v708
    %v712 = vadd.f32 %v685, %v709
    %v713 = vadd.f32 %v686, %v710
    %s714 = sld [smem:[#allocation6 + $0x47]]
    %v715 = vstv %s714
    %v716 = vmul.f32 %v703, %v715
    %v717 = vmul.f32 %v704, %v715
    %v718 = vmul.f32 %v705, %v715
    %v719 = vadd.f32 %v692, %v716
    %v720 = vadd.f32 %v693, %v717
    %v721 = vadd.f32 %v694, %v718
    %s722 = sld [smem:[#allocation6 + $0x50]]
    %v723 = vstv %s722
    %v724 = vmul.f32 %v703, %v723
    %v725 = vmul.f32 %v704, %v723
    %v726 = vmul.f32 %v705, %v723
    %v727 = vadd.f32 %v700, %v724
    %v728 = vadd.f32 %v701, %v725
    %v729 = vadd.f32 %v702, %v726
    %v730 = vld [vmem:[%s169 + $0x1] sm:$0xff]
    %v731 = vld [vmem:[%s169 + $0x9] sm:$0xff]
    %v732 = vld [vmem:[%s169 + $0x11] sm:$0x3f]
    %s733 = sld [smem:[#allocation6 + $0x3b]]
    %v734 = vstv %s733
    %v735 = vmul.f32 %v730, %v734
    %v736 = vmul.f32 %v731, %v734
    %v737 = vmul.f32 %v732, %v734
    %v738 = vadd.f32 %v711, %v735
    %v739 = vadd.f32 %v712, %v736
    %v740 = vadd.f32 %v713, %v737
    %s741 = sld [smem:[#allocation6 + $0x44]]
    %v742 = vstv %s741
    %v743 = vmul.f32 %v730, %v742
    %v744 = vmul.f32 %v731, %v742
    %v745 = vmul.f32 %v732, %v742
    %v746 = vadd.f32 %v719, %v743
    %v747 = vadd.f32 %v720, %v744
    %v748 = vadd.f32 %v721, %v745
    %s749 = sld [smem:[#allocation6 + $0x4d]]
    %v750 = vstv %s749
    %v751 = vmul.f32 %v730, %v750
    %v752 = vmul.f32 %v731, %v750
    %v753 = vmul.f32 %v732, %v750
    %v754 = vadd.f32 %v727, %v751
    %v755 = vadd.f32 %v728, %v752
    %v756 = vadd.f32 %v729, %v753
    %v757 = vld [vmem:[%s169 + $0x2] sm:$0xff]
    %v758 = vld [vmem:[%s169 + $0xa] sm:$0xff]
    %v759 = vld [vmem:[%s169 + $0x12] sm:$0x3f]
    %s760 = sld [smem:[#allocation6 + $0x38]]
    %v761 = vstv %s760
    %v762 = vmul.f32 %v757, %v761
    %v763 = vmul.f32 %v758, %v761
    %v764 = vmul.f32 %v759, %v761
    %v765 = vadd.f32 %v738, %v762
    %v766 = vadd.f32 %v739, %v763
    %v767 = vadd.f32 %v740, %v764
    %s768 = sld [smem:[#allocation6 + $0x41]]
    %v769 = vstv %s768
    %v770 = vmul.f32 %v757, %v769
    %v771 = vmul.f32 %v758, %v769
    %v772 = vmul.f32 %v759, %v769
    %v773 = vadd.f32 %v746, %v770
    %v774 = vadd.f32 %v747, %v771
    %v775 = vadd.f32 %v748, %v772
    %s776 = sld [smem:[#allocation6 + $0x4a]]
    %v777 = vstv %s776
    %v778 = vmul.f32 %v757, %v777
    %v779 = vmul.f32 %v758, %v777
    %v780 = vmul.f32 %v759, %v777
    %v781 = vadd.f32 %v754, %v778
    %v782 = vadd.f32 %v755, %v779
    %v783 = vadd.f32 %v756, %v780
    %v784 = vld [vmem:[%s188] sm:$0xff]
    %v785 = vld [vmem:[%s188 + $0x8] sm:$0xff]
    %v786 = vld [vmem:[%s188 + $0x10] sm:$0x3f]
    %s787 = sld [smem:[#allocation6 + $0x3d]]
    %v788 = vstv %s787
    %v789 = vmul.f32 %v784, %v788
    %v790 = vmul.f32 %v785, %v788
    %v791 = vmul.f32 %v786, %v788
    %v792 = vadd.f32 %v765, %v789
    %v793 = vadd.f32 %v766, %v790
    %v794 = vadd.f32 %v767, %v791
    %s795 = sld [smem:[#allocation6 + $0x46]]
    %v796 = vstv %s795
    %v797 = vmul.f32 %v784, %v796
    %v798 = vmul.f32 %v785, %v796
    %v799 = vmul.f32 %v786, %v796
    %v800 = vadd.f32 %v773, %v797
    %v801 = vadd.f32 %v774, %v798
    %v802 = vadd.f32 %v775, %v799
    %s803 = sld [smem:[#allocation6 + $0x4f]]
    %v804 = vstv %s803
    %v805 = vmul.f32 %v784, %v804
    %v806 = vmul.f32 %v785, %v804
    %v807 = vmul.f32 %v786, %v804
    %v808 = vadd.f32 %v781, %v805
    %v809 = vadd.f32 %v782, %v806
    %v810 = vadd.f32 %v783, %v807
    %v811 = vld [vmem:[%s188 + $0x1] sm:$0xff]
    %v812 = vld [vmem:[%s188 + $0x9] sm:$0xff]
    %v813 = vld [vmem:[%s188 + $0x11] sm:$0x3f]
    %s814 = sld [smem:[#allocation6 + $0x3a]]
    %v815 = vstv %s814
    %v816 = vmul.f32 %v811, %v815
    %v817 = vmul.f32 %v812, %v815
    %v818 = vmul.f32 %v813, %v815
    %v819 = vadd.f32 %v792, %v816
    %v820 = vadd.f32 %v793, %v817
    %v821 = vadd.f32 %v794, %v818
    %s822 = sld [smem:[#allocation6 + $0x43]]
    %v823 = vstv %s822
    %v824 = vmul.f32 %v811, %v823
    %v825 = vmul.f32 %v812, %v823
    %v826 = vmul.f32 %v813, %v823
    %v827 = vadd.f32 %v800, %v824
    %v828 = vadd.f32 %v801, %v825
    %v829 = vadd.f32 %v802, %v826
    %s830 = sld [smem:[#allocation6 + $0x4c]]
    %v831 = vstv %s830
    %v832 = vmul.f32 %v811, %v831
    %v833 = vmul.f32 %v812, %v831
    %v834 = vmul.f32 %v813, %v831
    %v835 = vadd.f32 %v808, %v832
    %v836 = vadd.f32 %v809, %v833
    %v837 = vadd.f32 %v810, %v834
    %v838 = vld [vmem:[%s188 + $0x2] sm:$0xff]
    %v839 = vld [vmem:[%s188 + $0xa] sm:$0xff]
    %v840 = vld [vmem:[%s188 + $0x12] sm:$0x3f]
    %s841 = sld [smem:[#allocation6 + $0x37]]
    %v842 = vstv %s841
    %v843 = vmul.f32 %v838, %v842
    %v844 = vmul.f32 %v839, %v842
    %v845 = vmul.f32 %v840, %v842
    %v846 = vadd.f32 %v819, %v843
    %v847 = vadd.f32 %v820, %v844
    %v848 = vadd.f32 %v821, %v845
    %s849 = sld [smem:[#allocation6 + $0x40]]
    %v850 = vstv %s849
    %v851 = vmul.f32 %v838, %v850
    %v852 = vmul.f32 %v839, %v850
    %v853 = vmul.f32 %v840, %v850
    %v854 = vadd.f32 %v827, %v851
    %v855 = vadd.f32 %v828, %v852
    %v856 = vadd.f32 %v829, %v853
    %s857 = sld [smem:[#allocation6 + $0x49]]
    %v858 = vstv %s857
    %v859 = vmul.f32 %v838, %v858
    %v860 = vmul.f32 %v839, %v858
    %v861 = vmul.f32 %v840, %v858
    %v862 = vadd.f32 %v835, %v859
    %v863 = vadd.f32 %v836, %v860
    %v864 = vadd.f32 %v837, %v861
    %v865 = vld [vmem:[%s204] sm:$0xff]
    %v866 = vld [vmem:[%s204 + $0x8] sm:$0xff]
    %v867 = vld [vmem:[%s204 + $0x10] sm:$0x3f]
    %s868 = sld [smem:[#allocation6 + $0x3c]]
    %v869 = vstv %s868
    %v870 = vmul.f32 %v865, %v869
    %v871 = vmul.f32 %v866, %v869
    %v872 = vmul.f32 %v867, %v869
    %v873 = vadd.f32 %v846, %v870
    %v874 = vadd.f32 %v847, %v871
    %v875 = vadd.f32 %v848, %v872
    %s876 = sld [smem:[#allocation6 + $0x45]]
    %v877 = vstv %s876
    %v878 = vmul.f32 %v865, %v877
    %v879 = vmul.f32 %v866, %v877
    %v880 = vmul.f32 %v867, %v877
    %v881 = vadd.f32 %v854, %v878
    %v882 = vadd.f32 %v855, %v879
    %v883 = vadd.f32 %v856, %v880
    %s884 = sld [smem:[#allocation6 + $0x4e]]
    %v885 = vstv %s884
    %v886 = vmul.f32 %v865, %v885
    %v887 = vmul.f32 %v866, %v885
    %v888 = vmul.f32 %v867, %v885
    %v889 = vadd.f32 %v862, %v886
    %v890 = vadd.f32 %v863, %v887
    %v891 = vadd.f32 %v864, %v888
    %v892 = vld [vmem:[%s204 + $0x1] sm:$0xff]
    %v893 = vld [vmem:[%s204 + $0x9] sm:$0xff]
    %v894 = vld [vmem:[%s204 + $0x11] sm:$0x3f]
    %s895 = sld [smem:[#allocation6 + $0x39]]
    %v896 = vstv %s895
    %v897 = vmul.f32 %v892, %v896
    %v898 = vmul.f32 %v893, %v896
    %v899 = vmul.f32 %v894, %v896
    %v900 = vadd.f32 %v873, %v897
    %v901 = vadd.f32 %v874, %v898
    %v902 = vadd.f32 %v875, %v899
    %s903 = sld [smem:[#allocation6 + $0x42]]
    %v904 = vstv %s903
    %v905 = vmul.f32 %v892, %v904
    %v906 = vmul.f32 %v893, %v904
    %v907 = vmul.f32 %v894, %v904
    %v908 = vadd.f32 %v881, %v905
    %v909 = vadd.f32 %v882, %v906
    %v910 = vadd.f32 %v883, %v907
    %s911 = sld [smem:[#allocation6 + $0x4b]]
    %v912 = vstv %s911
    %v913 = vmul.f32 %v892, %v912
    %v914 = vmul.f32 %v893, %v912
    %v915 = vmul.f32 %v894, %v912
    %v916 = vadd.f32 %v889, %v913
    %v917 = vadd.f32 %v890, %v914
    %v918 = vadd.f32 %v891, %v915
    %v919 = vld [vmem:[%s204 + $0x2] sm:$0xff]
    %v920 = vld [vmem:[%s204 + $0xa] sm:$0xff]
    %v921 = vld [vmem:[%s204 + $0x12] sm:$0x3f]
    %s922 = sld [smem:[#allocation6 + $0x36]]
    %v923 = vstv %s922
    %v924 = vmul.f32 %v919, %v923
    %v925 = vmul.f32 %v920, %v923
    %v926 = vmul.f32 %v921, %v923
    %v927 = vadd.f32 %v900, %v924
    %v928 = vadd.f32 %v901, %v925
    %v929 = vadd.f32 %v902, %v926
    %s930 = sld [smem:[#allocation6 + $0x3f]]
    %v931 = vstv %s930
    %v932 = vmul.f32 %v919, %v931
    %v933 = vmul.f32 %v920, %v931
    %v934 = vmul.f32 %v921, %v931
    %v935 = vadd.f32 %v908, %v932
    %v936 = vadd.f32 %v909, %v933
    %v937 = vadd.f32 %v910, %v934
    %s938 = sld [smem:[#allocation6 + $0x48]]
    %v939 = vstv %s938
    %v940 = vmul.f32 %v919, %v939
    %v941 = vmul.f32 %v920, %v939
    %v942 = vmul.f32 %v921, %v939
    %v943 = vadd.f32 %v916, %v940
    %v944 = vadd.f32 %v917, %v941
    %v945 = vadd.f32 %v918, %v942
    %946 = vst.msk [vmem:[#allocation3] sm:$0xff] %vm71, %v927
    %947 = vst.msk [vmem:[#allocation3 + $0x8] sm:$0xff] %vm71, %v928
    %vm948 = vcmask 422912
    %949 = vst.msk [vmem:[#allocation3 + $0x10] sm:$0x3f] %vm948, %v929
    %s950 = scalar_lea.vmem [#allocation3], 24
    %951 = vst.msk [vmem:[%s950] sm:$0xff] %vm71, %v935
    %952 = vst.msk [vmem:[%s950 + $0x8] sm:$0xff] %vm71, %v936
    %953 = vst.msk [vmem:[%s950 + $0x10] sm:$0x3f] %vm948, %v937
    %s954 = scalar_lea.vmem [#allocation3], 48
    %955 = vst.msk [vmem:[%s954] sm:$0xff] %vm71, %v943
    %956 = vst.msk [vmem:[%s954 + $0x8] sm:$0xff] %vm71, %v944
    %957 = vst.msk [vmem:[%s954 + $0x10] sm:$0x3f] %vm948, %v945
    %v958 = vld [vmem:[#allocation3] sm:$0xff]
    %v959 = vld [vmem:[#allocation3 + $0x8] sm:$0xff]
    %v960 = vld [vmem:[#allocation3 + $0x10] sm:$0x3f]
    %961 = vst.msk [vmem:[#allocation4] sm:$0xff] %vm114, %v958
    %962 = vst.msk [vmem:[#allocation4 + $0x8] sm:$0xff] %vm114, %v959
    %vm963 = vcmask 406528
    %964 = vst.msk [vmem:[#allocation4 + $0x10] sm:$0x3f] %vm963, %v960
    %v965 = vld [vmem:[#allocation3] sm:$0xff]
    %v966 = vld [vmem:[#allocation3 + $0x8] sm:$0xff]
    %v967 = vld [vmem:[#allocation3 + $0x10] sm:$0x3f]
    %971 = vrot.lane.b32.xlu0 %v965, 127
    %v972 = vpop.permute.xlu0 %971
    %973 = vrot.lane.b32.xlu0 %v966, 127
    %v974 = vpop.permute.xlu0 %973
    %975 = vrot.lane.b32.xlu0 %v967, 127
    %v976 = vpop.permute.xlu0 %975
    %s980 = scalar_lea.vmem [#allocation4], 24
    %981 = vst.msk [vmem:[%s980] sm:$0xff] %vm114, %v972
    %982 = vst.msk [vmem:[%s980 + $0x8] sm:$0xff] %vm114, %v974
    %983 = vst.msk [vmem:[%s980 + $0x10] sm:$0x3f] %vm963, %v976
    %v984 = vld [vmem:[#allocation3] sm:$0xff]
    %v985 = vld [vmem:[#allocation3 + $0x8] sm:$0xff]
    %v986 = vld [vmem:[#allocation3 + $0x10] sm:$0x3f]
    %990 = vrot.lane.b32.xlu0 %v984, 126
    %v991 = vpop.permute.xlu0 %990
    %992 = vrot.lane.b32.xlu0 %v985, 126
    %v993 = vpop.permute.xlu0 %992
    %994 = vrot.lane.b32.xlu0 %v986, 126
    %v995 = vpop.permute.xlu0 %994
    %s999 = scalar_lea.vmem [#allocation4], 48
    %1000 = vst.msk [vmem:[%s999] sm:$0xff] %vm114, %v991
    %1001 = vst.msk [vmem:[%s999 + $0x8] sm:$0xff] %vm114, %v993
    %1002 = vst.msk [vmem:[%s999 + $0x10] sm:$0x3f] %vm963, %v995
    %v1003 = vld [vmem:[%s950] sm:$0xff]
    %v1004 = vld [vmem:[%s950 + $0x8] sm:$0xff]
    %v1005 = vld [vmem:[%s950 + $0x10] sm:$0x3f]
    %s1006 = scalar_lea.vmem [#allocation4], 72
    %1007 = vst.msk [vmem:[%s1006] sm:$0xff] %vm114, %v1003
    %1008 = vst.msk [vmem:[%s1006 + $0x8] sm:$0xff] %vm114, %v1004
    %1009 = vst.msk [vmem:[%s1006 + $0x10] sm:$0x3f] %vm963, %v1005
    %v1010 = vld [vmem:[%s950] sm:$0xff]
    %v1011 = vld [vmem:[%s950 + $0x8] sm:$0xff]
    %v1012 = vld [vmem:[%s950 + $0x10] sm:$0x3f]
    %1016 = vrot.lane.b32.xlu0 %v1010, 127
    %v1017 = vpop.permute.xlu0 %1016
    %1018 = vrot.lane.b32.xlu0 %v1011, 127
    %v1019 = vpop.permute.xlu0 %1018
    %1020 = vrot.lane.b32.xlu0 %v1012, 127
    %v1021 = vpop.permute.xlu0 %1020
    %s1025 = scalar_lea.vmem [#allocation4], 96
    %1026 = vst.msk [vmem:[%s1025] sm:$0xff] %vm114, %v1017
    %1027 = vst.msk [vmem:[%s1025 + $0x8] sm:$0xff] %vm114, %v1019
    %1028 = vst.msk [vmem:[%s1025 + $0x10] sm:$0x3f] %vm963, %v1021
    %v1029 = vld [vmem:[%s950] sm:$0xff]
    %v1030 = vld [vmem:[%s950 + $0x8] sm:$0xff]
    %v1031 = vld [vmem:[%s950 + $0x10] sm:$0x3f]
    %1035 = vrot.lane.b32.xlu0 %v1029, 126
    %v1036 = vpop.permute.xlu0 %1035
    %1037 = vrot.lane.b32.xlu0 %v1030, 126
    %v1038 = vpop.permute.xlu0 %1037
    %1039 = vrot.lane.b32.xlu0 %v1031, 126
    %v1040 = vpop.permute.xlu0 %1039
    %s1044 = scalar_lea.vmem [#allocation4], 120
    %1045 = vst.msk [vmem:[%s1044] sm:$0xff] %vm114, %v1036
    %1046 = vst.msk [vmem:[%s1044 + $0x8] sm:$0xff] %vm114, %v1038
    %1047 = vst.msk [vmem:[%s1044 + $0x10] sm:$0x3f] %vm963, %v1040
    %v1048 = vld [vmem:[%s954] sm:$0xff]
    %v1049 = vld [vmem:[%s954 + $0x8] sm:$0xff]
    %v1050 = vld [vmem:[%s954 + $0x10] sm:$0x3f]
    %s1051 = scalar_lea.vmem [#allocation4], 144
    %1052 = vst.msk [vmem:[%s1051] sm:$0xff] %vm114, %v1048
    %1053 = vst.msk [vmem:[%s1051 + $0x8] sm:$0xff] %vm114, %v1049
    %1054 = vst.msk [vmem:[%s1051 + $0x10] sm:$0x3f] %vm963, %v1050
    %v1055 = vld [vmem:[%s954] sm:$0xff]
    %v1056 = vld [vmem:[%s954 + $0x8] sm:$0xff]
    %v1057 = vld [vmem:[%s954 + $0x10] sm:$0x3f]
    %1061 = vrot.lane.b32.xlu0 %v1055, 127
    %v1062 = vpop.permute.xlu0 %1061
    %1063 = vrot.lane.b32.xlu0 %v1056, 127
    %v1064 = vpop.permute.xlu0 %1063
    %1065 = vrot.lane.b32.xlu0 %v1057, 127
    %v1066 = vpop.permute.xlu0 %1065
    %s1070 = scalar_lea.vmem [#allocation4], 168
    %1071 = vst.msk [vmem:[%s1070] sm:$0xff] %vm114, %v1062
    %1072 = vst.msk [vmem:[%s1070 + $0x8] sm:$0xff] %vm114, %v1064
    %1073 = vst.msk [vmem:[%s1070 + $0x10] sm:$0x3f] %vm963, %v1066
    %v1074 = vld [vmem:[%s954] sm:$0xff]
    %v1075 = vld [vmem:[%s954 + $0x8] sm:$0xff]
    %v1076 = vld [vmem:[%s954 + $0x10] sm:$0x3f]
    %1080 = vrot.lane.b32.xlu0 %v1074, 126
    %v1081 = vpop.permute.xlu0 %1080
    %1082 = vrot.lane.b32.xlu0 %v1075, 126
    %v1083 = vpop.permute.xlu0 %1082
    %1084 = vrot.lane.b32.xlu0 %v1076, 126
    %v1085 = vpop.permute.xlu0 %1084
    %s1089 = scalar_lea.vmem [#allocation4], 192
    %1090 = vst.msk [vmem:[%s1089] sm:$0xff] %vm114, %v1081
    %1091 = vst.msk [vmem:[%s1089 + $0x8] sm:$0xff] %vm114, %v1083
    %1092 = vst.msk [vmem:[%s1089 + $0x10] sm:$0x3f] %vm963, %v1085
    %s1093 = sld [smem:[#allocation11]]
    %v1094 = vstv %s1093
    %s1095 = sld [smem:[#allocation11 + $0x1]]
    %v1096 = vstv %s1095
    %s1097 = sld [smem:[#allocation11 + $0x2]]
    %v1098 = vstv %s1097
    %v1099 = vld [vmem:[#allocation4] sm:$0xff]
    %v1100 = vld [vmem:[#allocation4 + $0x8] sm:$0xff]
    %v1101 = vld [vmem:[#allocation4 + $0x10] sm:$0xf]
    %s1102 = sld [smem:[#allocation10]]
    %v1103 = vstv %s1102
    %v1104 = vmul.f32 %v1099, %v1103
    %v1105 = vmul.f32 %v1100, %v1103
    %v1106 = vmul.f32 %v1101, %v1103
    %v1107 = vadd.f32 %v1094, %v1104
    %v1108 = vadd.f32 %v1094, %v1105
    %v1109 = vadd.f32 %v1094, %v1106
    %s1110 = sld [smem:[#allocation10 + $0x1b]]
    %v1111 = vstv %s1110
    %v1112 = vmul.f32 %v1099, %v1111
    %v1113 = vmul.f32 %v1100, %v1111
    %v1114 = vmul.f32 %v1101, %v1111
    %v1115 = vadd.f32 %v1096, %v1112
    %v1116 = vadd.f32 %v1096, %v1113
    %v1117 = vadd.f32 %v1096, %v1114
    %s1118 = sld [smem:[#allocation10 + $0x36]]
    %v1119 = vstv %s1118
    %v1120 = vmul.f32 %v1099, %v1119
    %v1121 = vmul.f32 %v1100, %v1119
    %v1122 = vmul.f32 %v1101, %v1119
    %v1123 = vadd.f32 %v1098, %v1120
    %v1124 = vadd.f32 %v1098, %v1121
    %v1125 = vadd.f32 %v1098, %v1122
    %v1126 = vld [vmem:[#allocation4 + $0x1] sm:$0xff]
    %v1127 = vld [vmem:[#allocation4 + $0x9] sm:$0xff]
    %v1128 = vld [vmem:[#allocation4 + $0x11] sm:$0xf]
    %s1129 = sld [smem:[#allocation10 + $0x3]]
    %v1130 = vstv %s1129
    %v1131 = vmul.f32 %v1126, %v1130
    %v1132 = vmul.f32 %v1127, %v1130
    %v1133 = vmul.f32 %v1128, %v1130
    %v1134 = vadd.f32 %v1107, %v1131
    %v1135 = vadd.f32 %v1108, %v1132
    %v1136 = vadd.f32 %v1109, %v1133
    %s1137 = sld [smem:[#allocation10 + $0x1e]]
    %v1138 = vstv %s1137
    %v1139 = vmul.f32 %v1126, %v1138
    %v1140 = vmul.f32 %v1127, %v1138
    %v1141 = vmul.f32 %v1128, %v1138
    %v1142 = vadd.f32 %v1115, %v1139
    %v1143 = vadd.f32 %v1116, %v1140
    %v1144 = vadd.f32 %v1117, %v1141
    %s1145 = sld [smem:[#allocation10 + $0x39]]
    %v1146 = vstv %s1145
    %v1147 = vmul.f32 %v1126, %v1146
    %v1148 = vmul.f32 %v1127, %v1146
    %v1149 = vmul.f32 %v1128, %v1146
    %v1150 = vadd.f32 %v1123, %v1147
    %v1151 = vadd.f32 %v1124, %v1148
    %v1152 = vadd.f32 %v1125, %v1149
    %v1153 = vld [vmem:[#allocation4 + $0x2] sm:$0xff]
    %v1154 = vld [vmem:[#allocation4 + $0xa] sm:$0xff]
    %v1155 = vld [vmem:[#allocation4 + $0x12] sm:$0xf]
    %s1156 = sld [smem:[#allocation10 + $0x6]]
    %v1157 = vstv %s1156
    %v1158 = vmul.f32 %v1153, %v1157
    %v1159 = vmul.f32 %v1154, %v1157
    %v1160 = vmul.f32 %v1155, %v1157
    %v1161 = vadd.f32 %v1134, %v1158
    %v1162 = vadd.f32 %v1135, %v1159
    %v1163 = vadd.f32 %v1136, %v1160
    %s1164 = sld [smem:[#allocation10 + $0x21]]
    %v1165 = vstv %s1164
    %v1166 = vmul.f32 %v1153, %v1165
    %v1167 = vmul.f32 %v1154, %v1165
    %v1168 = vmul.f32 %v1155, %v1165
    %v1169 = vadd.f32 %v1142, %v1166
    %v1170 = vadd.f32 %v1143, %v1167
    %v1171 = vadd.f32 %v1144, %v1168
    %s1172 = sld [smem:[#allocation10 + $0x3c]]
    %v1173 = vstv %s1172
    %v1174 = vmul.f32 %v1153, %v1173
    %v1175 = vmul.f32 %v1154, %v1173
    %v1176 = vmul.f32 %v1155, %v1173
    %v1177 = vadd.f32 %v1150, %v1174
    %v1178 = vadd.f32 %v1151, %v1175
    %v1179 = vadd.f32 %v1152, %v1176
    %v1180 = vld [vmem:[%s980] sm:$0xff]
    %v1181 = vld [vmem:[%s980 + $0x8] sm:$0xff]
    %v1182 = vld [vmem:[%s980 + $0x10] sm:$0xf]
    %s1183 = sld [smem:[#allocation10 + $0x1]]
    %v1184 = vstv %s1183
    %v1185 = vmul.f32 %v1180, %v1184
    %v1186 = vmul.f32 %v1181, %v1184
    %v1187 = vmul.f32 %v1182, %v1184
    %v1188 = vadd.f32 %v1161, %v1185
    %v1189 = vadd.f32 %v1162, %v1186
    %v1190 = vadd.f32 %v1163, %v1187
    %s1191 = sld [smem:[#allocation10 + $0x1c]]
    %v1192 = vstv %s1191
    %v1193 = vmul.f32 %v1180, %v1192
    %v1194 = vmul.f32 %v1181, %v1192
    %v1195 = vmul.f32 %v1182, %v1192
    %v1196 = vadd.f32 %v1169, %v1193
    %v1197 = vadd.f32 %v1170, %v1194
    %v1198 = vadd.f32 %v1171, %v1195
    %s1199 = sld [smem:[#allocation10 + $0x37]]
    %v1200 = vstv %s1199
    %v1201 = vmul.f32 %v1180, %v1200
    %v1202 = vmul.f32 %v1181, %v1200
    %v1203 = vmul.f32 %v1182, %v1200
    %v1204 = vadd.f32 %v1177, %v1201
    %v1205 = vadd.f32 %v1178, %v1202
    %v1206 = vadd.f32 %v1179, %v1203
    %v1207 = vld [vmem:[%s980 + $0x1] sm:$0xff]
    %v1208 = vld [vmem:[%s980 + $0x9] sm:$0xff]
    %v1209 = vld [vmem:[%s980 + $0x11] sm:$0xf]
    %s1210 = sld [smem:[#allocation10 + $0x4]]
    %v1211 = vstv %s1210
    %v1212 = vmul.f32 %v1207, %v1211
    %v1213 = vmul.f32 %v1208, %v1211
    %v1214 = vmul.f32 %v1209, %v1211
    %v1215 = vadd.f32 %v1188, %v1212
    %v1216 = vadd.f32 %v1189, %v1213
    %v1217 = vadd.f32 %v1190, %v1214
    %s1218 = sld [smem:[#allocation10 + $0x1f]]
    %v1219 = vstv %s1218
    %v1220 = vmul.f32 %v1207, %v1219
    %v1221 = vmul.f32 %v1208, %v1219
    %v1222 = vmul.f32 %v1209, %v1219
    %v1223 = vadd.f32 %v1196, %v1220
    %v1224 = vadd.f32 %v1197, %v1221
    %v1225 = vadd.f32 %v1198, %v1222
    %s1226 = sld [smem:[#allocation10 + $0x3a]]
    %v1227 = vstv %s1226
    %v1228 = vmul.f32 %v1207, %v1227
    %v1229 = vmul.f32 %v1208, %v1227
    %v1230 = vmul.f32 %v1209, %v1227
    %v1231 = vadd.f32 %v1204, %v1228
    %v1232 = vadd.f32 %v1205, %v1229
    %v1233 = vadd.f32 %v1206, %v1230
    %v1234 = vld [vmem:[%s980 + $0x2] sm:$0xff]
    %v1235 = vld [vmem:[%s980 + $0xa] sm:$0xff]
    %v1236 = vld [vmem:[%s980 + $0x12] sm:$0xf]
    %s1237 = sld [smem:[#allocation10 + $0x7]]
    %v1238 = vstv %s1237
    %v1239 = vmul.f32 %v1234, %v1238
    %v1240 = vmul.f32 %v1235, %v1238
    %v1241 = vmul.f32 %v1236, %v1238
    %v1242 = vadd.f32 %v1215, %v1239
    %v1243 = vadd.f32 %v1216, %v1240
    %v1244 = vadd.f32 %v1217, %v1241
    %s1245 = sld [smem:[#allocation10 + $0x22]]
    %v1246 = vstv %s1245
    %v1247 = vmul.f32 %v1234, %v1246
    %v1248 = vmul.f32 %v1235, %v1246
    %v1249 = vmul.f32 %v1236, %v1246
    %v1250 = vadd.f32 %v1223, %v1247
    %v1251 = vadd.f32 %v1224, %v1248
    %v1252 = vadd.f32 %v1225, %v1249
    %s1253 = sld [smem:[#allocation10 + $0x3d]]
    %v1254 = vstv %s1253
    %v1255 = vmul.f32 %v1234, %v1254
    %v1256 = vmul.f32 %v1235, %v1254
    %v1257 = vmul.f32 %v1236, %v1254
    %v1258 = vadd.f32 %v1231, %v1255
    %v1259 = vadd.f32 %v1232, %v1256
    %v1260 = vadd.f32 %v1233, %v1257
    %v1261 = vld [vmem:[%s999] sm:$0xff]
    %v1262 = vld [vmem:[%s999 + $0x8] sm:$0xff]
    %v1263 = vld [vmem:[%s999 + $0x10] sm:$0xf]
    %s1264 = sld [smem:[#allocation10 + $0x2]]
    %v1265 = vstv %s1264
    %v1266 = vmul.f32 %v1261, %v1265
    %v1267 = vmul.f32 %v1262, %v1265
    %v1268 = vmul.f32 %v1263, %v1265
    %v1269 = vadd.f32 %v1242, %v1266
    %v1270 = vadd.f32 %v1243, %v1267
    %v1271 = vadd.f32 %v1244, %v1268
    %s1272 = sld [smem:[#allocation10 + $0x1d]]
    %v1273 = vstv %s1272
    %v1274 = vmul.f32 %v1261, %v1273
    %v1275 = vmul.f32 %v1262, %v1273
    %v1276 = vmul.f32 %v1263, %v1273
    %v1277 = vadd.f32 %v1250, %v1274
    %v1278 = vadd.f32 %v1251, %v1275
    %v1279 = vadd.f32 %v1252, %v1276
    %s1280 = sld [smem:[#allocation10 + $0x38]]
    %v1281 = vstv %s1280
    %v1282 = vmul.f32 %v1261, %v1281
    %v1283 = vmul.f32 %v1262, %v1281
    %v1284 = vmul.f32 %v1263, %v1281
    %v1285 = vadd.f32 %v1258, %v1282
    %v1286 = vadd.f32 %v1259, %v1283
    %v1287 = vadd.f32 %v1260, %v1284
    %v1288 = vld [vmem:[%s999 + $0x1] sm:$0xff]
    %v1289 = vld [vmem:[%s999 + $0x9] sm:$0xff]
    %v1290 = vld [vmem:[%s999 + $0x11] sm:$0xf]
    %s1291 = sld [smem:[#allocation10 + $0x5]]
    %v1292 = vstv %s1291
    %v1293 = vmul.f32 %v1288, %v1292
    %v1294 = vmul.f32 %v1289, %v1292
    %v1295 = vmul.f32 %v1290, %v1292
    %v1296 = vadd.f32 %v1269, %v1293
    %v1297 = vadd.f32 %v1270, %v1294
    %v1298 = vadd.f32 %v1271, %v1295
    %s1299 = sld [smem:[#allocation10 + $0x20]]
    %v1300 = vstv %s1299
    %v1301 = vmul.f32 %v1288, %v1300
    %v1302 = vmul.f32 %v1289, %v1300
    %v1303 = vmul.f32 %v1290, %v1300
    %v1304 = vadd.f32 %v1277, %v1301
    %v1305 = vadd.f32 %v1278, %v1302
    %v1306 = vadd.f32 %v1279, %v1303
    %s1307 = sld [smem:[#allocation10 + $0x3b]]
    %v1308 = vstv %s1307
    %v1309 = vmul.f32 %v1288, %v1308
    %v1310 = vmul.f32 %v1289, %v1308
    %v1311 = vmul.f32 %v1290, %v1308
    %v1312 = vadd.f32 %v1285, %v1309
    %v1313 = vadd.f32 %v1286, %v1310
    %v1314 = vadd.f32 %v1287, %v1311
    %v1315 = vld [vmem:[%s999 + $0x2] sm:$0xff]
    %v1316 = vld [vmem:[%s999 + $0xa] sm:$0xff]
    %v1317 = vld [vmem:[%s999 + $0x12] sm:$0xf]
    %s1318 = sld [smem:[#allocation10 + $0x8]]
    %v1319 = vstv %s1318
    %v1320 = vmul.f32 %v1315, %v1319
    %v1321 = vmul.f32 %v1316, %v1319
    %v1322 = vmul.f32 %v1317, %v1319
    %v1323 = vadd.f32 %v1296, %v1320
    %v1324 = vadd.f32 %v1297, %v1321
    %v1325 = vadd.f32 %v1298, %v1322
    %s1326 = sld [smem:[#allocation10 + $0x23]]
    %v1327 = vstv %s1326
    %v1328 = vmul.f32 %v1315, %v1327
    %v1329 = vmul.f32 %v1316, %v1327
    %v1330 = vmul.f32 %v1317, %v1327
    %v1331 = vadd.f32 %v1304, %v1328
    %v1332 = vadd.f32 %v1305, %v1329
    %v1333 = vadd.f32 %v1306, %v1330
    %s1334 = sld [smem:[#allocation10 + $0x3e]]
    %v1335 = vstv %s1334
    %v1336 = vmul.f32 %v1315, %v1335
    %v1337 = vmul.f32 %v1316, %v1335
    %v1338 = vmul.f32 %v1317, %v1335
    %v1339 = vadd.f32 %v1312, %v1336
    %v1340 = vadd.f32 %v1313, %v1337
    %v1341 = vadd.f32 %v1314, %v1338
    %v1342 = vld [vmem:[%s1006] sm:$0xff]
    %v1343 = vld [vmem:[%s1006 + $0x8] sm:$0xff]
    %v1344 = vld [vmem:[%s1006 + $0x10] sm:$0xf]
    %s1345 = sld [smem:[#allocation10 + $0x9]]
    %v1346 = vstv %s1345
    %v1347 = vmul.f32 %v1342, %v1346
    %v1348 = vmul.f32 %v1343, %v1346
    %v1349 = vmul.f32 %v1344, %v1346
    %v1350 = vadd.f32 %v1323, %v1347
    %v1351 = vadd.f32 %v1324, %v1348
    %v1352 = vadd.f32 %v1325, %v1349
    %s1353 = sld [smem:[#allocation10 + $0x24]]
    %v1354 = vstv %s1353
    %v1355 = vmul.f32 %v1342, %v1354
    %v1356 = vmul.f32 %v1343, %v1354
    %v1357 = vmul.f32 %v1344, %v1354
    %v1358 = vadd.f32 %v1331, %v1355
    %v1359 = vadd.f32 %v1332, %v1356
    %v1360 = vadd.f32 %v1333, %v1357
    %s1361 = sld [smem:[#allocation10 + $0x3f]]
    %v1362 = vstv %s1361
    %v1363 = vmul.f32 %v1342, %v1362
    %v1364 = vmul.f32 %v1343, %v1362
    %v1365 = vmul.f32 %v1344, %v1362
    %v1366 = vadd.f32 %v1339, %v1363
    %v1367 = vadd.f32 %v1340, %v1364
    %v1368 = vadd.f32 %v1341, %v1365
    %v1369 = vld [vmem:[%s1006 + $0x1] sm:$0xff]
    %v1370 = vld [vmem:[%s1006 + $0x9] sm:$0xff]
    %v1371 = vld [vmem:[%s1006 + $0x11] sm:$0xf]
    %s1372 = sld [smem:[#allocation10 + $0xc]]
    %v1373 = vstv %s1372
    %v1374 = vmul.f32 %v1369, %v1373
    %v1375 = vmul.f32 %v1370, %v1373
    %v1376 = vmul.f32 %v1371, %v1373
    %v1377 = vadd.f32 %v1350, %v1374
    %v1378 = vadd.f32 %v1351, %v1375
    %v1379 = vadd.f32 %v1352, %v1376
    %s1380 = sld [smem:[#allocation10 + $0x27]]
    %v1381 = vstv %s1380
    %v1382 = vmul.f32 %v1369, %v1381
    %v1383 = vmul.f32 %v1370, %v1381
    %v1384 = vmul.f32 %v1371, %v1381
    %v1385 = vadd.f32 %v1358, %v1382
    %v1386 = vadd.f32 %v1359, %v1383
    %v1387 = vadd.f32 %v1360, %v1384
    %s1388 = sld [smem:[#allocation10 + $0x42]]
    %v1389 = vstv %s1388
    %v1390 = vmul.f32 %v1369, %v1389
    %v1391 = vmul.f32 %v1370, %v1389
    %v1392 = vmul.f32 %v1371, %v1389
    %v1393 = vadd.f32 %v1366, %v1390
    %v1394 = vadd.f32 %v1367, %v1391
    %v1395 = vadd.f32 %v1368, %v1392
    %v1396 = vld [vmem:[%s1006 + $0x2] sm:$0xff]
    %v1397 = vld [vmem:[%s1006 + $0xa] sm:$0xff]
    %v1398 = vld [vmem:[%s1006 + $0x12] sm:$0xf]
    %s1399 = sld [smem:[#allocation10 + $0xf]]
    %v1400 = vstv %s1399
    %v1401 = vmul.f32 %v1396, %v1400
    %v1402 = vmul.f32 %v1397, %v1400
    %v1403 = vmul.f32 %v1398, %v1400
    %v1404 = vadd.f32 %v1377, %v1401
    %v1405 = vadd.f32 %v1378, %v1402
    %v1406 = vadd.f32 %v1379, %v1403
    %s1407 = sld [smem:[#allocation10 + $0x2a]]
    %v1408 = vstv %s1407
    %v1409 = vmul.f32 %v1396, %v1408
    %v1410 = vmul.f32 %v1397, %v1408
    %v1411 = vmul.f32 %v1398, %v1408
    %v1412 = vadd.f32 %v1385, %v1409
    %v1413 = vadd.f32 %v1386, %v1410
    %v1414 = vadd.f32 %v1387, %v1411
    %s1415 = sld [smem:[#allocation10 + $0x45]]
    %v1416 = vstv %s1415
    %v1417 = vmul.f32 %v1396, %v1416
    %v1418 = vmul.f32 %v1397, %v1416
    %v1419 = vmul.f32 %v1398, %v1416
    %v1420 = vadd.f32 %v1393, %v1417
    %v1421 = vadd.f32 %v1394, %v1418
    %v1422 = vadd.f32 %v1395, %v1419
    %v1423 = vld [vmem:[%s1025] sm:$0xff]
    %v1424 = vld [vmem:[%s1025 + $0x8] sm:$0xff]
    %v1425 = vld [vmem:[%s1025 + $0x10] sm:$0xf]
    %s1426 = sld [smem:[#allocation10 + $0xa]]
    %v1427 = vstv %s1426
    %v1428 = vmul.f32 %v1423, %v1427
    %v1429 = vmul.f32 %v1424, %v1427
    %v1430 = vmul.f32 %v1425, %v1427
    %v1431 = vadd.f32 %v1404, %v1428
    %v1432 = vadd.f32 %v1405, %v1429
    %v1433 = vadd.f32 %v1406, %v1430
    %s1434 = sld [smem:[#allocation10 + $0x25]]
    %v1435 = vstv %s1434
    %v1436 = vmul.f32 %v1423, %v1435
    %v1437 = vmul.f32 %v1424, %v1435
    %v1438 = vmul.f32 %v1425, %v1435
    %v1439 = vadd.f32 %v1412, %v1436
    %v1440 = vadd.f32 %v1413, %v1437
    %v1441 = vadd.f32 %v1414, %v1438
    %s1442 = sld [smem:[#allocation10 + $0x40]]
    %v1443 = vstv %s1442
    %v1444 = vmul.f32 %v1423, %v1443
    %v1445 = vmul.f32 %v1424, %v1443
    %v1446 = vmul.f32 %v1425, %v1443
    %v1447 = vadd.f32 %v1420, %v1444
    %v1448 = vadd.f32 %v1421, %v1445
    %v1449 = vadd.f32 %v1422, %v1446
    %v1450 = vld [vmem:[%s1025 + $0x1] sm:$0xff]
    %v1451 = vld [vmem:[%s1025 + $0x9] sm:$0xff]
    %v1452 = vld [vmem:[%s1025 + $0x11] sm:$0xf]
    %s1453 = sld [smem:[#allocation10 + $0xd]]
    %v1454 = vstv %s1453
    %v1455 = vmul.f32 %v1450, %v1454
    %v1456 = vmul.f32 %v1451, %v1454
    %v1457 = vmul.f32 %v1452, %v1454
    %v1458 = vadd.f32 %v1431, %v1455
    %v1459 = vadd.f32 %v1432, %v1456
    %v1460 = vadd.f32 %v1433, %v1457
    %s1461 = sld [smem:[#allocation10 + $0x28]]
    %v1462 = vstv %s1461
    %v1463 = vmul.f32 %v1450, %v1462
    %v1464 = vmul.f32 %v1451, %v1462
    %v1465 = vmul.f32 %v1452, %v1462
    %v1466 = vadd.f32 %v1439, %v1463
    %v1467 = vadd.f32 %v1440, %v1464
    %v1468 = vadd.f32 %v1441, %v1465
    %s1469 = sld [smem:[#allocation10 + $0x43]]
    %v1470 = vstv %s1469
    %v1471 = vmul.f32 %v1450, %v1470
    %v1472 = vmul.f32 %v1451, %v1470
    %v1473 = vmul.f32 %v1452, %v1470
    %v1474 = vadd.f32 %v1447, %v1471
    %v1475 = vadd.f32 %v1448, %v1472
    %v1476 = vadd.f32 %v1449, %v1473
    %v1477 = vld [vmem:[%s1025 + $0x2] sm:$0xff]
    %v1478 = vld [vmem:[%s1025 + $0xa] sm:$0xff]
    %v1479 = vld [vmem:[%s1025 + $0x12] sm:$0xf]
    %s1480 = sld [smem:[#allocation10 + $0x10]]
    %v1481 = vstv %s1480
    %v1482 = vmul.f32 %v1477, %v1481
    %v1483 = vmul.f32 %v1478, %v1481
    %v1484 = vmul.f32 %v1479, %v1481
    %v1485 = vadd.f32 %v1458, %v1482
    %v1486 = vadd.f32 %v1459, %v1483
    %v1487 = vadd.f32 %v1460, %v1484
    %s1488 = sld [smem:[#allocation10 + $0x2b]]
    %v1489 = vstv %s1488
    %v1490 = vmul.f32 %v1477, %v1489
    %v1491 = vmul.f32 %v1478, %v1489
    %v1492 = vmul.f32 %v1479, %v1489
    %v1493 = vadd.f32 %v1466, %v1490
    %v1494 = vadd.f32 %v1467, %v1491
    %v1495 = vadd.f32 %v1468, %v1492
    %s1496 = sld [smem:[#allocation10 + $0x46]]
    %v1497 = vstv %s1496
    %v1498 = vmul.f32 %v1477, %v1497
    %v1499 = vmul.f32 %v1478, %v1497
    %v1500 = vmul.f32 %v1479, %v1497
    %v1501 = vadd.f32 %v1474, %v1498
    %v1502 = vadd.f32 %v1475, %v1499
    %v1503 = vadd.f32 %v1476, %v1500
    %v1504 = vld [vmem:[%s1044] sm:$0xff]
    %v1505 = vld [vmem:[%s1044 + $0x8] sm:$0xff]
    %v1506 = vld [vmem:[%s1044 + $0x10] sm:$0xf]
    %s1507 = sld [smem:[#allocation10 + $0xb]]
    %v1508 = vstv %s1507
    %v1509 = vmul.f32 %v1504, %v1508
    %v1510 = vmul.f32 %v1505, %v1508
    %v1511 = vmul.f32 %v1506, %v1508
    %v1512 = vadd.f32 %v1485, %v1509
    %v1513 = vadd.f32 %v1486, %v1510
    %v1514 = vadd.f32 %v1487, %v1511
    %s1515 = sld [smem:[#allocation10 + $0x26]]
    %v1516 = vstv %s1515
    %v1517 = vmul.f32 %v1504, %v1516
    %v1518 = vmul.f32 %v1505, %v1516
    %v1519 = vmul.f32 %v1506, %v1516
    %v1520 = vadd.f32 %v1493, %v1517
    %v1521 = vadd.f32 %v1494, %v1518
    %v1522 = vadd.f32 %v1495, %v1519
    %s1523 = sld [smem:[#allocation10 + $0x41]]
    %v1524 = vstv %s1523
    %v1525 = vmul.f32 %v1504, %v1524
    %v1526 = vmul.f32 %v1505, %v1524
    %v1527 = vmul.f32 %v1506, %v1524
    %v1528 = vadd.f32 %v1501, %v1525
    %v1529 = vadd.f32 %v1502, %v1526
    %v1530 = vadd.f32 %v1503, %v1527
    %v1531 = vld [vmem:[%s1044 + $0x1] sm:$0xff]
    %v1532 = vld [vmem:[%s1044 + $0x9] sm:$0xff]
    %v1533 = vld [vmem:[%s1044 + $0x11] sm:$0xf]
    %s1534 = sld [smem:[#allocation10 + $0xe]]
    %v1535 = vstv %s1534
    %v1536 = vmul.f32 %v1531, %v1535
    %v1537 = vmul.f32 %v1532, %v1535
    %v1538 = vmul.f32 %v1533, %v1535
    %v1539 = vadd.f32 %v1512, %v1536
    %v1540 = vadd.f32 %v1513, %v1537
    %v1541 = vadd.f32 %v1514, %v1538
    %s1542 = sld [smem:[#allocation10 + $0x29]]
    %v1543 = vstv %s1542
    %v1544 = vmul.f32 %v1531, %v1543
    %v1545 = vmul.f32 %v1532, %v1543
    %v1546 = vmul.f32 %v1533, %v1543
    %v1547 = vadd.f32 %v1520, %v1544
    %v1548 = vadd.f32 %v1521, %v1545
    %v1549 = vadd.f32 %v1522, %v1546
    %s1550 = sld [smem:[#allocation10 + $0x44]]
    %v1551 = vstv %s1550
    %v1552 = vmul.f32 %v1531, %v1551
    %v1553 = vmul.f32 %v1532, %v1551
    %v1554 = vmul.f32 %v1533, %v1551
    %v1555 = vadd.f32 %v1528, %v1552
    %v1556 = vadd.f32 %v1529, %v1553
    %v1557 = vadd.f32 %v1530, %v1554
    %v1558 = vld [vmem:[%s1044 + $0x2] sm:$0xff]
    %v1559 = vld [vmem:[%s1044 + $0xa] sm:$0xff]
    %v1560 = vld [vmem:[%s1044 + $0x12] sm:$0xf]
    %s1561 = sld [smem:[#allocation10 + $0x11]]
    %v1562 = vstv %s1561
    %v1563 = vmul.f32 %v1558, %v1562
    %v1564 = vmul.f32 %v1559, %v1562
    %v1565 = vmul.f32 %v1560, %v1562
    %v1566 = vadd.f32 %v1539, %v1563
    %v1567 = vadd.f32 %v1540, %v1564
    %v1568 = vadd.f32 %v1541, %v1565
    %s1569 = sld [smem:[#allocation10 + $0x2c]]
    %v1570 = vstv %s1569
    %v1571 = vmul.f32 %v1558, %v1570
    %v1572 = vmul.f32 %v1559, %v1570
    %v1573 = vmul.f32 %v1560, %v1570
    %v1574 = vadd.f32 %v1547, %v1571
    %v1575 = vadd.f32 %v1548, %v1572
    %v1576 = vadd.f32 %v1549, %v1573
    %s1577 = sld [smem:[#allocation10 + $0x47]]
    %v1578 = vstv %s1577
    %v1579 = vmul.f32 %v1558, %v1578
    %v1580 = vmul.f32 %v1559, %v1578
    %v1581 = vmul.f32 %v1560, %v1578
    %v1582 = vadd.f32 %v1555, %v1579
    %v1583 = vadd.f32 %v1556, %v1580
    %v1584 = vadd.f32 %v1557, %v1581
    %v1585 = vld [vmem:[%s1051] sm:$0xff]
    %v1586 = vld [vmem:[%s1051 + $0x8] sm:$0xff]
    %v1587 = vld [vmem:[%s1051 + $0x10] sm:$0xf]
    %s1588 = sld [smem:[#allocation10 + $0x12]]
    %v1589 = vstv %s1588
    %v1590 = vmul.f32 %v1585, %v1589
    %v1591 = vmul.f32 %v1586, %v1589
    %v1592 = vmul.f32 %v1587, %v1589
    %v1593 = vadd.f32 %v1566, %v1590
    %v1594 = vadd.f32 %v1567, %v1591
    %v1595 = vadd.f32 %v1568, %v1592
    %s1596 = sld [smem:[#allocation10 + $0x2d]]
    %v1597 = vstv %s1596
    %v1598 = vmul.f32 %v1585, %v1597
    %v1599 = vmul.f32 %v1586, %v1597
    %v1600 = vmul.f32 %v1587, %v1597
    %v1601 = vadd.f32 %v1574, %v1598
    %v1602 = vadd.f32 %v1575, %v1599
    %v1603 = vadd.f32 %v1576, %v1600
    %s1604 = sld [smem:[#allocation10 + $0x48]]
    %v1605 = vstv %s1604
    %v1606 = vmul.f32 %v1585, %v1605
    %v1607 = vmul.f32 %v1586, %v1605
    %v1608 = vmul.f32 %v1587, %v1605
    %v1609 = vadd.f32 %v1582, %v1606
    %v1610 = vadd.f32 %v1583, %v1607
    %v1611 = vadd.f32 %v1584, %v1608
    %v1612 = vld [vmem:[%s1051 + $0x1] sm:$0xff]
    %v1613 = vld [vmem:[%s1051 + $0x9] sm:$0xff]
    %v1614 = vld [vmem:[%s1051 + $0x11] sm:$0xf]
    %s1615 = sld [smem:[#allocation10 + $0x15]]
    %v1616 = vstv %s1615
    %v1617 = vmul.f32 %v1612, %v1616
    %v1618 = vmul.f32 %v1613, %v1616
    %v1619 = vmul.f32 %v1614, %v1616
    %v1620 = vadd.f32 %v1593, %v1617
    %v1621 = vadd.f32 %v1594, %v1618
    %v1622 = vadd.f32 %v1595, %v1619
    %s1623 = sld [smem:[#allocation10 + $0x30]]
    %v1624 = vstv %s1623
    %v1625 = vmul.f32 %v1612, %v1624
    %v1626 = vmul.f32 %v1613, %v1624
    %v1627 = vmul.f32 %v1614, %v1624
    %v1628 = vadd.f32 %v1601, %v1625
    %v1629 = vadd.f32 %v1602, %v1626
    %v1630 = vadd.f32 %v1603, %v1627
    %s1631 = sld [smem:[#allocation10 + $0x4b]]
    %v1632 = vstv %s1631
    %v1633 = vmul.f32 %v1612, %v1632
    %v1634 = vmul.f32 %v1613, %v1632
    %v1635 = vmul.f32 %v1614, %v1632
    %v1636 = vadd.f32 %v1609, %v1633
    %v1637 = vadd.f32 %v1610, %v1634
    %v1638 = vadd.f32 %v1611, %v1635
    %v1639 = vld [vmem:[%s1051 + $0x2] sm:$0xff]
    %v1640 = vld [vmem:[%s1051 + $0xa] sm:$0xff]
    %v1641 = vld [vmem:[%s1051 + $0x12] sm:$0xf]
    %s1642 = sld [smem:[#allocation10 + $0x18]]
    %v1643 = vstv %s1642
    %v1644 = vmul.f32 %v1639, %v1643
    %v1645 = vmul.f32 %v1640, %v1643
    %v1646 = vmul.f32 %v1641, %v1643
    %v1647 = vadd.f32 %v1620, %v1644
    %v1648 = vadd.f32 %v1621, %v1645
    %v1649 = vadd.f32 %v1622, %v1646
    %s1650 = sld [smem:[#allocation10 + $0x33]]
    %v1651 = vstv %s1650
    %v1652 = vmul.f32 %v1639, %v1651
    %v1653 = vmul.f32 %v1640, %v1651
    %v1654 = vmul.f32 %v1641, %v1651
    %v1655 = vadd.f32 %v1628, %v1652
    %v1656 = vadd.f32 %v1629, %v1653
    %v1657 = vadd.f32 %v1630, %v1654
    %s1658 = sld [smem:[#allocation10 + $0x4e]]
    %v1659 = vstv %s1658
    %v1660 = vmul.f32 %v1639, %v1659
    %v1661 = vmul.f32 %v1640, %v1659
    %v1662 = vmul.f32 %v1641, %v1659
    %v1663 = vadd.f32 %v1636, %v1660
    %v1664 = vadd.f32 %v1637, %v1661
    %v1665 = vadd.f32 %v1638, %v1662
    %v1666 = vld [vmem:[%s1070] sm:$0xff]
    %v1667 = vld [vmem:[%s1070 + $0x8] sm:$0xff]
    %v1668 = vld [vmem:[%s1070 + $0x10] sm:$0xf]
    %s1669 = sld [smem:[#allocation10 + $0x13]]
    %v1670 = vstv %s1669
    %v1671 = vmul.f32 %v1666, %v1670
    %v1672 = vmul.f32 %v1667, %v1670
    %v1673 = vmul.f32 %v1668, %v1670
    %v1674 = vadd.f32 %v1647, %v1671
    %v1675 = vadd.f32 %v1648, %v1672
    %v1676 = vadd.f32 %v1649, %v1673
    %s1677 = sld [smem:[#allocation10 + $0x2e]]
    %v1678 = vstv %s1677
    %v1679 = vmul.f32 %v1666, %v1678
    %v1680 = vmul.f32 %v1667, %v1678
    %v1681 = vmul.f32 %v1668, %v1678
    %v1682 = vadd.f32 %v1655, %v1679
    %v1683 = vadd.f32 %v1656, %v1680
    %v1684 = vadd.f32 %v1657, %v1681
    %s1685 = sld [smem:[#allocation10 + $0x49]]
    %v1686 = vstv %s1685
    %v1687 = vmul.f32 %v1666, %v1686
    %v1688 = vmul.f32 %v1667, %v1686
    %v1689 = vmul.f32 %v1668, %v1686
    %v1690 = vadd.f32 %v1663, %v1687
    %v1691 = vadd.f32 %v1664, %v1688
    %v1692 = vadd.f32 %v1665, %v1689
    %v1693 = vld [vmem:[%s1070 + $0x1] sm:$0xff]
    %v1694 = vld [vmem:[%s1070 + $0x9] sm:$0xff]
    %v1695 = vld [vmem:[%s1070 + $0x11] sm:$0xf]
    %s1696 = sld [smem:[#allocation10 + $0x16]]
    %v1697 = vstv %s1696
    %v1698 = vmul.f32 %v1693, %v1697
    %v1699 = vmul.f32 %v1694, %v1697
    %v1700 = vmul.f32 %v1695, %v1697
    %v1701 = vadd.f32 %v1674, %v1698
    %v1702 = vadd.f32 %v1675, %v1699
    %v1703 = vadd.f32 %v1676, %v1700
    %s1704 = sld [smem:[#allocation10 + $0x31]]
    %v1705 = vstv %s1704
    %v1706 = vmul.f32 %v1693, %v1705
    %v1707 = vmul.f32 %v1694, %v1705
    %v1708 = vmul.f32 %v1695, %v1705
    %v1709 = vadd.f32 %v1682, %v1706
    %v1710 = vadd.f32 %v1683, %v1707
    %v1711 = vadd.f32 %v1684, %v1708
    %s1712 = sld [smem:[#allocation10 + $0x4c]]
    %v1713 = vstv %s1712
    %v1714 = vmul.f32 %v1693, %v1713
    %v1715 = vmul.f32 %v1694, %v1713
    %v1716 = vmul.f32 %v1695, %v1713
    %v1717 = vadd.f32 %v1690, %v1714
    %v1718 = vadd.f32 %v1691, %v1715
    %v1719 = vadd.f32 %v1692, %v1716
    %v1720 = vld [vmem:[%s1070 + $0x2] sm:$0xff]
    %v1721 = vld [vmem:[%s1070 + $0xa] sm:$0xff]
    %v1722 = vld [vmem:[%s1070 + $0x12] sm:$0xf]
    %s1723 = sld [smem:[#allocation10 + $0x19]]
    %v1724 = vstv %s1723
    %v1725 = vmul.f32 %v1720, %v1724
    %v1726 = vmul.f32 %v1721, %v1724
    %v1727 = vmul.f32 %v1722, %v1724
    %v1728 = vadd.f32 %v1701, %v1725
    %v1729 = vadd.f32 %v1702, %v1726
    %v1730 = vadd.f32 %v1703, %v1727
    %s1731 = sld [smem:[#allocation10 + $0x34]]
    %v1732 = vstv %s1731
    %v1733 = vmul.f32 %v1720, %v1732
    %v1734 = vmul.f32 %v1721, %v1732
    %v1735 = vmul.f32 %v1722, %v1732
    %v1736 = vadd.f32 %v1709, %v1733
    %v1737 = vadd.f32 %v1710, %v1734
    %v1738 = vadd.f32 %v1711, %v1735
    %s1739 = sld [smem:[#allocation10 + $0x4f]]
    %v1740 = vstv %s1739
    %v1741 = vmul.f32 %v1720, %v1740
    %v1742 = vmul.f32 %v1721, %v1740
    %v1743 = vmul.f32 %v1722, %v1740
    %v1744 = vadd.f32 %v1717, %v1741
    %v1745 = vadd.f32 %v1718, %v1742
    %v1746 = vadd.f32 %v1719, %v1743
    %v1747 = vld [vmem:[%s1089] sm:$0xff]
    %v1748 = vld [vmem:[%s1089 + $0x8] sm:$0xff]
    %v1749 = vld [vmem:[%s1089 + $0x10] sm:$0xf]
    %s1750 = sld [smem:[#allocation10 + $0x14]]
    %v1751 = vstv %s1750
    %v1752 = vmul.f32 %v1747, %v1751
    %v1753 = vmul.f32 %v1748, %v1751
    %v1754 = vmul.f32 %v1749, %v1751
    %v1755 = vadd.f32 %v1728, %v1752
    %v1756 = vadd.f32 %v1729, %v1753
    %v1757 = vadd.f32 %v1730, %v1754
    %s1758 = sld [smem:[#allocation10 + $0x2f]]
    %v1759 = vstv %s1758
    %v1760 = vmul.f32 %v1747, %v1759
    %v1761 = vmul.f32 %v1748, %v1759
    %v1762 = vmul.f32 %v1749, %v1759
    %v1763 = vadd.f32 %v1736, %v1760
    %v1764 = vadd.f32 %v1737, %v1761
    %v1765 = vadd.f32 %v1738, %v1762
    %s1766 = sld [smem:[#allocation10 + $0x4a]]
    %v1767 = vstv %s1766
    %v1768 = vmul.f32 %v1747, %v1767
    %v1769 = vmul.f32 %v1748, %v1767
    %v1770 = vmul.f32 %v1749, %v1767
    %v1771 = vadd.f32 %v1744, %v1768
    %v1772 = vadd.f32 %v1745, %v1769
    %v1773 = vadd.f32 %v1746, %v1770
    %v1774 = vld [vmem:[%s1089 + $0x1] sm:$0xff]
    %v1775 = vld [vmem:[%s1089 + $0x9] sm:$0xff]
    %v1776 = vld [vmem:[%s1089 + $0x11] sm:$0xf]
    %s1777 = sld [smem:[#allocation10 + $0x17]]
    %v1778 = vstv %s1777
    %v1779 = vmul.f32 %v1774, %v1778
    %v1780 = vmul.f32 %v1775, %v1778
    %v1781 = vmul.f32 %v1776, %v1778
    %v1782 = vadd.f32 %v1755, %v1779
    %v1783 = vadd.f32 %v1756, %v1780
    %v1784 = vadd.f32 %v1757, %v1781
    %s1785 = sld [smem:[#allocation10 + $0x32]]
    %v1786 = vstv %s1785
    %v1787 = vmul.f32 %v1774, %v1786
    %v1788 = vmul.f32 %v1775, %v1786
    %v1789 = vmul.f32 %v1776, %v1786
    %v1790 = vadd.f32 %v1763, %v1787
    %v1791 = vadd.f32 %v1764, %v1788
    %v1792 = vadd.f32 %v1765, %v1789
    %s1793 = sld [smem:[#allocation10 + $0x4d]]
    %v1794 = vstv %s1793
    %v1795 = vmul.f32 %v1774, %v1794
    %v1796 = vmul.f32 %v1775, %v1794
    %v1797 = vmul.f32 %v1776, %v1794
    %v1798 = vadd.f32 %v1771, %v1795
    %v1799 = vadd.f32 %v1772, %v1796
    %v1800 = vadd.f32 %v1773, %v1797
    %v1801 = vld [vmem:[%s1089 + $0x2] sm:$0xff]
    %v1802 = vld [vmem:[%s1089 + $0xa] sm:$0xff]
    %v1803 = vld [vmem:[%s1089 + $0x12] sm:$0xf]
    %s1804 = sld [smem:[#allocation10 + $0x1a]]
    %v1805 = vstv %s1804
    %v1806 = vmul.f32 %v1801, %v1805
    %v1807 = vmul.f32 %v1802, %v1805
    %v1808 = vmul.f32 %v1803, %v1805
    %v1809 = vadd.f32 %v1782, %v1806
    %v1810 = vadd.f32 %v1783, %v1807
    %v1811 = vadd.f32 %v1784, %v1808
    %s1812 = sld [smem:[#allocation10 + $0x35]]
    %v1813 = vstv %s1812
    %v1814 = vmul.f32 %v1801, %v1813
    %v1815 = vmul.f32 %v1802, %v1813
    %v1816 = vmul.f32 %v1803, %v1813
    %v1817 = vadd.f32 %v1790, %v1814
    %v1818 = vadd.f32 %v1791, %v1815
    %v1819 = vadd.f32 %v1792, %v1816
    %s1820 = sld [smem:[#allocation10 + $0x50]]
    %v1821 = vstv %s1820
    %v1822 = vmul.f32 %v1801, %v1821
    %v1823 = vmul.f32 %v1802, %v1821
    %v1824 = vmul.f32 %v1803, %v1821
    %v1825 = vadd.f32 %v1798, %v1822
    %v1826 = vadd.f32 %v1799, %v1823
    %v1827 = vadd.f32 %v1800, %v1824
    %1828 = vst.msk [vmem:[#allocation5] sm:$0xff] %vm114, %v1809
    %1829 = vst.msk [vmem:[#allocation5 + $0x8] sm:$0xff] %vm114, %v1810
    %1830 = vst.msk [vmem:[#allocation5 + $0x10] sm:$0xf] %vm117, %v1811
    %1831 = vst.msk [vmem:[#allocation5 + $0x14] sm:$0xff] %vm114, %v1817
    %1832 = vst.msk [vmem:[#allocation5 + $0x1c] sm:$0xff] %vm114, %v1818
    %1833 = vst.msk [vmem:[#allocation5 + $0x24] sm:$0xf] %vm117, %v1819
    %1834 = vst.msk [vmem:[#allocation5 + $0x28] sm:$0xff] %vm114, %v1825
    %1835 = vst.msk [vmem:[#allocation5 + $0x30] sm:$0xff] %vm114, %v1826
    %1836 = vst.msk [vmem:[#allocation5 + $0x38] sm:$0xf] %vm117, %v1827
    %v1837 = vlaneseq
    %v1838 = vshrl.u32 %v1837, 7
    %v1839 = vadd.s32 %v1838, 8
    %v1840 = vadd.s32 %v1838, 16
    %v1841 = vadd.s32 %v1838, 24
    %v1842 = vadd.s32 %v1838, 32
    %v1843 = vadd.s32 %v1838, 40
    %v1844 = vadd.s32 %v1838, 48
    %v1845 = vlaneseq
    %v1846 = vand.u32 %v1845, 127
    %vm1847 = vcmp.eq.s32.totalorder %v1846, 0
    %vm1848 = vcmp.ge.s32.totalorder %v1838, 0
    %vm1849 = vcmp.ge.s32.totalorder %v1839, 0
    %vm1850 = vcmp.ge.s32.totalorder %v1840, 0
    %vm1851 = vcmp.ge.s32.totalorder %v1841, 0
    %vm1852 = vcmp.ge.s32.totalorder %v1842, 0
    %vm1853 = vcmp.ge.s32.totalorder %v1843, 0
    %vm1854 = vcmp.ge.s32.totalorder %v1844, 0
    %vm1855 = vmand %vm1847, %vm1848
    %vm1856 = vmand %vm1847, %vm1849
    %vm1857 = vmand %vm1847, %vm1850
    %vm1858 = vmand %vm1847, %vm1851
    %vm1859 = vmand %vm1847, %vm1852
    %vm1860 = vmand %vm1847, %vm1853
    %vm1861 = vmand %vm1847, %vm1854
    %vm1862 = vcmp.lt.s32.totalorder %v1838, 17
    %vm1863 = vcmp.lt.s32.totalorder %v1839, 17
    %vm1864 = vcmp.lt.s32.totalorder %v1840, 17
    %vm1865 = vcmp.lt.s32.totalorder %v1841, 17
    %vm1866 = vcmp.lt.s32.totalorder %v1842, 17
    %vm1867 = vcmp.lt.s32.totalorder %v1843, 17
    %vm1868 = vcmp.lt.s32.totalorder %v1844, 17
    %vm1869 = vmand %vm1855, %vm1862
    %vm1870 = vmand %vm1856, %vm1863
    %vm1871 = vmand %vm1857, %vm1864
    %vm1872 = vmand %vm1858, %vm1865
    %vm1873 = vmand %vm1859, %vm1866
    %vm1874 = vmand %vm1860, %vm1867
    %vm1875 = vmand %vm1861, %vm1868
    %v1876 = vsel %vm1869, 0.05882353, 0.0
    %v1877 = vsel %vm1870, 0.05882353, 0.0
    %v1878 = vsel %vm1871, 0.05882353, 0.0
    %v1879 = vsel %vm1872, 0.05882353, 0.0
    %v1880 = vsel %vm1873, 0.05882353, 0.0
    %v1881 = vsel %vm1874, 0.05882353, 0.0
    %v1882 = vsel %vm1875, 0.05882353, 0.0
    %v1883 = vadd.f32 %v1876, 0.0
    %v1884 = vadd.f32 %v1877, 0.0
    %v1885 = vadd.f32 %v1878, 0.0
    %v1886 = vadd.f32 %v1879, 0.0
    %v1887 = vadd.f32 %v1880, 0.0
    %v1888 = vadd.f32 %v1881, 0.0
    %v1889 = vadd.f32 %v1882, 0.0
    %vm1890 = vcmp.eq.s32.totalorder %v1846, 1
    %vm1891 = vcmp.ge.s32.totalorder %v1838, 16
    %vm1892 = vcmp.ge.s32.totalorder %v1839, 16
    %vm1893 = vcmp.ge.s32.totalorder %v1840, 16
    %vm1894 = vcmp.ge.s32.totalorder %v1841, 16
    %vm1895 = vcmp.ge.s32.totalorder %v1842, 16
    %vm1896 = vcmp.ge.s32.totalorder %v1843, 16
    %vm1897 = vcmp.ge.s32.totalorder %v1844, 16
    %vm1898 = vmand %vm1890, %vm1891
    %vm1899 = vmand %vm1890, %vm1892
    %vm1900 = vmand %vm1890, %vm1893
    %vm1901 = vmand %vm1890, %vm1894
    %vm1902 = vmand %vm1890, %vm1895
    %vm1903 = vmand %vm1890, %vm1896
    %vm1904 = vmand %vm1890, %vm1897
    %vm1905 = vcmp.lt.s32.totalorder %v1838, 34
    %vm1906 = vcmp.lt.s32.totalorder %v1839, 34
    %vm1907 = vcmp.lt.s32.totalorder %v1840, 34
    %vm1908 = vcmp.lt.s32.totalorder %v1841, 34
    %vm1909 = vcmp.lt.s32.totalorder %v1842, 34
    %vm1910 = vcmp.lt.s32.totalorder %v1843, 34
    %vm1911 = vcmp.lt.s32.totalorder %v1844, 34
    %vm1912 = vmand %vm1898, %vm1905
    %vm1913 = vmand %vm1899, %vm1906
    %vm1914 = vmand %vm1900, %vm1907
    %vm1915 = vmand %vm1901, %vm1908
    %vm1916 = vmand %vm1902, %vm1909
    %vm1917 = vmand %vm1903, %vm1910
    %vm1918 = vmand %vm1904, %vm1911
    %v1919 = vsel %vm1912, 0.055555556, 0.0
    %v1920 = vsel %vm1913, 0.055555556, 0.0
    %v1921 = vsel %vm1914, 0.055555556, 0.0
    %v1922 = vsel %vm1915, 0.055555556, 0.0
    %v1923 = vsel %vm1916, 0.055555556, 0.0
    %v1924 = vsel %vm1917, 0.055555556, 0.0
    %v1925 = vsel %vm1918, 0.055555556, 0.0
    %v1926 = vadd.f32 %v1883, %v1919
    %v1927 = vadd.f32 %v1884, %v1920
    %v1928 = vadd.f32 %v1885, %v1921
    %v1929 = vadd.f32 %v1886, %v1922
    %v1930 = vadd.f32 %v1887, %v1923
    %v1931 = vadd.f32 %v1888, %v1924
    %v1932 = vadd.f32 %v1889, %v1925
    %vm1933 = vcmp.eq.s32.totalorder %v1846, 2
    %vm1934 = vcmp.ge.s32.totalorder %v1838, 33
    %vm1935 = vcmp.ge.s32.totalorder %v1839, 33
    %vm1936 = vcmp.ge.s32.totalorder %v1840, 33
    %vm1937 = vcmp.ge.s32.totalorder %v1841, 33
    %vm1938 = vcmp.ge.s32.totalorder %v1842, 33
    %vm1939 = vcmp.ge.s32.totalorder %v1843, 33
    %vm1940 = vcmp.ge.s32.totalorder %v1844, 33
    %vm1941 = vmand %vm1933, %vm1934
    %vm1942 = vmand %vm1933, %vm1935
    %vm1943 = vmand %vm1933, %vm1936
    %vm1944 = vmand %vm1933, %vm1937
    %vm1945 = vmand %vm1933, %vm1938
    %vm1946 = vmand %vm1933, %vm1939
    %vm1947 = vmand %vm1933, %vm1940
    %vm1948 = vcmp.lt.s32.totalorder %v1838, 50
    %vm1949 = vcmp.lt.s32.totalorder %v1839, 50
    %vm1950 = vcmp.lt.s32.totalorder %v1840, 50
    %vm1951 = vcmp.lt.s32.totalorder %v1841, 50
    %vm1952 = vcmp.lt.s32.totalorder %v1842, 50
    %vm1953 = vcmp.lt.s32.totalorder %v1843, 50
    %vm1954 = vcmp.lt.s32.totalorder %v1844, 50
    %vm1955 = vmand %vm1941, %vm1948
    %vm1956 = vmand %vm1942, %vm1949
    %vm1957 = vmand %vm1943, %vm1950
    %vm1958 = vmand %vm1944, %vm1951
    %vm1959 = vmand %vm1945, %vm1952
    %vm1960 = vmand %vm1946, %vm1953
    %vm1961 = vmand %vm1947, %vm1954
    %v1962 = vsel %vm1955, 0.05882353, 0.0
    %v1963 = vsel %vm1956, 0.05882353, 0.0
    %v1964 = vsel %vm1957, 0.05882353, 0.0
    %v1965 = vsel %vm1958, 0.05882353, 0.0
    %v1966 = vsel %vm1959, 0.05882353, 0.0
    %v1967 = vsel %vm1960, 0.05882353, 0.0
    %v1968 = vsel %vm1961, 0.05882353, 0.0
    %v1969 = vadd.f32 %v1926, %v1962
    %v1970 = vadd.f32 %v1927, %v1963
    %v1971 = vadd.f32 %v1928, %v1964
    %v1972 = vadd.f32 %v1929, %v1965
    %v1973 = vadd.f32 %v1930, %v1966
    %v1974 = vadd.f32 %v1931, %v1967
    %v1975 = vadd.f32 %v1932, %v1968
    %vm1976 = vcmp.eq.s32.totalorder %v1838, 0
    %vm1977 = vcmp.eq.s32.totalorder %v1839, 0
    %vm1978 = vcmp.ge.s32.totalorder %v1846, 0
    %vm1979 = vmand %vm1976, %vm1978
    %vm1980 = vmand %vm1977, %vm1978
    %vm1981 = vcmp.lt.s32.totalorder %v1846, 7
    %vm1982 = vmand %vm1979, %vm1981
    %vm1983 = vmand %vm1980, %vm1981
    %v1984 = vsel %vm1982, 0.14285715, 0.0
    %v1985 = vsel %vm1983, 0.14285715, 0.0
    %v1986 = vadd.f32 %v1984, 0.0
    %v1987 = vadd.f32 %v1985, 0.0
    %vm1988 = vcmp.eq.s32.totalorder %v1838, 1
    %vm1989 = vcmp.eq.s32.totalorder %v1839, 1
    %vm1990 = vcmp.ge.s32.totalorder %v1846, 6
    %vm1991 = vmand %vm1988, %vm1990
    %vm1992 = vmand %vm1989, %vm1990
    %vm1993 = vcmp.lt.s32.totalorder %v1846, 14
    %vm1994 = vmand %vm1991, %vm1993
    %vm1995 = vmand %vm1992, %vm1993
    %v1996 = vsel %vm1994, 0.125, 0.0
    %v1997 = vsel %vm1995, 0.125, 0.0
    %v1998 = vadd.f32 %v1986, %v1996
    %v1999 = vadd.f32 %v1987, %v1997
    %vm2000 = vcmp.eq.s32.totalorder %v1838, 2
    %vm2001 = vcmp.eq.s32.totalorder %v1839, 2
    %vm2002 = vcmp.ge.s32.totalorder %v1846, 13
    %vm2003 = vmand %vm2000, %vm2002
    %vm2004 = vmand %vm2001, %vm2002
    %vm2005 = vcmp.lt.s32.totalorder %v1846, 20
    %vm2006 = vmand %vm2003, %vm2005
    %vm2007 = vmand %vm2004, %vm2005
    %v2008 = vsel %vm2006, 0.14285715, 0.0
    %v2009 = vsel %vm2007, 0.14285715, 0.0
    %v2010 = vadd.f32 %v1998, %v2008
    %v2011 = vadd.f32 %v1999, %v2009
    %vm2012 = vcmp.eq.s32.totalorder %v1838, 3
    %vm2013 = vcmp.eq.s32.totalorder %v1839, 3
    %vm2014 = vcmp.ge.s32.totalorder %v1846, 20
    %vm2015 = vmand %vm2012, %vm2014
    %vm2016 = vmand %vm2013, %vm2014
    %vm2017 = vcmp.lt.s32.totalorder %v1846, 27
    %vm2018 = vmand %vm2015, %vm2017
    %vm2019 = vmand %vm2016, %vm2017
    %v2020 = vsel %vm2018, 0.14285715, 0.0
    %v2021 = vsel %vm2019, 0.14285715, 0.0
    %v2022 = vadd.f32 %v2010, %v2020
    %v2023 = vadd.f32 %v2011, %v2021
    %vm2024 = vcmp.eq.s32.totalorder %v1838, 4
    %vm2025 = vcmp.eq.s32.totalorder %v1839, 4
    %vm2026 = vcmp.ge.s32.totalorder %v1846, 26
    %vm2027 = vmand %vm2024, %vm2026
    %vm2028 = vmand %vm2025, %vm2026
    %vm2029 = vcmp.lt.s32.totalorder %v1846, 34
    %vm2030 = vmand %vm2027, %vm2029
    %vm2031 = vmand %vm2028, %vm2029
    %v2032 = vsel %vm2030, 0.125, 0.0
    %v2033 = vsel %vm2031, 0.125, 0.0
    %v2034 = vadd.f32 %v2022, %v2032
    %v2035 = vadd.f32 %v2023, %v2033
    %vm2036 = vcmp.eq.s32.totalorder %v1838, 5
    %vm2037 = vcmp.eq.s32.totalorder %v1839, 5
    %vm2038 = vcmp.ge.s32.totalorder %v1846, 33
    %vm2039 = vmand %vm2036, %vm2038
    %vm2040 = vmand %vm2037, %vm2038
    %vm2041 = vcmp.lt.s32.totalorder %v1846, 40
    %vm2042 = vmand %vm2039, %vm2041
    %vm2043 = vmand %vm2040, %vm2041
    %v2044 = vsel %vm2042, 0.14285715, 0.0
    %v2045 = vsel %vm2043, 0.14285715, 0.0
    %v2046 = vadd.f32 %v2034, %v2044
    %v2047 = vadd.f32 %v2035, %v2045
    %vm2048 = vcmp.eq.s32.totalorder %v1838, 6
    %vm2049 = vcmp.eq.s32.totalorder %v1839, 6
    %vm2050 = vcmp.ge.s32.totalorder %v1846, 40
    %vm2051 = vmand %vm2048, %vm2050
    %vm2052 = vmand %vm2049, %vm2050
    %vm2053 = vcmp.lt.s32.totalorder %v1846, 47
    %vm2054 = vmand %vm2051, %vm2053
    %vm2055 = vmand %vm2052, %vm2053
    %v2056 = vsel %vm2054, 0.14285715, 0.0
    %v2057 = vsel %vm2055, 0.14285715, 0.0
    %v2058 = vadd.f32 %v2046, %v2056
    %v2059 = vadd.f32 %v2047, %v2057
    %vm2060 = vcmp.eq.s32.totalorder %v1838, 7
    %vm2061 = vcmp.eq.s32.totalorder %v1839, 7
    %vm2062 = vcmp.ge.s32.totalorder %v1846, 46
    %vm2063 = vmand %vm2060, %vm2062
    %vm2064 = vmand %vm2061, %vm2062
    %vm2065 = vcmp.lt.s32.totalorder %v1846, 54
    %vm2066 = vmand %vm2063, %vm2065
    %vm2067 = vmand %vm2064, %vm2065
    %v2068 = vsel %vm2066, 0.125, 0.0
    %v2069 = vsel %vm2067, 0.125, 0.0
    %v2070 = vadd.f32 %v2058, %v2068
    %v2071 = vadd.f32 %v2059, %v2069
    %vm2072 = vcmp.eq.s32.totalorder %v1838, 8
    %vm2073 = vcmp.eq.s32.totalorder %v1839, 8
    %vm2074 = vcmp.ge.s32.totalorder %v1846, 53
    %vm2075 = vmand %vm2072, %vm2074
    %vm2076 = vmand %vm2073, %vm2074
    %vm2077 = vcmp.lt.s32.totalorder %v1846, 60
    %vm2078 = vmand %vm2075, %vm2077
    %vm2079 = vmand %vm2076, %vm2077
    %v2080 = vsel %vm2078, 0.14285715, 0.0
    %v2081 = vsel %vm2079, 0.14285715, 0.0
    %v2082 = vadd.f32 %v2070, %v2080
    %v2083 = vadd.f32 %v2071, %v2081
    %v2084 = vld [vmem:[#allocation5] sm:$0xff]
    %v2085 = vld [vmem:[#allocation5 + $0x8] sm:$0xff]
    %v2086 = vld [vmem:[#allocation5 + $0x10] sm:$0xff]
    %v2087 = vld [vmem:[#allocation5 + $0x18] sm:$0xff]
    %v2088 = vld [vmem:[#allocation5 + $0x20] sm:$0xff]
    %v2089 = vld [vmem:[#allocation5 + $0x28] sm:$0xff]
    %v2090 = vld [vmem:[#allocation5 + $0x30] sm:$0xff]
    %v2091 = vld [vmem:[#allocation5 + $0x38] sm:$0xf]
    %v2093 = vsel %vm114, %v2084, 0
    %v2096 = vsel %vm114, %v2085, 0
    %v2099 = vsel %vm114, %v2086, 0
    %v2102 = vsel %vm114, %v2087, 0
    %v2105 = vsel %vm114, %v2088, 0
    %v2108 = vsel %vm114, %v2089, 0
    %v2111 = vsel %vm114, %v2090, 0
    %v2114 = vsel %vm114, %v2091, 0
    %vm2116 = vcmask 1041408
    %v2118 = vsel %vm2116, %v1975, 0
    %2120 = vmatprep.subr.mxu0 0.0
    %2121 = vmatpush1.msra.mxu0 0.0
    %2122 = vmatprep.subr.mxu0 0.0
    %2123 = vmatpush1.msra.mxu0 0.0
    %2124 = vmatprep.subr.mxu0 0.0
    %2125 = vmatpush1.msra.mxu0 0.0
    %2126 = vmatprep.subr.mxu0 0.0
    %2127 = vmatpush1.msra.mxu0 0.0
    %2128 = vmatprep.subr.mxu0 0.0
    %2129 = vmatpush1.msra.mxu0 0.0
    %2130 = vmatprep.subr.mxu0 0.0
    %2131 = vmatpush1.msra.mxu0 0.0
    %2132 = vmatprep.subr.mxu0 0.0
    %2133 = vmatpush1.msra.mxu0 0.0
    %2134 = vmatprep.subr.mxu0 0.0
    %2135 = vmatpush1.msra.mxu0 0.0
    %2136 = vmatprep.subr.mxu0 0.0
    %2137 = vmatpush1.msra.mxu0 0.0
    %2138 = vmatprep.subr.mxu0 0.0
    %v2139 = vand.u32 %v2118, 4294901760
    %2140 = vmatpush1.msra.mxu0 %v2139
    %2141 = vmatprep.subr.mxu0 0.0
    %v2142 = vand.u32 %v1974, 4294901760
    %2143 = vmatpush1.msra.mxu0 %v2142
    %2144 = vmatprep.subr.mxu0 0.0
    %v2145 = vand.u32 %v1973, 4294901760
    %2146 = vmatpush1.msra.mxu0 %v2145
    %2147 = vmatprep.subr.mxu0 0.0
    %v2148 = vand.u32 %v1972, 4294901760
    %2149 = vmatpush1.msra.mxu0 %v2148
    %2150 = vmatprep.subr.mxu0 0.0
    %v2151 = vand.u32 %v1971, 4294901760
    %2152 = vmatpush1.msra.mxu0 %v2151
    %2153 = vmatprep.subr.mxu0 0.0
    %v2154 = vand.u32 %v1970, 4294901760
    %2155 = vmatpush1.msra.mxu0 %v2154
    %2156 = vmatprep.subr.mxu0 0.0
    %v2157 = vand.u32 %v1969, 4294901760
    %2158 = vmatpush1.msra.mxu0 %v2157
    %2159 = vmatprep.subr.mxu0 0.0
    %2160 = vmatpush2.msra.mxu0 0.0
    %2161 = vmatprep.subr.mxu0 0.0
    %2162 = vmatpush2.msra.mxu0 0.0
    %2163 = vmatprep.subr.mxu0 0.0
    %2164 = vmatpush2.msra.mxu0 0.0
    %2165 = vmatprep.subr.mxu0 0.0
    %2166 = vmatpush2.msra.mxu0 0.0
    %2167 = vmatprep.subr.mxu0 0.0
    %2168 = vmatpush2.msra.mxu0 0.0
    %2169 = vmatprep.subr.mxu0 0.0
    %2170 = vmatpush2.msra.mxu0 0.0
    %2171 = vmatprep.subr.mxu0 0.0
    %2172 = vmatpush2.msra.mxu0 0.0
    %2173 = vmatprep.subr.mxu0 0.0
    %2174 = vmatpush2.msra.mxu0 0.0
    %2175 = vmatprep.subr.mxu0 0.0
    %2176 = vmatpush2.msra.mxu0 0.0
    %2177 = vmatprep.subr.mxu0 0.0
    %2178 = vmatpush2.msra.mxu0 0.0
    %2179 = vmatprep.subr.mxu0 0.0
    %2180 = vmatpush2.msra.mxu0 0.0
    %2181 = vmatprep.subr.mxu0 0.0
    %2182 = vmatpush2.msra.mxu0 0.0
    %2183 = vmatprep.subr.mxu0 0.0
    %2184 = vmatpush2.msra.mxu0 0.0
    %2185 = vmatprep.subr.mxu0 0.0
    %2186 = vmatpush2.msra.mxu0 0.0
    %2187 = vmatprep.subr.mxu0 0.0
    %2188 = vmatpush2.msra.mxu0 0.0
    %2189 = vmatprep.subr.mxu0 0.0
    %2190 = vmatpush2.msra.mxu0 0.0
    %2191 = vmatprep.mubr.f32.mxu0 0.0
    %v2192 = vand.u32 %v2093, 4294901760
    %v2193 = vsub.f32 %v2093, %v2192
    %v2194 = vand.u32 %v2193, 4294901760
    %v2195 = vsub.f32 %v2193, %v2194
    %v2196 = vand.u32 %v2195, 4294901760
    %2197 = vmatmul.mubr.f32.gmra.mxu0 %v2196
    %v2198 = vpop.f32.mrf.mxu0
    %v2199 = vadd.f32 0.0, %v2198
    %v2200 = vpop.f32.mrf.mxu0
    %2201 = vmatprep.mubr.f32.mxu0 0.0
    %v2202 = vand.u32 %v2096, 4294901760
    %v2203 = vsub.f32 %v2096, %v2202
    %v2204 = vand.u32 %v2203, 4294901760
    %v2205 = vsub.f32 %v2203, %v2204
    %v2206 = vand.u32 %v2205, 4294901760
    %2207 = vmatmul.mubr.f32.gmra.mxu0 %v2206
    %v2208 = vpop.f32.mrf.mxu0
    %v2209 = vadd.f32 0.0, %v2208
    %v2210 = vpop.f32.mrf.mxu0
    %2211 = vmatprep.mubr.f32.mxu0 0.0
    %v2212 = vand.u32 %v2099, 4294901760
    %v2213 = vsub.f32 %v2099, %v2212
    %v2214 = vand.u32 %v2213, 4294901760
    %v2215 = vsub.f32 %v2213, %v2214
    %v2216 = vand.u32 %v2215, 4294901760
    %2217 = vmatmul.mubr.f32.gmra.mxu0 %v2216
    %v2218 = vpop.f32.mrf.mxu0
    %v2219 = vadd.f32 0.0, %v2218
    %v2220 = vpop.f32.mrf.mxu0
    %2221 = vmatprep.mubr.f32.mxu0 0.0
    %v2222 = vand.u32 %v2102, 4294901760
    %v2223 = vsub.f32 %v2102, %v2222
    %v2224 = vand.u32 %v2223, 4294901760
    %v2225 = vsub.f32 %v2223, %v2224
    %v2226 = vand.u32 %v2225, 4294901760
    %2227 = vmatmul.mubr.f32.gmra.mxu0 %v2226
    %v2228 = vpop.f32.mrf.mxu0
    %v2229 = vadd.f32 0.0, %v2228
    %v2230 = vpop.f32.mrf.mxu0
    %2231 = vmatprep.mubr.f32.mxu0 0.0
    %v2232 = vand.u32 %v2105, 4294901760
    %v2233 = vsub.f32 %v2105, %v2232
    %v2234 = vand.u32 %v2233, 4294901760
    %v2235 = vsub.f32 %v2233, %v2234
    %v2236 = vand.u32 %v2235, 4294901760
    %2237 = vmatmul.mubr.f32.gmra.mxu0 %v2236
    %v2238 = vpop.f32.mrf.mxu0
    %v2239 = vadd.f32 0.0, %v2238
    %v2240 = vpop.f32.mrf.mxu0
    %2241 = vmatprep.mubr.f32.mxu0 0.0
    %v2242 = vand.u32 %v2108, 4294901760
    %v2243 = vsub.f32 %v2108, %v2242
    %v2244 = vand.u32 %v2243, 4294901760
    %v2245 = vsub.f32 %v2243, %v2244
    %v2246 = vand.u32 %v2245, 4294901760
    %2247 = vmatmul.mubr.f32.gmra.mxu0 %v2246
    %v2248 = vpop.f32.mrf.mxu0
    %v2249 = vadd.f32 0.0, %v2248
    %v2250 = vpop.f32.mrf.mxu0
    %2251 = vmatprep.mubr.f32.mxu0 0.0
    %v2252 = vand.u32 %v2111, 4294901760
    %v2253 = vsub.f32 %v2111, %v2252
    %v2254 = vand.u32 %v2253, 4294901760
    %v2255 = vsub.f32 %v2253, %v2254
    %v2256 = vand.u32 %v2255, 4294901760
    %2257 = vmatmul.mubr.f32.gmra.mxu0 %v2256
    %v2258 = vpop.f32.mrf.mxu0
    %v2259 = vadd.f32 0.0, %v2258
    %v2260 = vpop.f32.mrf.mxu0
    %2261 = vmatprep.mubr.f32.mxu0 0.0
    %v2262 = vand.u32 %v2114, 4294901760
    %v2263 = vsub.f32 %v2114, %v2262
    %v2264 = vand.u32 %v2263, 4294901760
    %v2265 = vsub.f32 %v2263, %v2264
    %v2266 = vand.u32 %v2265, 4294901760
    %2267 = vmatmul.mubr.f32.gmra.mxu0 %v2266
    %v2268 = vpop.f32.mrf.mxu0
    %v2269 = vadd.f32 0.0, %v2268
    %v2270 = vpop.f32.mrf.mxu0
    %2271 = vdwg.mxu0
    %2272 = vmatprep.subr.mxu0 0.0
    %2273 = vmatpush1.msra.mxu0 0.0
    %2274 = vmatprep.subr.mxu0 0.0
    %2275 = vmatpush1.msra.mxu0 0.0
    %2276 = vmatprep.subr.mxu0 0.0
    %2277 = vmatpush1.msra.mxu0 0.0
    %2278 = vmatprep.subr.mxu0 0.0
    %2279 = vmatpush1.msra.mxu0 0.0
    %2280 = vmatprep.subr.mxu0 0.0
    %2281 = vmatpush1.msra.mxu0 0.0
    %2282 = vmatprep.subr.mxu0 0.0
    %2283 = vmatpush1.msra.mxu0 0.0
    %2284 = vmatprep.subr.mxu0 0.0
    %2285 = vmatpush1.msra.mxu0 0.0
    %2286 = vmatprep.subr.mxu0 0.0
    %2287 = vmatpush1.msra.mxu0 0.0
    %2288 = vmatprep.subr.mxu0 0.0
    %2289 = vmatpush1.msra.mxu0 0.0
    %2290 = vmatprep.subr.mxu0 0.0
    %v2291 = vand.u32 %v2118, 4294901760
    %v2292 = vsub.f32 %v2118, %v2291
    %v2293 = vand.u32 %v2292, 4294901760
    %v2294 = vsub.f32 %v2292, %v2293
    %v2295 = vand.u32 %v2294, 4294901760
    %2296 = vmatpush1.msra.mxu0 %v2295
    %2297 = vmatprep.subr.mxu0 0.0
    %v2298 = vand.u32 %v1974, 4294901760
    %v2299 = vsub.f32 %v1974, %v2298
    %v2300 = vand.u32 %v2299, 4294901760
    %v2301 = vsub.f32 %v2299, %v2300
    %v2302 = vand.u32 %v2301, 4294901760
    %2303 = vmatpush1.msra.mxu0 %v2302
    %2304 = vmatprep.subr.mxu0 0.0
    %v2305 = vand.u32 %v1973, 4294901760
    %v2306 = vsub.f32 %v1973, %v2305
    %v2307 = vand.u32 %v2306, 4294901760
    %v2308 = vsub.f32 %v2306, %v2307
    %v2309 = vand.u32 %v2308, 4294901760
    %2310 = vmatpush1.msra.mxu0 %v2309
    %2311 = vmatprep.subr.mxu0 0.0
    %v2312 = vand.u32 %v1972, 4294901760
    %v2313 = vsub.f32 %v1972, %v2312
    %v2314 = vand.u32 %v2313, 4294901760
    %v2315 = vsub.f32 %v2313, %v2314
    %v2316 = vand.u32 %v2315, 4294901760
    %2317 = vmatpush1.msra.mxu0 %v2316
    %2318 = vmatprep.subr.mxu0 0.0
    %v2319 = vand.u32 %v1971, 4294901760
    %v2320 = vsub.f32 %v1971, %v2319
    %v2321 = vand.u32 %v2320, 4294901760
    %v2322 = vsub.f32 %v2320, %v2321
    %v2323 = vand.u32 %v2322, 4294901760
    %2324 = vmatpush1.msra.mxu0 %v2323
    %2325 = vmatprep.subr.mxu0 0.0
    %v2326 = vand.u32 %v1970, 4294901760
    %v2327 = vsub.f32 %v1970, %v2326
    %v2328 = vand.u32 %v2327, 4294901760
    %v2329 = vsub.f32 %v2327, %v2328
    %v2330 = vand.u32 %v2329, 4294901760
    %2331 = vmatpush1.msra.mxu0 %v2330
    %2332 = vmatprep.subr.mxu0 0.0
    %v2333 = vand.u32 %v1969, 4294901760
    %v2334 = vsub.f32 %v1969, %v2333
    %v2335 = vand.u32 %v2334, 4294901760
    %v2336 = vsub.f32 %v2334, %v2335
    %v2337 = vand.u32 %v2336, 4294901760
    %2338 = vmatpush1.msra.mxu0 %v2337
    %2339 = vmatprep.subr.mxu0 0.0
    %2340 = vmatpush2.msra.mxu0 0.0
    %2341 = vmatprep.subr.mxu0 0.0
    %2342 = vmatpush2.msra.mxu0 0.0
    %2343 = vmatprep.subr.mxu0 0.0
    %2344 = vmatpush2.msra.mxu0 0.0
    %2345 = vmatprep.subr.mxu0 0.0
    %2346 = vmatpush2.msra.mxu0 0.0
    %2347 = vmatprep.subr.mxu0 0.0
    %2348 = vmatpush2.msra.mxu0 0.0
    %2349 = vmatprep.subr.mxu0 0.0
    %2350 = vmatpush2.msra.mxu0 0.0
    %2351 = vmatprep.subr.mxu0 0.0
    %2352 = vmatpush2.msra.mxu0 0.0
    %2353 = vmatprep.subr.mxu0 0.0
    %2354 = vmatpush2.msra.mxu0 0.0
    %2355 = vmatprep.subr.mxu0 0.0
    %2356 = vmatpush2.msra.mxu0 0.0
    %2357 = vmatprep.subr.mxu0 0.0
    %2358 = vmatpush2.msra.mxu0 0.0
    %2359 = vmatprep.subr.mxu0 0.0
    %2360 = vmatpush2.msra.mxu0 0.0
    %2361 = vmatprep.subr.mxu0 0.0
    %2362 = vmatpush2.msra.mxu0 0.0
    %2363 = vmatprep.subr.mxu0 0.0
    %2364 = vmatpush2.msra.mxu0 0.0
    %2365 = vmatprep.subr.mxu0 0.0
    %2366 = vmatpush2.msra.mxu0 0.0
    %2367 = vmatprep.subr.mxu0 0.0
    %2368 = vmatpush2.msra.mxu0 0.0
    %2369 = vmatprep.subr.mxu0 0.0
    %2370 = vmatpush2.msra.mxu0 0.0
    %2371 = vmatprep.mubr.f32.mxu0 0.0
    %v2372 = vand.u32 %v2093, 4294901760
    %2373 = vmatmul.mubr.f32.gmra.mxu0 %v2372
    %v2374 = vpop.f32.mrf.mxu0
    %v2375 = vadd.f32 %v2199, %v2374
    %v2376 = vpop.f32.mrf.mxu0
    %2377 = vmatprep.mubr.f32.mxu0 0.0
    %v2378 = vand.u32 %v2096, 4294901760
    %2379 = vmatmul.mubr.f32.gmra.mxu0 %v2378
    %v2380 = vpop.f32.mrf.mxu0
    %v2381 = vadd.f32 %v2209, %v2380
    %v2382 = vpop.f32.mrf.mxu0
    %2383 = vmatprep.mubr.f32.mxu0 0.0
    %v2384 = vand.u32 %v2099, 4294901760
    %2385 = vmatmul.mubr.f32.gmra.mxu0 %v2384
    %v2386 = vpop.f32.mrf.mxu0
    %v2387 = vadd.f32 %v2219, %v2386
    %v2388 = vpop.f32.mrf.mxu0
    %2389 = vmatprep.mubr.f32.mxu0 0.0
    %v2390 = vand.u32 %v2102, 4294901760
    %2391 = vmatmul.mubr.f32.gmra.mxu0 %v2390
    %v2392 = vpop.f32.mrf.mxu0
    %v2393 = vadd.f32 %v2229, %v2392
    %v2394 = vpop.f32.mrf.mxu0
    %2395 = vmatprep.mubr.f32.mxu0 0.0
    %v2396 = vand.u32 %v2105, 4294901760
    %2397 = vmatmul.mubr.f32.gmra.mxu0 %v2396
    %v2398 = vpop.f32.mrf.mxu0
    %v2399 = vadd.f32 %v2239, %v2398
    %v2400 = vpop.f32.mrf.mxu0
    %2401 = vmatprep.mubr.f32.mxu0 0.0
    %v2402 = vand.u32 %v2108, 4294901760
    %2403 = vmatmul.mubr.f32.gmra.mxu0 %v2402
    %v2404 = vpop.f32.mrf.mxu0
    %v2405 = vadd.f32 %v2249, %v2404
    %v2406 = vpop.f32.mrf.mxu0
    %2407 = vmatprep.mubr.f32.mxu0 0.0
    %v2408 = vand.u32 %v2111, 4294901760
    %2409 = vmatmul.mubr.f32.gmra.mxu0 %v2408
    %v2410 = vpop.f32.mrf.mxu0
    %v2411 = vadd.f32 %v2259, %v2410
    %v2412 = vpop.f32.mrf.mxu0
    %2413 = vmatprep.mubr.f32.mxu0 0.0
    %v2414 = vand.u32 %v2114, 4294901760
    %2415 = vmatmul.mubr.f32.gmra.mxu0 %v2414
    %v2416 = vpop.f32.mrf.mxu0
    %v2417 = vadd.f32 %v2269, %v2416
    %v2418 = vpop.f32.mrf.mxu0
    %2419 = vdwg.mxu0
    %2420 = vmatprep.subr.mxu0 0.0
    %2421 = vmatpush1.msra.mxu0 0.0
    %2422 = vmatprep.subr.mxu0 0.0
    %2423 = vmatpush1.msra.mxu0 0.0
    %2424 = vmatprep.subr.mxu0 0.0
    %2425 = vmatpush1.msra.mxu0 0.0
    %2426 = vmatprep.subr.mxu0 0.0
    %2427 = vmatpush1.msra.mxu0 0.0
    %2428 = vmatprep.subr.mxu0 0.0
    %2429 = vmatpush1.msra.mxu0 0.0
    %2430 = vmatprep.subr.mxu0 0.0
    %2431 = vmatpush1.msra.mxu0 0.0
    %2432 = vmatprep.subr.mxu0 0.0
    %2433 = vmatpush1.msra.mxu0 0.0
    %2434 = vmatprep.subr.mxu0 0.0
    %2435 = vmatpush1.msra.mxu0 0.0
    %2436 = vmatprep.subr.mxu0 0.0
    %2437 = vmatpush1.msra.mxu0 0.0
    %2438 = vmatprep.subr.mxu0 0.0
    %v2439 = vand.u32 %v2118, 4294901760
    %v2440 = vsub.f32 %v2118, %v2439
    %2441 = vmatpush1.msra.mxu0 %v2440
    %2442 = vmatprep.subr.mxu0 0.0
    %v2443 = vand.u32 %v1974, 4294901760
    %v2444 = vsub.f32 %v1974, %v2443
    %2445 = vmatpush1.msra.mxu0 %v2444
    %2446 = vmatprep.subr.mxu0 0.0
    %v2447 = vand.u32 %v1973, 4294901760
    %v2448 = vsub.f32 %v1973, %v2447
    %2449 = vmatpush1.msra.mxu0 %v2448
    %2450 = vmatprep.subr.mxu0 0.0
    %v2451 = vand.u32 %v1972, 4294901760
    %v2452 = vsub.f32 %v1972, %v2451
    %2453 = vmatpush1.msra.mxu0 %v2452
    %2454 = vmatprep.subr.mxu0 0.0
    %v2455 = vand.u32 %v1971, 4294901760
    %v2456 = vsub.f32 %v1971, %v2455
    %2457 = vmatpush1.msra.mxu0 %v2456
    %2458 = vmatprep.subr.mxu0 0.0
    %v2459 = vand.u32 %v1970, 4294901760
    %v2460 = vsub.f32 %v1970, %v2459
    %2461 = vmatpush1.msra.mxu0 %v2460
    %2462 = vmatprep.subr.mxu0 0.0
    %v2463 = vand.u32 %v1969, 4294901760
    %v2464 = vsub.f32 %v1969, %v2463
    %2465 = vmatpush1.msra.mxu0 %v2464
    %2466 = vmatprep.subr.mxu0 0.0
    %2467 = vmatpush2.msra.mxu0 0.0
    %2468 = vmatprep.subr.mxu0 0.0
    %2469 = vmatpush2.msra.mxu0 0.0
    %2470 = vmatprep.subr.mxu0 0.0
    %2471 = vmatpush2.msra.mxu0 0.0
    %2472 = vmatprep.subr.mxu0 0.0
    %2473 = vmatpush2.msra.mxu0 0.0
    %2474 = vmatprep.subr.mxu0 0.0
    %2475 = vmatpush2.msra.mxu0 0.0
    %2476 = vmatprep.subr.mxu0 0.0
    %2477 = vmatpush2.msra.mxu0 0.0
    %2478 = vmatprep.subr.mxu0 0.0
    %2479 = vmatpush2.msra.mxu0 0.0
    %2480 = vmatprep.subr.mxu0 0.0
    %2481 = vmatpush2.msra.mxu0 0.0
    %2482 = vmatprep.subr.mxu0 0.0
    %2483 = vmatpush2.msra.mxu0 0.0
    %2484 = vmatprep.subr.mxu0 0.0
    %2485 = vmatpush2.msra.mxu0 0.0
    %2486 = vmatprep.subr.mxu0 0.0
    %2487 = vmatpush2.msra.mxu0 0.0
    %2488 = vmatprep.subr.mxu0 0.0
    %2489 = vmatpush2.msra.mxu0 0.0
    %2490 = vmatprep.subr.mxu0 0.0
    %2491 = vmatpush2.msra.mxu0 0.0
    %2492 = vmatprep.subr.mxu0 0.0
    %2493 = vmatpush2.msra.mxu0 0.0
    %2494 = vmatprep.subr.mxu0 0.0
    %2495 = vmatpush2.msra.mxu0 0.0
    %2496 = vmatprep.subr.mxu0 0.0
    %2497 = vmatpush2.msra.mxu0 0.0
    %2498 = vmatprep.mubr.f32.mxu0 0.0
    %v2499 = vand.u32 %v2093, 4294901760
    %v2500 = vsub.f32 %v2093, %v2499
    %2501 = vmatmul.mubr.f32.gmra.mxu0 %v2500
    %v2502 = vpop.f32.mrf.mxu0
    %v2503 = vadd.f32 %v2375, %v2502
    %v2504 = vpop.f32.mrf.mxu0
    %2505 = vmatprep.mubr.f32.mxu0 0.0
    %v2506 = vand.u32 %v2096, 4294901760
    %v2507 = vsub.f32 %v2096, %v2506
    %2508 = vmatmul.mubr.f32.gmra.mxu0 %v2507
    %v2509 = vpop.f32.mrf.mxu0
    %v2510 = vadd.f32 %v2381, %v2509
    %v2511 = vpop.f32.mrf.mxu0
    %2512 = vmatprep.mubr.f32.mxu0 0.0
    %v2513 = vand.u32 %v2099, 4294901760
    %v2514 = vsub.f32 %v2099, %v2513
    %2515 = vmatmul.mubr.f32.gmra.mxu0 %v2514
    %v2516 = vpop.f32.mrf.mxu0
    %v2517 = vadd.f32 %v2387, %v2516
    %v2518 = vpop.f32.mrf.mxu0
    %2519 = vmatprep.mubr.f32.mxu0 0.0
    %v2520 = vand.u32 %v2102, 4294901760
    %v2521 = vsub.f32 %v2102, %v2520
    %2522 = vmatmul.mubr.f32.gmra.mxu0 %v2521
    %v2523 = vpop.f32.mrf.mxu0
    %v2524 = vadd.f32 %v2393, %v2523
    %v2525 = vpop.f32.mrf.mxu0
    %2526 = vmatprep.mubr.f32.mxu0 0.0
    %v2527 = vand.u32 %v2105, 4294901760
    %v2528 = vsub.f32 %v2105, %v2527
    %2529 = vmatmul.mubr.f32.gmra.mxu0 %v2528
    %v2530 = vpop.f32.mrf.mxu0
    %v2531 = vadd.f32 %v2399, %v2530
    %v2532 = vpop.f32.mrf.mxu0
    %2533 = vmatprep.mubr.f32.mxu0 0.0
    %v2534 = vand.u32 %v2108, 4294901760
    %v2535 = vsub.f32 %v2108, %v2534
    %2536 = vmatmul.mubr.f32.gmra.mxu0 %v2535
    %v2537 = vpop.f32.mrf.mxu0
    %v2538 = vadd.f32 %v2405, %v2537
    %v2539 = vpop.f32.mrf.mxu0
    %2540 = vmatprep.mubr.f32.mxu0 0.0
    %v2541 = vand.u32 %v2111, 4294901760
    %v2542 = vsub.f32 %v2111, %v2541
    %2543 = vmatmul.mubr.f32.gmra.mxu0 %v2542
    %v2544 = vpop.f32.mrf.mxu0
    %v2545 = vadd.f32 %v2411, %v2544
    %v2546 = vpop.f32.mrf.mxu0
    %2547 = vmatprep.mubr.f32.mxu0 0.0
    %v2548 = vand.u32 %v2114, 4294901760
    %v2549 = vsub.f32 %v2114, %v2548
    %2550 = vmatmul.mubr.f32.gmra.mxu0 %v2549
    %v2551 = vpop.f32.mrf.mxu0
    %v2552 = vadd.f32 %v2417, %v2551
    %v2553 = vpop.f32.mrf.mxu0
    %2554 = vdwg.mxu0
    %2555 = vmatprep.subr.mxu0 0.0
    %2556 = vmatpush1.msra.mxu0 0.0
    %2557 = vmatprep.subr.mxu0 0.0
    %2558 = vmatpush1.msra.mxu0 0.0
    %2559 = vmatprep.subr.mxu0 0.0
    %2560 = vmatpush1.msra.mxu0 0.0
    %2561 = vmatprep.subr.mxu0 0.0
    %2562 = vmatpush1.msra.mxu0 0.0
    %2563 = vmatprep.subr.mxu0 0.0
    %2564 = vmatpush1.msra.mxu0 0.0
    %2565 = vmatprep.subr.mxu0 0.0
    %2566 = vmatpush1.msra.mxu0 0.0
    %2567 = vmatprep.subr.mxu0 0.0
    %2568 = vmatpush1.msra.mxu0 0.0
    %2569 = vmatprep.subr.mxu0 0.0
    %2570 = vmatpush1.msra.mxu0 0.0
    %2571 = vmatprep.subr.mxu0 0.0
    %2572 = vmatpush1.msra.mxu0 0.0
    %2573 = vmatprep.subr.mxu0 0.0
    %v2574 = vand.u32 %v2118, 4294901760
    %2575 = vmatpush1.msra.mxu0 %v2574
    %2576 = vmatprep.subr.mxu0 0.0
    %v2577 = vand.u32 %v1974, 4294901760
    %2578 = vmatpush1.msra.mxu0 %v2577
    %2579 = vmatprep.subr.mxu0 0.0
    %v2580 = vand.u32 %v1973, 4294901760
    %2581 = vmatpush1.msra.mxu0 %v2580
    %2582 = vmatprep.subr.mxu0 0.0
    %v2583 = vand.u32 %v1972, 4294901760
    %2584 = vmatpush1.msra.mxu0 %v2583
    %2585 = vmatprep.subr.mxu0 0.0
    %v2586 = vand.u32 %v1971, 4294901760
    %2587 = vmatpush1.msra.mxu0 %v2586
    %2588 = vmatprep.subr.mxu0 0.0
    %v2589 = vand.u32 %v1970, 4294901760
    %2590 = vmatpush1.msra.mxu0 %v2589
    %2591 = vmatprep.subr.mxu0 0.0
    %v2592 = vand.u32 %v1969, 4294901760
    %2593 = vmatpush1.msra.mxu0 %v2592
    %2594 = vmatprep.subr.mxu0 0.0
    %2595 = vmatpush2.msra.mxu0 0.0
    %2596 = vmatprep.subr.mxu0 0.0
    %2597 = vmatpush2.msra.mxu0 0.0
    %2598 = vmatprep.subr.mxu0 0.0
    %2599 = vmatpush2.msra.mxu0 0.0
    %2600 = vmatprep.subr.mxu0 0.0
    %2601 = vmatpush2.msra.mxu0 0.0
    %2602 = vmatprep.subr.mxu0 0.0
    %2603 = vmatpush2.msra.mxu0 0.0
    %2604 = vmatprep.subr.mxu0 0.0
    %2605 = vmatpush2.msra.mxu0 0.0
    %2606 = vmatprep.subr.mxu0 0.0
    %2607 = vmatpush2.msra.mxu0 0.0
    %2608 = vmatprep.subr.mxu0 0.0
    %2609 = vmatpush2.msra.mxu0 0.0
    %2610 = vmatprep.subr.mxu0 0.0
    %2611 = vmatpush2.msra.mxu0 0.0
    %2612 = vmatprep.subr.mxu0 0.0
    %2613 = vmatpush2.msra.mxu0 0.0
    %2614 = vmatprep.subr.mxu0 0.0
    %2615 = vmatpush2.msra.mxu0 0.0
    %2616 = vmatprep.subr.mxu0 0.0
    %2617 = vmatpush2.msra.mxu0 0.0
    %2618 = vmatprep.subr.mxu0 0.0
    %2619 = vmatpush2.msra.mxu0 0.0
    %2620 = vmatprep.subr.mxu0 0.0
    %2621 = vmatpush2.msra.mxu0 0.0
    %2622 = vmatprep.subr.mxu0 0.0
    %2623 = vmatpush2.msra.mxu0 0.0
    %2624 = vmatprep.subr.mxu0 0.0
    %2625 = vmatpush2.msra.mxu0 0.0
    %2626 = vmatprep.mubr.f32.mxu0 0.0
    %v2627 = vand.u32 %v2093, 4294901760
    %v2628 = vsub.f32 %v2093, %v2627
    %v2629 = vand.u32 %v2628, 4294901760
    %2630 = vmatmul.mubr.f32.gmra.mxu0 %v2629
    %v2631 = vpop.f32.mrf.mxu0
    %v2632 = vadd.f32 %v2503, %v2631
    %v2633 = vpop.f32.mrf.mxu0
    %2634 = vmatprep.mubr.f32.mxu0 0.0
    %v2635 = vand.u32 %v2096, 4294901760
    %v2636 = vsub.f32 %v2096, %v2635
    %v2637 = vand.u32 %v2636, 4294901760
    %2638 = vmatmul.mubr.f32.gmra.mxu0 %v2637
    %v2639 = vpop.f32.mrf.mxu0
    %v2640 = vadd.f32 %v2510, %v2639
    %v2641 = vpop.f32.mrf.mxu0
    %2642 = vmatprep.mubr.f32.mxu0 0.0
    %v2643 = vand.u32 %v2099, 4294901760
    %v2644 = vsub.f32 %v2099, %v2643
    %v2645 = vand.u32 %v2644, 4294901760
    %2646 = vmatmul.mubr.f32.gmra.mxu0 %v2645
    %v2647 = vpop.f32.mrf.mxu0
    %v2648 = vadd.f32 %v2517, %v2647
    %v2649 = vpop.f32.mrf.mxu0
    %2650 = vmatprep.mubr.f32.mxu0 0.0
    %v2651 = vand.u32 %v2102, 4294901760
    %v2652 = vsub.f32 %v2102, %v2651
    %v2653 = vand.u32 %v2652, 4294901760
    %2654 = vmatmul.mubr.f32.gmra.mxu0 %v2653
    %v2655 = vpop.f32.mrf.mxu0
    %v2656 = vadd.f32 %v2524, %v2655
    %v2657 = vpop.f32.mrf.mxu0
    %2658 = vmatprep.mubr.f32.mxu0 0.0
    %v2659 = vand.u32 %v2105, 4294901760
    %v2660 = vsub.f32 %v2105, %v2659
    %v2661 = vand.u32 %v2660, 4294901760
    %2662 = vmatmul.mubr.f32.gmra.mxu0 %v2661
    %v2663 = vpop.f32.mrf.mxu0
    %v2664 = vadd.f32 %v2531, %v2663
    %v2665 = vpop.f32.mrf.mxu0
    %2666 = vmatprep.mubr.f32.mxu0 0.0
    %v2667 = vand.u32 %v2108, 4294901760
    %v2668 = vsub.f32 %v2108, %v2667
    %v2669 = vand.u32 %v2668, 4294901760
    %2670 = vmatmul.mubr.f32.gmra.mxu0 %v2669
    %v2671 = vpop.f32.mrf.mxu0
    %v2672 = vadd.f32 %v2538, %v2671
    %v2673 = vpop.f32.mrf.mxu0
    %2674 = vmatprep.mubr.f32.mxu0 0.0
    %v2675 = vand.u32 %v2111, 4294901760
    %v2676 = vsub.f32 %v2111, %v2675
    %v2677 = vand.u32 %v2676, 4294901760
    %2678 = vmatmul.mubr.f32.gmra.mxu0 %v2677
    %v2679 = vpop.f32.mrf.mxu0
    %v2680 = vadd.f32 %v2545, %v2679
    %v2681 = vpop.f32.mrf.mxu0
    %2682 = vmatprep.mubr.f32.mxu0 0.0
    %v2683 = vand.u32 %v2114, 4294901760
    %v2684 = vsub.f32 %v2114, %v2683
    %v2685 = vand.u32 %v2684, 4294901760
    %2686 = vmatmul.mubr.f32.gmra.mxu0 %v2685
    %v2687 = vpop.f32.mrf.mxu0
    %v2688 = vadd.f32 %v2552, %v2687
    %v2689 = vpop.f32.mrf.mxu0
    %2690 = vdwg.mxu0
    %2691 = vmatprep.subr.mxu0 0.0
    %2692 = vmatpush1.msra.mxu0 0.0
    %2693 = vmatprep.subr.mxu0 0.0
    %2694 = vmatpush1.msra.mxu0 0.0
    %2695 = vmatprep.subr.mxu0 0.0
    %2696 = vmatpush1.msra.mxu0 0.0
    %2697 = vmatprep.subr.mxu0 0.0
    %2698 = vmatpush1.msra.mxu0 0.0
    %2699 = vmatprep.subr.mxu0 0.0
    %2700 = vmatpush1.msra.mxu0 0.0
    %2701 = vmatprep.subr.mxu0 0.0
    %2702 = vmatpush1.msra.mxu0 0.0
    %2703 = vmatprep.subr.mxu0 0.0
    %2704 = vmatpush1.msra.mxu0 0.0
    %2705 = vmatprep.subr.mxu0 0.0
    %2706 = vmatpush1.msra.mxu0 0.0
    %2707 = vmatprep.subr.mxu0 0.0
    %2708 = vmatpush1.msra.mxu0 0.0
    %2709 = vmatprep.subr.mxu0 0.0
    %v2710 = vand.u32 %v2118, 4294901760
    %v2711 = vsub.f32 %v2118, %v2710
    %v2712 = vand.u32 %v2711, 4294901760
    %2713 = vmatpush1.msra.mxu0 %v2712
    %2714 = vmatprep.subr.mxu0 0.0
    %v2715 = vand.u32 %v1974, 4294901760
    %v2716 = vsub.f32 %v1974, %v2715
    %v2717 = vand.u32 %v2716, 4294901760
    %2718 = vmatpush1.msra.mxu0 %v2717
    %2719 = vmatprep.subr.mxu0 0.0
    %v2720 = vand.u32 %v1973, 4294901760
    %v2721 = vsub.f32 %v1973, %v2720
    %v2722 = vand.u32 %v2721, 4294901760
    %2723 = vmatpush1.msra.mxu0 %v2722
    %2724 = vmatprep.subr.mxu0 0.0
    %v2725 = vand.u32 %v1972, 4294901760
    %v2726 = vsub.f32 %v1972, %v2725
    %v2727 = vand.u32 %v2726, 4294901760
    %2728 = vmatpush1.msra.mxu0 %v2727
    %2729 = vmatprep.subr.mxu0 0.0
    %v2730 = vand.u32 %v1971, 4294901760
    %v2731 = vsub.f32 %v1971, %v2730
    %v2732 = vand.u32 %v2731, 4294901760
    %2733 = vmatpush1.msra.mxu0 %v2732
    %2734 = vmatprep.subr.mxu0 0.0
    %v2735 = vand.u32 %v1970, 4294901760
    %v2736 = vsub.f32 %v1970, %v2735
    %v2737 = vand.u32 %v2736, 4294901760
    %2738 = vmatpush1.msra.mxu0 %v2737
    %2739 = vmatprep.subr.mxu0 0.0
    %v2740 = vand.u32 %v1969, 4294901760
    %v2741 = vsub.f32 %v1969, %v2740
    %v2742 = vand.u32 %v2741, 4294901760
    %2743 = vmatpush1.msra.mxu0 %v2742
    %2744 = vmatprep.subr.mxu0 0.0
    %2745 = vmatpush2.msra.mxu0 0.0
    %2746 = vmatprep.subr.mxu0 0.0
    %2747 = vmatpush2.msra.mxu0 0.0
    %2748 = vmatprep.subr.mxu0 0.0
    %2749 = vmatpush2.msra.mxu0 0.0
    %2750 = vmatprep.subr.mxu0 0.0
    %2751 = vmatpush2.msra.mxu0 0.0
    %2752 = vmatprep.subr.mxu0 0.0
    %2753 = vmatpush2.msra.mxu0 0.0
    %2754 = vmatprep.subr.mxu0 0.0
    %2755 = vmatpush2.msra.mxu0 0.0
    %2756 = vmatprep.subr.mxu0 0.0
    %2757 = vmatpush2.msra.mxu0 0.0
    %2758 = vmatprep.subr.mxu0 0.0
    %2759 = vmatpush2.msra.mxu0 0.0
    %2760 = vmatprep.subr.mxu0 0.0
    %2761 = vmatpush2.msra.mxu0 0.0
    %2762 = vmatprep.subr.mxu0 0.0
    %2763 = vmatpush2.msra.mxu0 0.0
    %2764 = vmatprep.subr.mxu0 0.0
    %2765 = vmatpush2.msra.mxu0 0.0
    %2766 = vmatprep.subr.mxu0 0.0
    %2767 = vmatpush2.msra.mxu0 0.0
    %2768 = vmatprep.subr.mxu0 0.0
    %2769 = vmatpush2.msra.mxu0 0.0
    %2770 = vmatprep.subr.mxu0 0.0
    %2771 = vmatpush2.msra.mxu0 0.0
    %2772 = vmatprep.subr.mxu0 0.0
    %2773 = vmatpush2.msra.mxu0 0.0
    %2774 = vmatprep.subr.mxu0 0.0
    %2775 = vmatpush2.msra.mxu0 0.0
    %2776 = vmatprep.mubr.f32.mxu0 0.0
    %v2777 = vand.u32 %v2093, 4294901760
    %2778 = vmatmul.mubr.f32.gmra.mxu0 %v2777
    %v2779 = vpop.f32.mrf.mxu0
    %v2780 = vadd.f32 %v2632, %v2779
    %v2781 = vpop.f32.mrf.mxu0
    %2782 = vmatprep.mubr.f32.mxu0 0.0
    %v2783 = vand.u32 %v2096, 4294901760
    %2784 = vmatmul.mubr.f32.gmra.mxu0 %v2783
    %v2785 = vpop.f32.mrf.mxu0
    %v2786 = vadd.f32 %v2640, %v2785
    %v2787 = vpop.f32.mrf.mxu0
    %2788 = vmatprep.mubr.f32.mxu0 0.0
    %v2789 = vand.u32 %v2099, 4294901760
    %2790 = vmatmul.mubr.f32.gmra.mxu0 %v2789
    %v2791 = vpop.f32.mrf.mxu0
    %v2792 = vadd.f32 %v2648, %v2791
    %v2793 = vpop.f32.mrf.mxu0
    %2794 = vmatprep.mubr.f32.mxu0 0.0
    %v2795 = vand.u32 %v2102, 4294901760
    %2796 = vmatmul.mubr.f32.gmra.mxu0 %v2795
    %v2797 = vpop.f32.mrf.mxu0
    %v2798 = vadd.f32 %v2656, %v2797
    %v2799 = vpop.f32.mrf.mxu0
    %2800 = vmatprep.mubr.f32.mxu0 0.0
    %v2801 = vand.u32 %v2105, 4294901760
    %2802 = vmatmul.mubr.f32.gmra.mxu0 %v2801
    %v2803 = vpop.f32.mrf.mxu0
    %v2804 = vadd.f32 %v2664, %v2803
    %v2805 = vpop.f32.mrf.mxu0
    %2806 = vmatprep.mubr.f32.mxu0 0.0
    %v2807 = vand.u32 %v2108, 4294901760
    %2808 = vmatmul.mubr.f32.gmra.mxu0 %v2807
    %v2809 = vpop.f32.mrf.mxu0
    %v2810 = vadd.f32 %v2672, %v2809
    %v2811 = vpop.f32.mrf.mxu0
    %2812 = vmatprep.mubr.f32.mxu0 0.0
    %v2813 = vand.u32 %v2111, 4294901760
    %2814 = vmatmul.mubr.f32.gmra.mxu0 %v2813
    %v2815 = vpop.f32.mrf.mxu0
    %v2816 = vadd.f32 %v2680, %v2815
    %v2817 = vpop.f32.mrf.mxu0
    %2818 = vmatprep.mubr.f32.mxu0 0.0
    %v2819 = vand.u32 %v2114, 4294901760
    %2820 = vmatmul.mubr.f32.gmra.mxu0 %v2819
    %v2821 = vpop.f32.mrf.mxu0
    %v2822 = vadd.f32 %v2688, %v2821
    %v2823 = vpop.f32.mrf.mxu0
    %2824 = vdwg.mxu0
    %2825 = vmatprep.subr.mxu0 0.0
    %2826 = vmatpush1.msra.mxu0 0.0
    %2827 = vmatprep.subr.mxu0 0.0
    %2828 = vmatpush1.msra.mxu0 0.0
    %2829 = vmatprep.subr.mxu0 0.0
    %2830 = vmatpush1.msra.mxu0 0.0
    %2831 = vmatprep.subr.mxu0 0.0
    %2832 = vmatpush1.msra.mxu0 0.0
    %2833 = vmatprep.subr.mxu0 0.0
    %2834 = vmatpush1.msra.mxu0 0.0
    %2835 = vmatprep.subr.mxu0 0.0
    %2836 = vmatpush1.msra.mxu0 0.0
    %2837 = vmatprep.subr.mxu0 0.0
    %2838 = vmatpush1.msra.mxu0 0.0
    %2839 = vmatprep.subr.mxu0 0.0
    %2840 = vmatpush1.msra.mxu0 0.0
    %2841 = vmatprep.subr.mxu0 0.0
    %2842 = vmatpush1.msra.mxu0 0.0
    %2843 = vmatprep.subr.mxu0 0.0
    %v2844 = vand.u32 %v2118, 4294901760
    %2845 = vmatpush1.msra.mxu0 %v2844
    %2846 = vmatprep.subr.mxu0 0.0
    %v2847 = vand.u32 %v1974, 4294901760
    %2848 = vmatpush1.msra.mxu0 %v2847
    %2849 = vmatprep.subr.mxu0 0.0
    %v2850 = vand.u32 %v1973, 4294901760
    %2851 = vmatpush1.msra.mxu0 %v2850
    %2852 = vmatprep.subr.mxu0 0.0
    %v2853 = vand.u32 %v1972, 4294901760
    %2854 = vmatpush1.msra.mxu0 %v2853
    %2855 = vmatprep.subr.mxu0 0.0
    %v2856 = vand.u32 %v1971, 4294901760
    %2857 = vmatpush1.msra.mxu0 %v2856
    %2858 = vmatprep.subr.mxu0 0.0
    %v2859 = vand.u32 %v1970, 4294901760
    %2860 = vmatpush1.msra.mxu0 %v2859
    %2861 = vmatprep.subr.mxu0 0.0
    %v2862 = vand.u32 %v1969, 4294901760
    %2863 = vmatpush1.msra.mxu0 %v2862
    %2864 = vmatprep.subr.mxu0 0.0
    %2865 = vmatpush2.msra.mxu0 0.0
    %2866 = vmatprep.subr.mxu0 0.0
    %2867 = vmatpush2.msra.mxu0 0.0
    %2868 = vmatprep.subr.mxu0 0.0
    %2869 = vmatpush2.msra.mxu0 0.0
    %2870 = vmatprep.subr.mxu0 0.0
    %2871 = vmatpush2.msra.mxu0 0.0
    %2872 = vmatprep.subr.mxu0 0.0
    %2873 = vmatpush2.msra.mxu0 0.0
    %2874 = vmatprep.subr.mxu0 0.0
    %2875 = vmatpush2.msra.mxu0 0.0
    %2876 = vmatprep.subr.mxu0 0.0
    %2877 = vmatpush2.msra.mxu0 0.0
    %2878 = vmatprep.subr.mxu0 0.0
    %2879 = vmatpush2.msra.mxu0 0.0
    %2880 = vmatprep.subr.mxu0 0.0
    %2881 = vmatpush2.msra.mxu0 0.0
    %2882 = vmatprep.subr.mxu0 0.0
    %2883 = vmatpush2.msra.mxu0 0.0
    %2884 = vmatprep.subr.mxu0 0.0
    %2885 = vmatpush2.msra.mxu0 0.0
    %2886 = vmatprep.subr.mxu0 0.0
    %2887 = vmatpush2.msra.mxu0 0.0
    %2888 = vmatprep.subr.mxu0 0.0
    %2889 = vmatpush2.msra.mxu0 0.0
    %2890 = vmatprep.subr.mxu0 0.0
    %2891 = vmatpush2.msra.mxu0 0.0
    %2892 = vmatprep.subr.mxu0 0.0
    %2893 = vmatpush2.msra.mxu0 0.0
    %2894 = vmatprep.subr.mxu0 0.0
    %2895 = vmatpush2.msra.mxu0 0.0
    %2896 = vmatprep.mubr.f32.mxu0 0.0
    %v2897 = vand.u32 %v2093, 4294901760
    %2898 = vmatmul.mubr.f32.gmra.mxu0 %v2897
    %v2899 = vpop.f32.mrf.mxu0
    %v2900 = vadd.f32 %v2780, %v2899
    %v2901 = vpop.f32.mrf.mxu0
    %2902 = vmatprep.mubr.f32.mxu0 0.0
    %v2903 = vand.u32 %v2096, 4294901760
    %2904 = vmatmul.mubr.f32.gmra.mxu0 %v2903
    %v2905 = vpop.f32.mrf.mxu0
    %v2906 = vadd.f32 %v2786, %v2905
    %v2907 = vpop.f32.mrf.mxu0
    %2908 = vmatprep.mubr.f32.mxu0 0.0
    %v2909 = vand.u32 %v2099, 4294901760
    %2910 = vmatmul.mubr.f32.gmra.mxu0 %v2909
    %v2911 = vpop.f32.mrf.mxu0
    %v2912 = vadd.f32 %v2792, %v2911
    %v2913 = vpop.f32.mrf.mxu0
    %2914 = vmatprep.mubr.f32.mxu0 0.0
    %v2915 = vand.u32 %v2102, 4294901760
    %2916 = vmatmul.mubr.f32.gmra.mxu0 %v2915
    %v2917 = vpop.f32.mrf.mxu0
    %v2918 = vadd.f32 %v2798, %v2917
    %v2919 = vpop.f32.mrf.mxu0
    %2920 = vmatprep.mubr.f32.mxu0 0.0
    %v2921 = vand.u32 %v2105, 4294901760
    %2922 = vmatmul.mubr.f32.gmra.mxu0 %v2921
    %v2923 = vpop.f32.mrf.mxu0
    %v2924 = vadd.f32 %v2804, %v2923
    %v2925 = vpop.f32.mrf.mxu0
    %2926 = vmatprep.mubr.f32.mxu0 0.0
    %v2927 = vand.u32 %v2108, 4294901760
    %2928 = vmatmul.mubr.f32.gmra.mxu0 %v2927
    %v2929 = vpop.f32.mrf.mxu0
    %v2930 = vadd.f32 %v2810, %v2929
    %v2931 = vpop.f32.mrf.mxu0
    %2932 = vmatprep.mubr.f32.mxu0 0.0
    %v2933 = vand.u32 %v2111, 4294901760
    %2934 = vmatmul.mubr.f32.gmra.mxu0 %v2933
    %v2935 = vpop.f32.mrf.mxu0
    %v2936 = vadd.f32 %v2816, %v2935
    %v2937 = vpop.f32.mrf.mxu0
    %2938 = vmatprep.mubr.f32.mxu0 0.0
    %v2939 = vand.u32 %v2114, 4294901760
    %2940 = vmatmul.mubr.f32.gmra.mxu0 %v2939
    %v2941 = vpop.f32.mrf.mxu0
    %v2942 = vadd.f32 %v2822, %v2941
    %v2943 = vpop.f32.mrf.mxu0
    %2944 = vdwg.mxu0
    %vm2945 = vcmask 490496
    %v2947 = vsel %vm2945, %v2082, 0
    %v2950 = vsel %vm2945, %v2083, 0
    %vm2952 = vcmask 1043456
    %v2954 = vsel %vm2952, %v2942, 0
    %2956 = vmatprep.subr.mxu0 0.0
    %2957 = vmatpush1.msra.mxu0 0.0
    %2958 = vmatprep.subr.mxu0 0.0
    %2959 = vmatpush1.msra.mxu0 0.0
    %2960 = vmatprep.subr.mxu0 0.0
    %2961 = vmatpush1.msra.mxu0 0.0
    %2962 = vmatprep.subr.mxu0 0.0
    %2963 = vmatpush1.msra.mxu0 0.0
    %2964 = vmatprep.subr.mxu0 0.0
    %2965 = vmatpush1.msra.mxu0 0.0
    %2966 = vmatprep.subr.mxu0 0.0
    %2967 = vmatpush1.msra.mxu0 0.0
    %2968 = vmatprep.subr.mxu0 0.0
    %2969 = vmatpush1.msra.mxu0 0.0
    %2970 = vmatprep.subr.mxu0 0.0
    %2971 = vmatpush1.msra.mxu0 0.0
    %2972 = vmatprep.subr.mxu0 0.0
    %v2973 = vand.u32 %v2954, 4294901760
    %2974 = vmatpush1.msra.mxu0 %v2973
    %2975 = vmatprep.subr.mxu0 0.0
    %v2976 = vand.u32 %v2936, 4294901760
    %2977 = vmatpush1.msra.mxu0 %v2976
    %2978 = vmatprep.subr.mxu0 0.0
    %v2979 = vand.u32 %v2930, 4294901760
    %2980 = vmatpush1.msra.mxu0 %v2979
    %2981 = vmatprep.subr.mxu0 0.0
    %v2982 = vand.u32 %v2924, 4294901760
    %2983 = vmatpush1.msra.mxu0 %v2982
    %2984 = vmatprep.subr.mxu0 0.0
    %v2985 = vand.u32 %v2918, 4294901760
    %2986 = vmatpush1.msra.mxu0 %v2985
    %2987 = vmatprep.subr.mxu0 0.0
    %v2988 = vand.u32 %v2912, 4294901760
    %2989 = vmatpush1.msra.mxu0 %v2988
    %2990 = vmatprep.subr.mxu0 0.0
    %v2991 = vand.u32 %v2906, 4294901760
    %2992 = vmatpush1.msra.mxu0 %v2991
    %2993 = vmatprep.subr.mxu0 0.0
    %v2994 = vand.u32 %v2900, 4294901760
    %2995 = vmatpush1.msra.mxu0 %v2994
    %2996 = vmatprep.subr.mxu0 0.0
    %2997 = vmatpush2.msra.mxu0 0.0
    %2998 = vmatprep.subr.mxu0 0.0
    %2999 = vmatpush2.msra.mxu0 0.0
    %3000 = vmatprep.subr.mxu0 0.0
    %3001 = vmatpush2.msra.mxu0 0.0
    %3002 = vmatprep.subr.mxu0 0.0
    %3003 = vmatpush2.msra.mxu0 0.0
    %3004 = vmatprep.subr.mxu0 0.0
    %3005 = vmatpush2.msra.mxu0 0.0
    %3006 = vmatprep.subr.mxu0 0.0
    %3007 = vmatpush2.msra.mxu0 0.0
    %3008 = vmatprep.subr.mxu0 0.0
    %3009 = vmatpush2.msra.mxu0 0.0
    %3010 = vmatprep.subr.mxu0 0.0
    %3011 = vmatpush2.msra.mxu0 0.0
    %3012 = vmatprep.subr.mxu0 0.0
    %3013 = vmatpush2.msra.mxu0 0.0
    %3014 = vmatprep.subr.mxu0 0.0
    %3015 = vmatpush2.msra.mxu0 0.0
    %3016 = vmatprep.subr.mxu0 0.0
    %3017 = vmatpush2.msra.mxu0 0.0
    %3018 = vmatprep.subr.mxu0 0.0
    %3019 = vmatpush2.msra.mxu0 0.0
    %3020 = vmatprep.subr.mxu0 0.0
    %3021 = vmatpush2.msra.mxu0 0.0
    %3022 = vmatprep.subr.mxu0 0.0
    %3023 = vmatpush2.msra.mxu0 0.0
    %3024 = vmatprep.subr.mxu0 0.0
    %3025 = vmatpush2.msra.mxu0 0.0
    %3026 = vmatprep.subr.mxu0 0.0
    %3027 = vmatpush2.msra.mxu0 0.0
    %3028 = vmatprep.mubr.f32.mxu0 0.0
    %v3029 = vand.u32 %v2947, 4294901760
    %v3030 = vsub.f32 %v2947, %v3029
    %v3031 = vand.u32 %v3030, 4294901760
    %v3032 = vsub.f32 %v3030, %v3031
    %v3033 = vand.u32 %v3032, 4294901760
    %3034 = vmatmul.mubr.f32.gmra.mxu0 %v3033
    %v3035 = vpop.f32.mrf.mxu0
    %v3036 = vadd.f32 0.0, %v3035
    %v3037 = vpop.f32.mrf.mxu0
    %3038 = vmatprep.mubr.f32.mxu0 0.0
    %v3039 = vand.u32 %v2950, 4294901760
    %v3040 = vsub.f32 %v2950, %v3039
    %v3041 = vand.u32 %v3040, 4294901760
    %v3042 = vsub.f32 %v3040, %v3041
    %v3043 = vand.u32 %v3042, 4294901760
    %3044 = vmatmul.mubr.f32.gmra.mxu0 %v3043
    %v3045 = vpop.f32.mrf.mxu0
    %v3046 = vadd.f32 0.0, %v3045
    %v3047 = vpop.f32.mrf.mxu0
    %3048 = vdwg.mxu0
    %3049 = vmatprep.subr.mxu0 0.0
    %3050 = vmatpush1.msra.mxu0 0.0
    %3051 = vmatprep.subr.mxu0 0.0
    %3052 = vmatpush1.msra.mxu0 0.0
    %3053 = vmatprep.subr.mxu0 0.0
    %3054 = vmatpush1.msra.mxu0 0.0
    %3055 = vmatprep.subr.mxu0 0.0
    %3056 = vmatpush1.msra.mxu0 0.0
    %3057 = vmatprep.subr.mxu0 0.0
    %3058 = vmatpush1.msra.mxu0 0.0
    %3059 = vmatprep.subr.mxu0 0.0
    %3060 = vmatpush1.msra.mxu0 0.0
    %3061 = vmatprep.subr.mxu0 0.0
    %3062 = vmatpush1.msra.mxu0 0.0
    %3063 = vmatprep.subr.mxu0 0.0
    %3064 = vmatpush1.msra.mxu0 0.0
    %3065 = vmatprep.subr.mxu0 0.0
    %v3066 = vand.u32 %v2954, 4294901760
    %v3067 = vsub.f32 %v2954, %v3066
    %v3068 = vand.u32 %v3067, 4294901760
    %v3069 = vsub.f32 %v3067, %v3068
    %v3070 = vand.u32 %v3069, 4294901760
    %3071 = vmatpush1.msra.mxu0 %v3070
    %3072 = vmatprep.subr.mxu0 0.0
    %v3073 = vand.u32 %v2936, 4294901760
    %v3074 = vsub.f32 %v2936, %v3073
    %v3075 = vand.u32 %v3074, 4294901760
    %v3076 = vsub.f32 %v3074, %v3075
    %v3077 = vand.u32 %v3076, 4294901760
    %3078 = vmatpush1.msra.mxu0 %v3077
    %3079 = vmatprep.subr.mxu0 0.0
    %v3080 = vand.u32 %v2930, 4294901760
    %v3081 = vsub.f32 %v2930, %v3080
    %v3082 = vand.u32 %v3081, 4294901760
    %v3083 = vsub.f32 %v3081, %v3082
    %v3084 = vand.u32 %v3083, 4294901760
    %3085 = vmatpush1.msra.mxu0 %v3084
    %3086 = vmatprep.subr.mxu0 0.0
    %v3087 = vand.u32 %v2924, 4294901760
    %v3088 = vsub.f32 %v2924, %v3087
    %v3089 = vand.u32 %v3088, 4294901760
    %v3090 = vsub.f32 %v3088, %v3089
    %v3091 = vand.u32 %v3090, 4294901760
    %3092 = vmatpush1.msra.mxu0 %v3091
    %3093 = vmatprep.subr.mxu0 0.0
    %v3094 = vand.u32 %v2918, 4294901760
    %v3095 = vsub.f32 %v2918, %v3094
    %v3096 = vand.u32 %v3095, 4294901760
    %v3097 = vsub.f32 %v3095, %v3096
    %v3098 = vand.u32 %v3097, 4294901760
    %3099 = vmatpush1.msra.mxu0 %v3098
    %3100 = vmatprep.subr.mxu0 0.0
    %v3101 = vand.u32 %v2912, 4294901760
    %v3102 = vsub.f32 %v2912, %v3101
    %v3103 = vand.u32 %v3102, 4294901760
    %v3104 = vsub.f32 %v3102, %v3103
    %v3105 = vand.u32 %v3104, 4294901760
    %3106 = vmatpush1.msra.mxu0 %v3105
    %3107 = vmatprep.subr.mxu0 0.0
    %v3108 = vand.u32 %v2906, 4294901760
    %v3109 = vsub.f32 %v2906, %v3108
    %v3110 = vand.u32 %v3109, 4294901760
    %v3111 = vsub.f32 %v3109, %v3110
    %v3112 = vand.u32 %v3111, 4294901760
    %3113 = vmatpush1.msra.mxu0 %v3112
    %3114 = vmatprep.subr.mxu0 0.0
    %v3115 = vand.u32 %v2900, 4294901760
    %v3116 = vsub.f32 %v2900, %v3115
    %v3117 = vand.u32 %v3116, 4294901760
    %v3118 = vsub.f32 %v3116, %v3117
    %v3119 = vand.u32 %v3118, 4294901760
    %3120 = vmatpush1.msra.mxu0 %v3119
    %3121 = vmatprep.subr.mxu0 0.0
    %3122 = vmatpush2.msra.mxu0 0.0
    %3123 = vmatprep.subr.mxu0 0.0
    %3124 = vmatpush2.msra.mxu0 0.0
    %3125 = vmatprep.subr.mxu0 0.0
    %3126 = vmatpush2.msra.mxu0 0.0
    %3127 = vmatprep.subr.mxu0 0.0
    %3128 = vmatpush2.msra.mxu0 0.0
    %3129 = vmatprep.subr.mxu0 0.0
    %3130 = vmatpush2.msra.mxu0 0.0
    %3131 = vmatprep.subr.mxu0 0.0
    %3132 = vmatpush2.msra.mxu0 0.0
    %3133 = vmatprep.subr.mxu0 0.0
    %3134 = vmatpush2.msra.mxu0 0.0
    %3135 = vmatprep.subr.mxu0 0.0
    %3136 = vmatpush2.msra.mxu0 0.0
    %3137 = vmatprep.subr.mxu0 0.0
    %3138 = vmatpush2.msra.mxu0 0.0
    %3139 = vmatprep.subr.mxu0 0.0
    %3140 = vmatpush2.msra.mxu0 0.0
    %3141 = vmatprep.subr.mxu0 0.0
    %3142 = vmatpush2.msra.mxu0 0.0
    %3143 = vmatprep.subr.mxu0 0.0
    %3144 = vmatpush2.msra.mxu0 0.0
    %3145 = vmatprep.subr.mxu0 0.0
    %3146 = vmatpush2.msra.mxu0 0.0
    %3147 = vmatprep.subr.mxu0 0.0
    %3148 = vmatpush2.msra.mxu0 0.0
    %3149 = vmatprep.subr.mxu0 0.0
    %3150 = vmatpush2.msra.mxu0 0.0
    %3151 = vmatprep.subr.mxu0 0.0
    %3152 = vmatpush2.msra.mxu0 0.0
    %3153 = vmatprep.mubr.f32.mxu0 0.0
    %v3154 = vand.u32 %v2947, 4294901760
    %3155 = vmatmul.mubr.f32.gmra.mxu0 %v3154
    %v3156 = vpop.f32.mrf.mxu0
    %v3157 = vadd.f32 %v3036, %v3156
    %v3158 = vpop.f32.mrf.mxu0
    %3159 = vmatprep.mubr.f32.mxu0 0.0
    %v3160 = vand.u32 %v2950, 4294901760
    %3161 = vmatmul.mubr.f32.gmra.mxu0 %v3160
    %v3162 = vpop.f32.mrf.mxu0
    %v3163 = vadd.f32 %v3046, %v3162
    %v3164 = vpop.f32.mrf.mxu0
    %3165 = vdwg.mxu0
    %3166 = vmatprep.subr.mxu0 0.0
    %3167 = vmatpush1.msra.mxu0 0.0
    %3168 = vmatprep.subr.mxu0 0.0
    %3169 = vmatpush1.msra.mxu0 0.0
    %3170 = vmatprep.subr.mxu0 0.0
    %3171 = vmatpush1.msra.mxu0 0.0
    %3172 = vmatprep.subr.mxu0 0.0
    %3173 = vmatpush1.msra.mxu0 0.0
    %3174 = vmatprep.subr.mxu0 0.0
    %3175 = vmatpush1.msra.mxu0 0.0
    %3176 = vmatprep.subr.mxu0 0.0
    %3177 = vmatpush1.msra.mxu0 0.0
    %3178 = vmatprep.subr.mxu0 0.0
    %3179 = vmatpush1.msra.mxu0 0.0
    %3180 = vmatprep.subr.mxu0 0.0
    %3181 = vmatpush1.msra.mxu0 0.0
    %3182 = vmatprep.subr.mxu0 0.0
    %v3183 = vand.u32 %v2954, 4294901760
    %v3184 = vsub.f32 %v2954, %v3183
    %3185 = vmatpush1.msra.mxu0 %v3184
    %3186 = vmatprep.subr.mxu0 0.0
    %v3187 = vand.u32 %v2936, 4294901760
    %v3188 = vsub.f32 %v2936, %v3187
    %3189 = vmatpush1.msra.mxu0 %v3188
    %3190 = vmatprep.subr.mxu0 0.0
    %v3191 = vand.u32 %v2930, 4294901760
    %v3192 = vsub.f32 %v2930, %v3191
    %3193 = vmatpush1.msra.mxu0 %v3192
    %3194 = vmatprep.subr.mxu0 0.0
    %v3195 = vand.u32 %v2924, 4294901760
    %v3196 = vsub.f32 %v2924, %v3195
    %3197 = vmatpush1.msra.mxu0 %v3196
    %3198 = vmatprep.subr.mxu0 0.0
    %v3199 = vand.u32 %v2918, 4294901760
    %v3200 = vsub.f32 %v2918, %v3199
    %3201 = vmatpush1.msra.mxu0 %v3200
    %3202 = vmatprep.subr.mxu0 0.0
    %v3203 = vand.u32 %v2912, 4294901760
    %v3204 = vsub.f32 %v2912, %v3203
    %3205 = vmatpush1.msra.mxu0 %v3204
    %3206 = vmatprep.subr.mxu0 0.0
    %v3207 = vand.u32 %v2906, 4294901760
    %v3208 = vsub.f32 %v2906, %v3207
    %3209 = vmatpush1.msra.mxu0 %v3208
    %3210 = vmatprep.subr.mxu0 0.0
    %v3211 = vand.u32 %v2900, 4294901760
    %v3212 = vsub.f32 %v2900, %v3211
    %3213 = vmatpush1.msra.mxu0 %v3212
    %3214 = vmatprep.subr.mxu0 0.0
    %3215 = vmatpush2.msra.mxu0 0.0
    %3216 = vmatprep.subr.mxu0 0.0
    %3217 = vmatpush2.msra.mxu0 0.0
    %3218 = vmatprep.subr.mxu0 0.0
    %3219 = vmatpush2.msra.mxu0 0.0
    %3220 = vmatprep.subr.mxu0 0.0
    %3221 = vmatpush2.msra.mxu0 0.0
    %3222 = vmatprep.subr.mxu0 0.0
    %3223 = vmatpush2.msra.mxu0 0.0
    %3224 = vmatprep.subr.mxu0 0.0
    %3225 = vmatpush2.msra.mxu0 0.0
    %3226 = vmatprep.subr.mxu0 0.0
    %3227 = vmatpush2.msra.mxu0 0.0
    %3228 = vmatprep.subr.mxu0 0.0
    %3229 = vmatpush2.msra.mxu0 0.0
    %3230 = vmatprep.subr.mxu0 0.0
    %3231 = vmatpush2.msra.mxu0 0.0
    %3232 = vmatprep.subr.mxu0 0.0
    %3233 = vmatpush2.msra.mxu0 0.0
    %3234 = vmatprep.subr.mxu0 0.0
    %3235 = vmatpush2.msra.mxu0 0.0
    %3236 = vmatprep.subr.mxu0 0.0
    %3237 = vmatpush2.msra.mxu0 0.0
    %3238 = vmatprep.subr.mxu0 0.0
    %3239 = vmatpush2.msra.mxu0 0.0
    %3240 = vmatprep.subr.mxu0 0.0
    %3241 = vmatpush2.msra.mxu0 0.0
    %3242 = vmatprep.subr.mxu0 0.0
    %3243 = vmatpush2.msra.mxu0 0.0
    %3244 = vmatprep.subr.mxu0 0.0
    %3245 = vmatpush2.msra.mxu0 0.0
    %3246 = vmatprep.mubr.f32.mxu0 0.0
    %v3247 = vand.u32 %v2947, 4294901760
    %v3248 = vsub.f32 %v2947, %v3247
    %3249 = vmatmul.mubr.f32.gmra.mxu0 %v3248
    %v3250 = vpop.f32.mrf.mxu0
    %v3251 = vadd.f32 %v3157, %v3250
    %v3252 = vpop.f32.mrf.mxu0
    %3253 = vmatprep.mubr.f32.mxu0 0.0
    %v3254 = vand.u32 %v2950, 4294901760
    %v3255 = vsub.f32 %v2950, %v3254
    %3256 = vmatmul.mubr.f32.gmra.mxu0 %v3255
    %v3257 = vpop.f32.mrf.mxu0
    %v3258 = vadd.f32 %v3163, %v3257
    %v3259 = vpop.f32.mrf.mxu0
    %3260 = vdwg.mxu0
    %3261 = vmatprep.subr.mxu0 0.0
    %3262 = vmatpush1.msra.mxu0 0.0
    %3263 = vmatprep.subr.mxu0 0.0
    %3264 = vmatpush1.msra.mxu0 0.0
    %3265 = vmatprep.subr.mxu0 0.0
    %3266 = vmatpush1.msra.mxu0 0.0
    %3267 = vmatprep.subr.mxu0 0.0
    %3268 = vmatpush1.msra.mxu0 0.0
    %3269 = vmatprep.subr.mxu0 0.0
    %3270 = vmatpush1.msra.mxu0 0.0
    %3271 = vmatprep.subr.mxu0 0.0
    %3272 = vmatpush1.msra.mxu0 0.0
    %3273 = vmatprep.subr.mxu0 0.0
    %3274 = vmatpush1.msra.mxu0 0.0
    %3275 = vmatprep.subr.mxu0 0.0
    %3276 = vmatpush1.msra.mxu0 0.0
    %3277 = vmatprep.subr.mxu0 0.0
    %v3278 = vand.u32 %v2954, 4294901760
    %3279 = vmatpush1.msra.mxu0 %v3278
    %3280 = vmatprep.subr.mxu0 0.0
    %v3281 = vand.u32 %v2936, 4294901760
    %3282 = vmatpush1.msra.mxu0 %v3281
    %3283 = vmatprep.subr.mxu0 0.0
    %v3284 = vand.u32 %v2930, 4294901760
    %3285 = vmatpush1.msra.mxu0 %v3284
    %3286 = vmatprep.subr.mxu0 0.0
    %v3287 = vand.u32 %v2924, 4294901760
    %3288 = vmatpush1.msra.mxu0 %v3287
    %3289 = vmatprep.subr.mxu0 0.0
    %v3290 = vand.u32 %v2918, 4294901760
    %3291 = vmatpush1.msra.mxu0 %v3290
    %3292 = vmatprep.subr.mxu0 0.0
    %v3293 = vand.u32 %v2912, 4294901760
    %3294 = vmatpush1.msra.mxu0 %v3293
    %3295 = vmatprep.subr.mxu0 0.0
    %v3296 = vand.u32 %v2906, 4294901760
    %3297 = vmatpush1.msra.mxu0 %v3296
    %3298 = vmatprep.subr.mxu0 0.0
    %v3299 = vand.u32 %v2900, 4294901760
    %3300 = vmatpush1.msra.mxu0 %v3299
    %3301 = vmatprep.subr.mxu0 0.0
    %3302 = vmatpush2.msra.mxu0 0.0
    %3303 = vmatprep.subr.mxu0 0.0
    %3304 = vmatpush2.msra.mxu0 0.0
    %3305 = vmatprep.subr.mxu0 0.0
    %3306 = vmatpush2.msra.mxu0 0.0
    %3307 = vmatprep.subr.mxu0 0.0
    %3308 = vmatpush2.msra.mxu0 0.0
    %3309 = vmatprep.subr.mxu0 0.0
    %3310 = vmatpush2.msra.mxu0 0.0
    %3311 = vmatprep.subr.mxu0 0.0
    %3312 = vmatpush2.msra.mxu0 0.0
    %3313 = vmatprep.subr.mxu0 0.0
    %3314 = vmatpush2.msra.mxu0 0.0
    %3315 = vmatprep.subr.mxu0 0.0
    %3316 = vmatpush2.msra.mxu0 0.0
    %3317 = vmatprep.subr.mxu0 0.0
    %3318 = vmatpush2.msra.mxu0 0.0
    %3319 = vmatprep.subr.mxu0 0.0
    %3320 = vmatpush2.msra.mxu0 0.0
    %3321 = vmatprep.subr.mxu0 0.0
    %3322 = vmatpush2.msra.mxu0 0.0
    %3323 = vmatprep.subr.mxu0 0.0
    %3324 = vmatpush2.msra.mxu0 0.0
    %3325 = vmatprep.subr.mxu0 0.0
    %3326 = vmatpush2.msra.mxu0 0.0
    %3327 = vmatprep.subr.mxu0 0.0
    %3328 = vmatpush2.msra.mxu0 0.0
    %3329 = vmatprep.subr.mxu0 0.0
    %3330 = vmatpush2.msra.mxu0 0.0
    %3331 = vmatprep.subr.mxu0 0.0
    %3332 = vmatpush2.msra.mxu0 0.0
    %3333 = vmatprep.mubr.f32.mxu0 0.0
    %v3334 = vand.u32 %v2947, 4294901760
    %v3335 = vsub.f32 %v2947, %v3334
    %v3336 = vand.u32 %v3335, 4294901760
    %3337 = vmatmul.mubr.f32.gmra.mxu0 %v3336
    %v3338 = vpop.f32.mrf.mxu0
    %v3339 = vadd.f32 %v3251, %v3338
    %v3340 = vpop.f32.mrf.mxu0
    %3341 = vmatprep.mubr.f32.mxu0 0.0
    %v3342 = vand.u32 %v2950, 4294901760
    %v3343 = vsub.f32 %v2950, %v3342
    %v3344 = vand.u32 %v3343, 4294901760
    %3345 = vmatmul.mubr.f32.gmra.mxu0 %v3344
    %v3346 = vpop.f32.mrf.mxu0
    %v3347 = vadd.f32 %v3258, %v3346
    %v3348 = vpop.f32.mrf.mxu0
    %3349 = vdwg.mxu0
    %3350 = vmatprep.subr.mxu0 0.0
    %3351 = vmatpush1.msra.mxu0 0.0
    %3352 = vmatprep.subr.mxu0 0.0
    %3353 = vmatpush1.msra.mxu0 0.0
    %3354 = vmatprep.subr.mxu0 0.0
    %3355 = vmatpush1.msra.mxu0 0.0
    %3356 = vmatprep.subr.mxu0 0.0
    %3357 = vmatpush1.msra.mxu0 0.0
    %3358 = vmatprep.subr.mxu0 0.0
    %3359 = vmatpush1.msra.mxu0 0.0
    %3360 = vmatprep.subr.mxu0 0.0
    %3361 = vmatpush1.msra.mxu0 0.0
    %3362 = vmatprep.subr.mxu0 0.0
    %3363 = vmatpush1.msra.mxu0 0.0
    %3364 = vmatprep.subr.mxu0 0.0
    %3365 = vmatpush1.msra.mxu0 0.0
    %3366 = vmatprep.subr.mxu0 0.0
    %v3367 = vand.u32 %v2954, 4294901760
    %v3368 = vsub.f32 %v2954, %v3367
    %v3369 = vand.u32 %v3368, 4294901760
    %3370 = vmatpush1.msra.mxu0 %v3369
    %3371 = vmatprep.subr.mxu0 0.0
    %v3372 = vand.u32 %v2936, 4294901760
    %v3373 = vsub.f32 %v2936, %v3372
    %v3374 = vand.u32 %v3373, 4294901760
    %3375 = vmatpush1.msra.mxu0 %v3374
    %3376 = vmatprep.subr.mxu0 0.0
    %v3377 = vand.u32 %v2930, 4294901760
    %v3378 = vsub.f32 %v2930, %v3377
    %v3379 = vand.u32 %v3378, 4294901760
    %3380 = vmatpush1.msra.mxu0 %v3379
    %3381 = vmatprep.subr.mxu0 0.0
    %v3382 = vand.u32 %v2924, 4294901760
    %v3383 = vsub.f32 %v2924, %v3382
    %v3384 = vand.u32 %v3383, 4294901760
    %3385 = vmatpush1.msra.mxu0 %v3384
    %3386 = vmatprep.subr.mxu0 0.0
    %v3387 = vand.u32 %v2918, 4294901760
    %v3388 = vsub.f32 %v2918, %v3387
    %v3389 = vand.u32 %v3388, 4294901760
    %3390 = vmatpush1.msra.mxu0 %v3389
    %3391 = vmatprep.subr.mxu0 0.0
    %v3392 = vand.u32 %v2912, 4294901760
    %v3393 = vsub.f32 %v2912, %v3392
    %v3394 = vand.u32 %v3393, 4294901760
    %3395 = vmatpush1.msra.mxu0 %v3394
    %3396 = vmatprep.subr.mxu0 0.0
    %v3397 = vand.u32 %v2906, 4294901760
    %v3398 = vsub.f32 %v2906, %v3397
    %v3399 = vand.u32 %v3398, 4294901760
    %3400 = vmatpush1.msra.mxu0 %v3399
    %3401 = vmatprep.subr.mxu0 0.0
    %v3402 = vand.u32 %v2900, 4294901760
    %v3403 = vsub.f32 %v2900, %v3402
    %v3404 = vand.u32 %v3403, 4294901760
    %3405 = vmatpush1.msra.mxu0 %v3404
    %3406 = vmatprep.subr.mxu0 0.0
    %3407 = vmatpush2.msra.mxu0 0.0
    %3408 = vmatprep.subr.mxu0 0.0
    %3409 = vmatpush2.msra.mxu0 0.0
    %3410 = vmatprep.subr.mxu0 0.0
    %3411 = vmatpush2.msra.mxu0 0.0
    %3412 = vmatprep.subr.mxu0 0.0
    %3413 = vmatpush2.msra.mxu0 0.0
    %3414 = vmatprep.subr.mxu0 0.0
    %3415 = vmatpush2.msra.mxu0 0.0
    %3416 = vmatprep.subr.mxu0 0.0
    %3417 = vmatpush2.msra.mxu0 0.0
    %3418 = vmatprep.subr.mxu0 0.0
    %3419 = vmatpush2.msra.mxu0 0.0
    %3420 = vmatprep.subr.mxu0 0.0
    %3421 = vmatpush2.msra.mxu0 0.0
    %3422 = vmatprep.subr.mxu0 0.0
    %3423 = vmatpush2.msra.mxu0 0.0
    %3424 = vmatprep.subr.mxu0 0.0
    %3425 = vmatpush2.msra.mxu0 0.0
    %3426 = vmatprep.subr.mxu0 0.0
    %3427 = vmatpush2.msra.mxu0 0.0
    %3428 = vmatprep.subr.mxu0 0.0
    %3429 = vmatpush2.msra.mxu0 0.0
    %3430 = vmatprep.subr.mxu0 0.0
    %3431 = vmatpush2.msra.mxu0 0.0
    %3432 = vmatprep.subr.mxu0 0.0
    %3433 = vmatpush2.msra.mxu0 0.0
    %3434 = vmatprep.subr.mxu0 0.0
    %3435 = vmatpush2.msra.mxu0 0.0
    %3436 = vmatprep.subr.mxu0 0.0
    %3437 = vmatpush2.msra.mxu0 0.0
    %3438 = vmatprep.mubr.f32.mxu0 0.0
    %v3439 = vand.u32 %v2947, 4294901760
    %3440 = vmatmul.mubr.f32.gmra.mxu0 %v3439
    %v3441 = vpop.f32.mrf.mxu0
    %v3442 = vadd.f32 %v3339, %v3441
    %v3443 = vpop.f32.mrf.mxu0
    %3444 = vmatprep.mubr.f32.mxu0 0.0
    %v3445 = vand.u32 %v2950, 4294901760
    %3446 = vmatmul.mubr.f32.gmra.mxu0 %v3445
    %v3447 = vpop.f32.mrf.mxu0
    %v3448 = vadd.f32 %v3347, %v3447
    %v3449 = vpop.f32.mrf.mxu0
    %3450 = vdwg.mxu0
    %3451 = vmatprep.subr.mxu0 0.0
    %3452 = vmatpush1.msra.mxu0 0.0
    %3453 = vmatprep.subr.mxu0 0.0
    %3454 = vmatpush1.msra.mxu0 0.0
    %3455 = vmatprep.subr.mxu0 0.0
    %3456 = vmatpush1.msra.mxu0 0.0
    %3457 = vmatprep.subr.mxu0 0.0
    %3458 = vmatpush1.msra.mxu0 0.0
    %3459 = vmatprep.subr.mxu0 0.0
    %3460 = vmatpush1.msra.mxu0 0.0
    %3461 = vmatprep.subr.mxu0 0.0
    %3462 = vmatpush1.msra.mxu0 0.0
    %3463 = vmatprep.subr.mxu0 0.0
    %3464 = vmatpush1.msra.mxu0 0.0
    %3465 = vmatprep.subr.mxu0 0.0
    %3466 = vmatpush1.msra.mxu0 0.0
    %3467 = vmatprep.subr.mxu0 0.0
    %v3468 = vand.u32 %v2954, 4294901760
    %3469 = vmatpush1.msra.mxu0 %v3468
    %3470 = vmatprep.subr.mxu0 0.0
    %v3471 = vand.u32 %v2936, 4294901760
    %3472 = vmatpush1.msra.mxu0 %v3471
    %3473 = vmatprep.subr.mxu0 0.0
    %v3474 = vand.u32 %v2930, 4294901760
    %3475 = vmatpush1.msra.mxu0 %v3474
    %3476 = vmatprep.subr.mxu0 0.0
    %v3477 = vand.u32 %v2924, 4294901760
    %3478 = vmatpush1.msra.mxu0 %v3477
    %3479 = vmatprep.subr.mxu0 0.0
    %v3480 = vand.u32 %v2918, 4294901760
    %3481 = vmatpush1.msra.mxu0 %v3480
    %3482 = vmatprep.subr.mxu0 0.0
    %v3483 = vand.u32 %v2912, 4294901760
    %3484 = vmatpush1.msra.mxu0 %v3483
    %3485 = vmatprep.subr.mxu0 0.0
    %v3486 = vand.u32 %v2906, 4294901760
    %3487 = vmatpush1.msra.mxu0 %v3486
    %3488 = vmatprep.subr.mxu0 0.0
    %v3489 = vand.u32 %v2900, 4294901760
    %3490 = vmatpush1.msra.mxu0 %v3489
    %3491 = vmatprep.subr.mxu0 0.0
    %3492 = vmatpush2.msra.mxu0 0.0
    %3493 = vmatprep.subr.mxu0 0.0
    %3494 = vmatpush2.msra.mxu0 0.0
    %3495 = vmatprep.subr.mxu0 0.0
    %3496 = vmatpush2.msra.mxu0 0.0
    %3497 = vmatprep.subr.mxu0 0.0
    %3498 = vmatpush2.msra.mxu0 0.0
    %3499 = vmatprep.subr.mxu0 0.0
    %3500 = vmatpush2.msra.mxu0 0.0
    %3501 = vmatprep.subr.mxu0 0.0
    %3502 = vmatpush2.msra.mxu0 0.0
    %3503 = vmatprep.subr.mxu0 0.0
    %3504 = vmatpush2.msra.mxu0 0.0
    %3505 = vmatprep.subr.mxu0 0.0
    %3506 = vmatpush2.msra.mxu0 0.0
    %3507 = vmatprep.subr.mxu0 0.0
    %3508 = vmatpush2.msra.mxu0 0.0
    %3509 = vmatprep.subr.mxu0 0.0
    %3510 = vmatpush2.msra.mxu0 0.0
    %3511 = vmatprep.subr.mxu0 0.0
    %3512 = vmatpush2.msra.mxu0 0.0
    %3513 = vmatprep.subr.mxu0 0.0
    %3514 = vmatpush2.msra.mxu0 0.0
    %3515 = vmatprep.subr.mxu0 0.0
    %3516 = vmatpush2.msra.mxu0 0.0
    %3517 = vmatprep.subr.mxu0 0.0
    %3518 = vmatpush2.msra.mxu0 0.0
    %3519 = vmatprep.subr.mxu0 0.0
    %3520 = vmatpush2.msra.mxu0 0.0
    %3521 = vmatprep.subr.mxu0 0.0
    %3522 = vmatpush2.msra.mxu0 0.0
    %3523 = vmatprep.mubr.f32.mxu0 0.0
    %v3524 = vand.u32 %v2947, 4294901760
    %3525 = vmatmul.mubr.f32.gmra.mxu0 %v3524
    %v3526 = vpop.f32.mrf.mxu0
    %v3527 = vadd.f32 %v3442, %v3526
    %v3528 = vpop.f32.mrf.mxu0
    %3529 = vmatprep.mubr.f32.mxu0 0.0
    %v3530 = vand.u32 %v2950, 4294901760
    %3531 = vmatmul.mubr.f32.gmra.mxu0 %v3530
    %v3532 = vpop.f32.mrf.mxu0
    %v3533 = vadd.f32 %v3448, %v3532
    %v3534 = vpop.f32.mrf.mxu0
    %3535 = vdwg.mxu0
    %v3536 = vsub.f32 0.0, %v3527
    %v3537 = vsub.f32 0.0, %v3533
    %v3538 = vmul.f32 %v3536, 1.442695
    %v3539 = vpow.pop %v3538
    %v3540 = vmul.f32 %v3537, 1.442695
    %v3541 = vpow.pop %v3540
    %v3542 = vadd.f32 %v3539, 1.0
    %v3543 = vadd.f32 %v3541, 1.0
    %v3544 = vrcp.pop %v3542
    %v3545 = vmul.f32 1.0, %v3544
    %v3546 = vrcp.pop %v3543
    %v3547 = vmul.f32 1.0, %v3546
    %vm3548 = vcmask 23552
    %3549 = vst.msk [vmem:[%s5] sm:$0xff] %vm3548, %v3545
    %vm3550 = vcmask 16384
    %3551 = vst.msk [vmem:[%s5 + $0x8] sm:$0x1] %vm3550, %v3547
    // Predicated region
    $region38: #{model_forward.1} parent=1 // pred_check
      _
    $region39: #{model_forward.1} parent=1 // pred_check_branch
      %3553 = sbr.rel (0) target = $region41
    $region40: #{model_forward.1} parent=1 // pred_region
      _
    $region41: #{model_forward.1} parent=1 // pred_fallthru
      _
    // Predicated region
    $region42: #{model_forward.1} parent=1 // pred_check
      _
    $region43: #{model_forward.1} parent=1 // pred_check_branch
      %3555 = sbr.rel (0) target = $region45
    $region44: #{model_forward.1} parent=1 // pred_region
      _
    $region45: #{model_forward.1} parent=1 // pred_fallthru
      _
    %3556 = vsyncpa [#allocation7], 1
    %3557 = vsyncpa [#allocation9], 1
    %3558 = vsyncpa [#allocation12], 1

</llo_original>
